<compile_context>
chip_gen: v7x
topology: tpu7x:2x2x1
jax: 0.10.0
libtpu: 0.0.40
codegen_flags: <defaults>
</compile_context>

<pallas_src>
import functools
import math

import jax
import jax.numpy as jnp
from jax.experimental import pallas as pl
from jax.experimental.pallas import tpu as pltpu


# -----------------------------------------------------------------------------
# Kernel
# -----------------------------------------------------------------------------
def _make_skipconn_kernel(num_hidden_layers: int, hidden_size: int,
                          init_size: int, compute_dtype):
    L, S = num_hidden_layers, init_size

    def kernel(x_ref, *rest):
        # rest = [proj_cur0, proj_z0, proj_x_1..proj_x_{L-1}, proj_out,
        #         w_pc_1..w_pc_{L-1}, w_prev_out, w_cur_out, o]
        o_ref = rest[-1]
        proj_refs = rest[0:L + 2]            # packed [W; b] x-projection blocks
        pc_refs = rest[L + 2:2 * L + 1]      # stacked [w_prev; w_cur], layers 1..L-1
        wpo_ref, wco_ref = rest[2 * L + 1], rest[2 * L + 2]

        xv = x_ref[...]                                     # (tile_b, S) f32
        xcols = [xv[:, j:j + 1] for j in range(S)]          # hoisted column slices

        def proj(ref):
            """x @ W + b on the VPU; ref is (S+1, width): rows 0..S-1 = W, row S = b."""
            wb = ref[...]
            out = wb[S:S + 1, :]                            # bias row (1, width)
            for j in range(S):                              # S == init_size (=2)
                out = out + xcols[j] * wb[j:j + 1, :]       # broadcast FMA
            return out                                      # (tile_b, width) f32

        prev = proj(proj_refs[0])                   # cur0 = inLayer(x)   (no ReLU)
        cur = jnp.maximum(proj(proj_refs[1]), 0.0)  # relu(z0); layer 0 folded at pack time

        for i in range(1, L):
            cat = jnp.concatenate([prev, cur], axis=-1).astype(compute_dtype)
            z = (jnp.dot(cat, pc_refs[i - 1][...],
                         preferred_element_type=jnp.float32)
                 + proj(proj_refs[1 + i]))                  # x-skip + bias (VPU)
            prev = cur
            cur = jnp.maximum(z, 0.0)                       # ReLU

        # outLayer (N=1): VPU multiply + lane reduce; its x-skip/bias via proj.
        y = (jnp.sum(prev * wpo_ref[...] + cur * wco_ref[...],
                     axis=-1, keepdims=True)
             + proj(proj_refs[L + 1]))                      # (tile_b, 1)
        o_ref[...] = jax.nn.sigmoid(y)
        # TODO(synk): lane-dense (tile_b//128, 128) output relayout not applied —
        # the (tile_b,1)->(T,128) sublane->lane shape cast has lowering risk and
        # the output volume (4 B/row) is negligible for this model.

    return kernel


# -----------------------------------------------------------------------------
# Wrapper: param packing + pallas_call
# -----------------------------------------------------------------------------
def _pack_params(params, *, hidden_size, num_hidden_layers, init_size,
                 compute_dtype):
    """Repack PyTorch-style params into kernel-friendly operands.

    Returns:
      proj_blocks : list of (init+1, width) f32 arrays [W; b] for the VPU
                    x-projection: [cur0, z0(folded layer 0), x-skip_1.., out]
      pc_ws       : list of (2h, h) stacked [w_prev; w_cur] weights, layers 1..L-1
      wpo, wco    : (1, h) f32 output-layer prev/cur rows (VPU path)
    """
    h, L, S = hidden_size, num_hidden_layers, init_size
    w_in, b_in = params[0], params[1]
    hidden = params[2:2 + 2 * L]
    w_out, b_out = params[-2], params[-1]

    hi = jax.lax.Precision.HIGHEST  # exact f32 for the pack-time fold

    def pack_proj(wx, b):
        return jnp.concatenate([wx, b], axis=0).astype(jnp.float32)  # (S+1, width)

    proj_blocks = [pack_proj(w_in, b_in)]                    # cur0 = inLayer(x)

    # Fold hidden layer 0 (no activation between inLayer and layer 0):
    #   z0 = x @ (w_in @ wc0 + wx0) + (b_in @ wc0 + b0)
    w0, b0 = hidden[0], hidden[1]
    wc0, wx0 = w0[0:h, :], w0[h:h + S, :]
    proj_blocks.append(pack_proj(jnp.dot(w_in, wc0, precision=hi) + wx0,
                                 jnp.dot(b_in, wc0, precision=hi) + b0))

    pc_ws = []
    for i in range(1, L):
        w, b = hidden[2 * i], hidden[2 * i + 1]
        pc_ws.append(w[0:2 * h, :].astype(compute_dtype))    # [w_prev; w_cur] stacked
        proj_blocks.append(pack_proj(w[2 * h:2 * h + S, :], b))

    proj_blocks.append(pack_proj(w_out[2 * h:2 * h + S, :], b_out))  # (S+1, 1)

    wpo = w_out[0:h, :].T.astype(jnp.float32)                # (1, h)
    wco = w_out[h:2 * h, :].T.astype(jnp.float32)            # (1, h)
    return proj_blocks, pc_ws, wpo, wco


def skipconn_forward(x, params, *, hidden_size: int, num_hidden_layers: int,
                     init_size: int, tile_b: int = 2048,
                     compute_dtype=jnp.bfloat16):
    """params is a flat list: [w_in, b_in, (w_h_i, b_h_i)*L, w_out, b_out]
    with weights stored as (in_features, out_features)."""
    assert num_hidden_layers >= 1
    batch = x.shape[0]
    h, L = hidden_size, num_hidden_layers

    proj_blocks, pc_ws, wpo, wco = _pack_params(
        params, hidden_size=h, num_hidden_layers=L,
        init_size=init_size, compute_dtype=compute_dtype)

    # --- batch tiling (big tiles; pad to a tile multiple; padded rows sliced off)
    batch8 = -(-batch // 8) * 8
    tile_b = int(max(8, min(tile_b, batch8)))
    tile_b -= tile_b % 8
    num_tiles = -(-batch // tile_b)
    padded = num_tiles * tile_b
    xp = x.astype(jnp.float32)                 # x feeds the VPU only -> keep f32
    if padded != batch:
        xp = jnp.pad(xp, ((0, padded - batch), (0, 0)))

    kernel = _make_skipconn_kernel(L, h, init_size, compute_dtype)

    def _resident(a):
        # Full-array block, constant index -> DMA'd once, VMEM-resident.
        return pl.BlockSpec(a.shape, lambda i: (0, 0))

    weight_args = [*proj_blocks, *pc_ws, wpo, wco]
    in_specs = ([pl.BlockSpec((tile_b, init_size), lambda i: (i, 0))]
                + [_resident(a) for a in weight_args])
    out_specs = pl.BlockSpec((tile_b, 1), lambda i: (i, 0))

    out = pl.pallas_call(
        kernel,
        out_shape=jax.ShapeDtypeStruct((padded, 1), jnp.float32),
        grid=(num_tiles,),
        in_specs=in_specs,
        out_specs=out_specs,
        compiler_params=pltpu.CompilerParams(
            dimension_semantics=("parallel",)),  # v7x: shard batch tiles over 2 TCs
    )(xp, *weight_args)
    return out[:batch]


# -----------------------------------------------------------------------------
# Init + pure-JAX reference (mirrors the PyTorch forward)
# -----------------------------------------------------------------------------
def init_params(key, *, hidden_size: int, num_hidden_layers: int, init_size: int):
    """Deterministic nn.Linear-style init; weights stored as (in, out)."""
    params = []

    def linear(key, fan_in, fan_out):
        kw, kb = jax.random.split(key)
        bound = 1.0 / math.sqrt(fan_in)
        w = jax.random.uniform(kw, (fan_in, fan_out), jnp.float32, -bound, bound)
        b = jax.random.uniform(kb, (1, fan_out), jnp.float32, -bound, bound)
        return w, b

    keys = jax.random.split(key, num_hidden_layers + 2)

    w, b = linear(keys[0], init_size, hidden_size)            # inLayer
    params += [w, b]
    for i in range(num_hidden_layers):                        # hidden layers
        in_size = (hidden_size * 2 + init_size) if i > 0 else (hidden_size + init_size)
        w, b = linear(keys[1 + i], in_size, hidden_size)
        params += [w, b]
    w, b = linear(keys[-1], hidden_size * 2 + init_size, 1)   # outLayer
    params += [w, b]
    return params


def skipconn_reference(x, params, *, hidden_size, num_hidden_layers, init_size):
    w_in, b_in = params[0], params[1]
    hidden = params[2:2 + 2 * num_hidden_layers]
    w_out, b_out = params[-2], params[-1]

    cur = x @ w_in + b_in
    prev = jnp.zeros((x.shape[0], 0), jnp.float32)
    for i in range(num_hidden_layers):
        w, b = hidden[2 * i], hidden[2 * i + 1]
        combined = jnp.concatenate([prev, cur, x], axis=1)
        prev = cur
        cur = jax.nn.relu(combined @ w + b)
    combined = jnp.concatenate([prev, cur, x], axis=1)
    return jax.nn.sigmoid(combined @ w_out + b_out)


# -----------------------------------------------------------------------------
# Self-test
# -----------------------------------------------------------------------------
if __name__ == "__main__":
    batch = 1000                 # not a tile multiple at tile_b=512 -> padding path
    hidden_size = 32
    num_hidden_layers = 3
    init_size = 2

    key = jax.random.PRNGKey(0)
    kx, kp = jax.random.split(key)
    x = jax.random.normal(kx, (batch, init_size), jnp.float32)
    params = init_params(kp, hidden_size=hidden_size,
                         num_hidden_layers=num_hidden_layers,
                         init_size=init_size)

    ref = skipconn_reference(x, params, hidden_size=hidden_size,
                             num_hidden_layers=num_hidden_layers,
                             init_size=init_size)

    # f32 path, 2 batch tiles + padding (1000 -> 2 x 512): tight tolerance.
    fwd_f32 = jax.jit(functools.partial(
        skipconn_forward, hidden_size=hidden_size,
        num_hidden_layers=num_hidden_layers, init_size=init_size,
        tile_b=512, compute_dtype=jnp.float32))
    out_f32 = jax.block_until_ready(fwd_f32(x, params))
    assert out_f32.shape == (batch, 1)
    assert jnp.allclose(out_f32, ref, atol=5e-5, rtol=1e-5)

    # Default path: bf16 dot inputs (MXU-native), f32 accumulation, big tile.
    fwd_bf16 = jax.jit(functools.partial(
        skipconn_forward, hidden_size=hidden_size,
        num_hidden_layers=num_hidden_layers, init_size=init_size))
    out_bf16 = jax.block_until_ready(fwd_bf16(x, params))
    assert out_bf16.shape == (batch, 1)
    assert jnp.allclose(out_bf16, ref, atol=2e-2, rtol=0.0)

    # L=1 edge case: exercises the layer-0 fold with no hidden prev/cur dots.
    p1 = init_params(jax.random.PRNGKey(1), hidden_size=32,
                     num_hidden_layers=1, init_size=2)
    x1 = jax.random.normal(jax.random.PRNGKey(2), (128, 2), jnp.float32)
    ref1 = skipconn_reference(x1, p1, hidden_size=32, num_hidden_layers=1,
                              init_size=2)
    fwd1 = jax.jit(functools.partial(
        skipconn_forward, hidden_size=32, num_hidden_layers=1, init_size=2,
        tile_b=128, compute_dtype=jnp.float32))
    out1 = jax.block_until_ready(fwd1(x1, p1))
    assert out1.shape == (128, 1)
    assert jnp.allclose(out1, ref1, atol=5e-5, rtol=1e-5)

    print("KERNEL_OK")
</pallas_src>

<mosaic_0001>
module attributes {stable_mosaic.version = 11 : i64} {
  func.func @kernel(%arg0: i32, %arg1: memref<512x2xf32, #tpu.memory_space<vmem>>, %arg2: memref<3x32xf32, #tpu.memory_space<vmem>>, %arg3: memref<3x32xf32, #tpu.memory_space<vmem>>, %arg4: memref<3x32xf32, #tpu.memory_space<vmem>>, %arg5: memref<3x32xf32, #tpu.memory_space<vmem>>, %arg6: memref<3x1xf32, #tpu.memory_space<vmem>>, %arg7: memref<64x32xf32, #tpu.memory_space<vmem>>, %arg8: memref<64x32xf32, #tpu.memory_space<vmem>>, %arg9: memref<1x32xf32, #tpu.memory_space<vmem>>, %arg10: memref<1x32xf32, #tpu.memory_space<vmem>>, %arg11: memref<512x1xf32, #tpu.memory_space<vmem>>) attributes {dimension_semantics = [#tpu.dimension_semantics<parallel>], iteration_bounds = array<i64: 2>, scalar_prefetch = 0 : i64, scratch_operands = 0 : i64, tpu.core_type = #tpu.core_type<tc>, window_params = [{transform_indices = @transform_0, window_bounds = array<i64: 512, 2>}, {pipeline_mode = #tpu.pipeline_mode<synchronous>, transform_indices = @transform_1, window_bounds = array<i64: 3, 32>}, {pipeline_mode = #tpu.pipeline_mode<synchronous>, transform_indices = @transform_2, window_bounds = array<i64: 3, 32>}, {pipeline_mode = #tpu.pipeline_mode<synchronous>, transform_indices = @transform_3, window_bounds = array<i64: 3, 32>}, {pipeline_mode = #tpu.pipeline_mode<synchronous>, transform_indices = @transform_4, window_bounds = array<i64: 3, 32>}, {pipeline_mode = #tpu.pipeline_mode<synchronous>, transform_indices = @transform_5, window_bounds = array<i64: 3, 1>}, {pipeline_mode = #tpu.pipeline_mode<synchronous>, transform_indices = @transform_6, window_bounds = array<i64: 64, 32>}, {pipeline_mode = #tpu.pipeline_mode<synchronous>, transform_indices = @transform_7, window_bounds = array<i64: 64, 32>}, {pipeline_mode = #tpu.pipeline_mode<synchronous>, transform_indices = @transform_8, window_bounds = array<i64: 1, 32>}, {pipeline_mode = #tpu.pipeline_mode<synchronous>, transform_indices = @transform_9, window_bounds = array<i64: 1, 32>}, {transform_indices = @transform_10, window_bounds = array<i64: 512, 1>}]} {
    %c0 = arith.constant 0 : index
    %c0_0 = arith.constant 0 : index
    %0 = vector.load %arg1[%c0, %c0_0] : memref<512x2xf32, #tpu.memory_space<vmem>>, vector<512x2xf32>
    %1 = vector.extract_strided_slice %0 {offsets = [0, 0], sizes = [512, 1], strides = [1, 1]} : vector<512x2xf32> to vector<512x1xf32>
    %2 = vector.extract_strided_slice %0 {offsets = [0, 1], sizes = [512, 1], strides = [1, 1]} : vector<512x2xf32> to vector<512x1xf32>
    %c0_1 = arith.constant 0 : index
    %c0_2 = arith.constant 0 : index
    %3 = vector.load %arg2[%c0_1, %c0_2] : memref<3x32xf32, #tpu.memory_space<vmem>>, vector<3x32xf32>
    %4 = vector.extract_strided_slice %3 {offsets = [2, 0], sizes = [1, 32], strides = [1, 1]} : vector<3x32xf32> to vector<1x32xf32>
    %5 = vector.extract_strided_slice %3 {offsets = [0, 0], sizes = [1, 32], strides = [1, 1]} : vector<3x32xf32> to vector<1x32xf32>
    %6 = vector.broadcast %1 : vector<512x1xf32> to vector<512x32xf32>
    %7 = vector.broadcast %5 : vector<1x32xf32> to vector<512x32xf32>
    %8 = arith.mulf %6, %7 : vector<512x32xf32>
    %9 = vector.broadcast %4 : vector<1x32xf32> to vector<512x32xf32>
    %10 = arith.addf %9, %8 : vector<512x32xf32>
    %11 = vector.extract_strided_slice %3 {offsets = [1, 0], sizes = [1, 32], strides = [1, 1]} : vector<3x32xf32> to vector<1x32xf32>
    %12 = vector.broadcast %2 : vector<512x1xf32> to vector<512x32xf32>
    %13 = vector.broadcast %11 : vector<1x32xf32> to vector<512x32xf32>
    %14 = arith.mulf %12, %13 : vector<512x32xf32>
    %15 = arith.addf %10, %14 : vector<512x32xf32>
    %c0_3 = arith.constant 0 : index
    %c0_4 = arith.constant 0 : index
    %16 = vector.load %arg3[%c0_3, %c0_4] : memref<3x32xf32, #tpu.memory_space<vmem>>, vector<3x32xf32>
    %17 = vector.extract_strided_slice %16 {offsets = [2, 0], sizes = [1, 32], strides = [1, 1]} : vector<3x32xf32> to vector<1x32xf32>
    %18 = vector.extract_strided_slice %16 {offsets = [0, 0], sizes = [1, 32], strides = [1, 1]} : vector<3x32xf32> to vector<1x32xf32>
    %19 = vector.broadcast %1 : vector<512x1xf32> to vector<512x32xf32>
    %20 = vector.broadcast %18 : vector<1x32xf32> to vector<512x32xf32>
    %21 = arith.mulf %19, %20 : vector<512x32xf32>
    %22 = vector.broadcast %17 : vector<1x32xf32> to vector<512x32xf32>
    %23 = arith.addf %22, %21 : vector<512x32xf32>
    %24 = vector.extract_strided_slice %16 {offsets = [1, 0], sizes = [1, 32], strides = [1, 1]} : vector<3x32xf32> to vector<1x32xf32>
    %25 = vector.broadcast %2 : vector<512x1xf32> to vector<512x32xf32>
    %26 = vector.broadcast %24 : vector<1x32xf32> to vector<512x32xf32>
    %27 = arith.mulf %25, %26 : vector<512x32xf32>
    %28 = arith.addf %23, %27 : vector<512x32xf32>
    %cst = arith.constant 0.000000e+00 : f32
    %29 = vector.broadcast %cst : f32 to vector<512x32xf32>
    %30 = arith.maximumf %28, %29 : vector<512x32xf32>
    %31 = tpu.concatenate %15, %30 in 1 : vector<512x32xf32>, vector<512x32xf32> -> vector<512x64xf32>
    %c0_5 = arith.constant 0 : index
    %c0_6 = arith.constant 0 : index
    %32 = vector.load %arg7[%c0_5, %c0_6] : memref<64x32xf32, #tpu.memory_space<vmem>>, vector<64x32xf32>
    %cst_7 = arith.constant dense<0.000000e+00> : vector<512x32xf32>
    %33 = tpu.matmul %31, %32, %cst_7 {dimension_numbers = #tpu.dot_dimension_numbers<[1], [0], [0], [1], [0, 0, 1, 1], [], []>} : vector<512x64xf32>, vector<64x32xf32>, vector<512x32xf32> -> vector<512x32xf32>
    %c0_8 = arith.constant 0 : index
    %c0_9 = arith.constant 0 : index
    %34 = vector.load %arg4[%c0_8, %c0_9] : memref<3x32xf32, #tpu.memory_space<vmem>>, vector<3x32xf32>
    %35 = vector.extract_strided_slice %34 {offsets = [2, 0], sizes = [1, 32], strides = [1, 1]} : vector<3x32xf32> to vector<1x32xf32>
    %36 = vector.extract_strided_slice %34 {offsets = [0, 0], sizes = [1, 32], strides = [1, 1]} : vector<3x32xf32> to vector<1x32xf32>
    %37 = vector.broadcast %1 : vector<512x1xf32> to vector<512x32xf32>
    %38 = vector.broadcast %36 : vector<1x32xf32> to vector<512x32xf32>
    %39 = arith.mulf %37, %38 : vector<512x32xf32>
    %40 = vector.broadcast %35 : vector<1x32xf32> to vector<512x32xf32>
    %41 = arith.addf %40, %39 : vector<512x32xf32>
    %42 = vector.extract_strided_slice %34 {offsets = [1, 0], sizes = [1, 32], strides = [1, 1]} : vector<3x32xf32> to vector<1x32xf32>
    %43 = vector.broadcast %2 : vector<512x1xf32> to vector<512x32xf32>
    %44 = vector.broadcast %42 : vector<1x32xf32> to vector<512x32xf32>
    %45 = arith.mulf %43, %44 : vector<512x32xf32>
    %46 = arith.addf %41, %45 : vector<512x32xf32>
    %47 = arith.addf %33, %46 : vector<512x32xf32>
    %cst_10 = arith.constant 0.000000e+00 : f32
    %48 = vector.broadcast %cst_10 : f32 to vector<512x32xf32>
    %49 = arith.maximumf %47, %48 : vector<512x32xf32>
    %50 = tpu.concatenate %30, %49 in 1 : vector<512x32xf32>, vector<512x32xf32> -> vector<512x64xf32>
    %c0_11 = arith.constant 0 : index
    %c0_12 = arith.constant 0 : index
    %51 = vector.load %arg8[%c0_11, %c0_12] : memref<64x32xf32, #tpu.memory_space<vmem>>, vector<64x32xf32>
    %cst_13 = arith.constant dense<0.000000e+00> : vector<512x32xf32>
    %52 = tpu.matmul %50, %51, %cst_13 {dimension_numbers = #tpu.dot_dimension_numbers<[1], [0], [0], [1], [0, 0, 1, 1], [], []>} : vector<512x64xf32>, vector<64x32xf32>, vector<512x32xf32> -> vector<512x32xf32>
    %c0_14 = arith.constant 0 : index
    %c0_15 = arith.constant 0 : index
    %53 = vector.load %arg5[%c0_14, %c0_15] : memref<3x32xf32, #tpu.memory_space<vmem>>, vector<3x32xf32>
    %54 = vector.extract_strided_slice %53 {offsets = [2, 0], sizes = [1, 32], strides = [1, 1]} : vector<3x32xf32> to vector<1x32xf32>
    %55 = vector.extract_strided_slice %53 {offsets = [0, 0], sizes = [1, 32], strides = [1, 1]} : vector<3x32xf32> to vector<1x32xf32>
    %56 = vector.broadcast %1 : vector<512x1xf32> to vector<512x32xf32>
    %57 = vector.broadcast %55 : vector<1x32xf32> to vector<512x32xf32>
    %58 = arith.mulf %56, %57 : vector<512x32xf32>
    %59 = vector.broadcast %54 : vector<1x32xf32> to vector<512x32xf32>
    %60 = arith.addf %59, %58 : vector<512x32xf32>
    %61 = vector.extract_strided_slice %53 {offsets = [1, 0], sizes = [1, 32], strides = [1, 1]} : vector<3x32xf32> to vector<1x32xf32>
    %62 = vector.broadcast %2 : vector<512x1xf32> to vector<512x32xf32>
    %63 = vector.broadcast %61 : vector<1x32xf32> to vector<512x32xf32>
    %64 = arith.mulf %62, %63 : vector<512x32xf32>
    %65 = arith.addf %60, %64 : vector<512x32xf32>
    %66 = arith.addf %52, %65 : vector<512x32xf32>
    %cst_16 = arith.constant 0.000000e+00 : f32
    %67 = vector.broadcast %cst_16 : f32 to vector<512x32xf32>
    %68 = arith.maximumf %66, %67 : vector<512x32xf32>
    %c0_17 = arith.constant 0 : index
    %c0_18 = arith.constant 0 : index
    %69 = vector.load %arg9[%c0_17, %c0_18] : memref<1x32xf32, #tpu.memory_space<vmem>>, vector<1x32xf32>
    %70 = vector.broadcast %69 : vector<1x32xf32> to vector<512x32xf32>
    %71 = arith.mulf %49, %70 : vector<512x32xf32>
    %c0_19 = arith.constant 0 : index
    %c0_20 = arith.constant 0 : index
    %72 = vector.load %arg10[%c0_19, %c0_20] : memref<1x32xf32, #tpu.memory_space<vmem>>, vector<1x32xf32>
    %73 = vector.broadcast %72 : vector<1x32xf32> to vector<512x32xf32>
    %74 = arith.mulf %68, %73 : vector<512x32xf32>
    %75 = arith.addf %71, %74 : vector<512x32xf32>
    %cst_21 = arith.constant dense<0.000000e+00> : vector<512xf32>
    %76 = vector.multi_reduction <add>, %75, %cst_21 [1] : vector<512x32xf32> to vector<512xf32>
    %77 = vector.shape_cast %76 : vector<512xf32> to vector<512x1xf32>
    %c0_22 = arith.constant 0 : index
    %c0_23 = arith.constant 0 : index
    %78 = vector.load %arg6[%c0_22, %c0_23] : memref<3x1xf32, #tpu.memory_space<vmem>>, vector<3x1xf32>
    %79 = vector.extract_strided_slice %78 {offsets = [2, 0], sizes = [1, 1], strides = [1, 1]} : vector<3x1xf32> to vector<1x1xf32>
    %80 = vector.extract_strided_slice %78 {offsets = [0, 0], sizes = [1, 1], strides = [1, 1]} : vector<3x1xf32> to vector<1x1xf32>
    %81 = vector.broadcast %80 : vector<1x1xf32> to vector<512x1xf32>
    %82 = arith.mulf %1, %81 : vector<512x1xf32>
    %83 = vector.broadcast %79 : vector<1x1xf32> to vector<512x1xf32>
    %84 = arith.addf %83, %82 : vector<512x1xf32>
    %85 = vector.extract_strided_slice %78 {offsets = [1, 0], sizes = [1, 1], strides = [1, 1]} : vector<3x1xf32> to vector<1x1xf32>
    %86 = vector.broadcast %85 : vector<1x1xf32> to vector<512x1xf32>
    %87 = arith.mulf %2, %86 : vector<512x1xf32>
    %88 = arith.addf %84, %87 : vector<512x1xf32>
    %89 = arith.addf %77, %88 : vector<512x1xf32>
    %90 = arith.negf %89 : vector<512x1xf32>
    %91 = math.exp %90 : vector<512x1xf32>
    %cst_24 = arith.constant 1.000000e+00 : f32
    %92 = vector.broadcast %cst_24 : f32 to vector<512x1xf32>
    %93 = arith.addf %92, %91 : vector<512x1xf32>
    %94 = arith.divf %92, %93 : vector<512x1xf32>
    %c0_25 = arith.constant 0 : index
    %c0_26 = arith.constant 0 : index
    %95 = vector.load %arg11[%c0_25, %c0_26] : memref<512x1xf32, #tpu.memory_space<vmem>>, vector<512x1xf32>
    tpu.vector_store %arg11[%c0_25, %c0_26], %94 {strides = array<i32>} : memref<512x1xf32, #tpu.memory_space<vmem>>, vector<512x1xf32>,
    return
  }
  func.func @transform_0(%arg0: i32) -> (i32, i32) {
    %c0_i32 = arith.constant 0 : i32
    %c0_i32_0 = arith.constant 0 : i32
    return %arg0, %c0_i32 : i32, i32
  }
  func.func @transform_1(%arg0: i32) -> (i32, i32) {
    %c0_i32 = arith.constant 0 : i32
    %c0_i32_0 = arith.constant 0 : i32
    %c0_i32_1 = arith.constant 0 : i32
    return %c0_i32, %c0_i32_0 : i32, i32
  }
  func.func @transform_2(%arg0: i32) -> (i32, i32) {
    %c0_i32 = arith.constant 0 : i32
    %c0_i32_0 = arith.constant 0 : i32
    %c0_i32_1 = arith.constant 0 : i32
    return %c0_i32, %c0_i32_0 : i32, i32
  }
  func.func @transform_3(%arg0: i32) -> (i32, i32) {
    %c0_i32 = arith.constant 0 : i32
    %c0_i32_0 = arith.constant 0 : i32
    %c0_i32_1 = arith.constant 0 : i32
    return %c0_i32, %c0_i32_0 : i32, i32
  }
  func.func @transform_4(%arg0: i32) -> (i32, i32) {
    %c0_i32 = arith.constant 0 : i32
    %c0_i32_0 = arith.constant 0 : i32
    %c0_i32_1 = arith.constant 0 : i32
    return %c0_i32, %c0_i32_0 : i32, i32
  }
  func.func @transform_5(%arg0: i32) -> (i32, i32) {
    %c0_i32 = arith.constant 0 : i32
    %c0_i32_0 = arith.constant 0 : i32
    %c0_i32_1 = arith.constant 0 : i32
    return %c0_i32, %c0_i32_0 : i32, i32
  }
  func.func @transform_6(%arg0: i32) -> (i32, i32) {
    %c0_i32 = arith.constant 0 : i32
    %c0_i32_0 = arith.constant 0 : i32
    %c0_i32_1 = arith.constant 0 : i32
    return %c0_i32, %c0_i32_0 : i32, i32
  }
  func.func @transform_7(%arg0: i32) -> (i32, i32) {
    %c0_i32 = arith.constant 0 : i32
    %c0_i32_0 = arith.constant 0 : i32
    %c0_i32_1 = arith.constant 0 : i32
    return %c0_i32, %c0_i32_0 : i32, i32
  }
  func.func @transform_8(%arg0: i32) -> (i32, i32) {
    %c0_i32 = arith.constant 0 : i32
    %c0_i32_0 = arith.constant 0 : i32
    %c0_i32_1 = arith.constant 0 : i32
    return %c0_i32, %c0_i32_0 : i32, i32
  }
  func.func @transform_9(%arg0: i32) -> (i32, i32) {
    %c0_i32 = arith.constant 0 : i32
    %c0_i32_0 = arith.constant 0 : i32
    %c0_i32_1 = arith.constant 0 : i32
    return %c0_i32, %c0_i32_0 : i32, i32
  }
  func.func @transform_10(%arg0: i32) -> (i32, i32) {
    %c0_i32 = arith.constant 0 : i32
    %c0_i32_0 = arith.constant 0 : i32
    return %arg0, %c0_i32 : i32, i32
  }
}

</mosaic_0001>

<llo_original>
// kernel: skipconn_forward.1
$region0: #{skipconn_forward.1}
  #allocation0 [shape = 'u32[]', space=smem, size = 0x4, offset = 0x4, fixed_abs, tag = 'smem constant byte address 0x4 - core index']
  #allocation1 [shape = 'u32[144,128]{1,0:T(1,128)}', space=vmem, size = 0x12000, scoped, tag = 'internal scratch']
  %s0 = inlined_call_operand.vmem [shape: f32[1024,2], index: 0, kind: input, shape index: {}]
  %s1 = inlined_call_operand.vmem [shape: f32[3,32], index: 1, kind: input, shape index: {}]
  %s2 = inlined_call_operand.vmem [shape: f32[3,32], index: 2, kind: input, shape index: {}]
  %s3 = inlined_call_operand.vmem [shape: f32[3,32], index: 3, kind: input, shape index: {}]
  %s4 = inlined_call_operand.vmem [shape: f32[3,32], index: 4, kind: input, shape index: {}]
  %s5 = inlined_call_operand.vmem [shape: f32[3,1], index: 5, kind: input, shape index: {}]
  %s6 = inlined_call_operand.vmem [shape: f32[64,32], index: 6, kind: input, shape index: {}]
  %s7 = inlined_call_operand.vmem [shape: f32[64,32], index: 7, kind: input, shape index: {}]
  %s8 = inlined_call_operand.vmem [shape: f32[1,32], index: 8, kind: input, shape index: {}]
  %s9 = inlined_call_operand.vmem [shape: f32[1,32], index: 9, kind: input, shape index: {}]
  %s10 = inlined_call_operand.vmem [shape: f32[1024,1], index: 10, kind: output, shape index: {}]
  %s11 = sld [smem:[#allocation0]]
  $region73: #{skipconn_forward.1} parent=0
    _
  %s13 = ssub.s32 1, %s11
  %s14 = scalar_select 0, %s13, %s11
  loop: start=0, step=1, limit=4
  $region2: #{skipconn_forward.1} parent=0 // loop_pre_header
    _
  $region3: #{skipconn_forward.1} parent=0 // loop_header
    %s16 = sphi 0, %s20
    %p17 = scmp.ge.s32.totalorder %s16, 4
    %s26 = sphi 0, %s28
    %s29 = sphi 0, %s26
    %s30 = sphi 0, %s29
    %s46 = sphi 0, %s30
    %s50 = sphi 0, %s50
    %s52 = sphi 0, %s50
    %s53 = sphi 0, %s52
    %s67 = sphi 0, %s53
    %s71 = sphi 0, %s71
    %s73 = sphi 0, %s71
    %s74 = sphi 0, %s73
    %s88 = sphi 0, %s74
    %s92 = sphi 0, %s92
    %s94 = sphi 0, %s92
    %s95 = sphi 0, %s94
    %s109 = sphi 0, %s95
    %s113 = sphi 0, %s113
    %s115 = sphi 0, %s113
    %s116 = sphi 0, %s115
    %s130 = sphi 0, %s116
    %s134 = sphi 0, %s134
    %s136 = sphi 0, %s134
    %s137 = sphi 0, %s136
    %s151 = sphi 0, %s137
    %s155 = sphi 0, %s155
    %s157 = sphi 0, %s155
    %s158 = sphi 0, %s157
    %s172 = sphi 0, %s158
    %s176 = sphi 0, %s176
    %s178 = sphi 0, %s176
    %s179 = sphi 0, %s178
    %s193 = sphi 0, %s179
    %s197 = sphi 0, %s197
    %s199 = sphi 0, %s197
    %s200 = sphi 0, %s199
    %s214 = sphi 0, %s200
    %s218 = sphi 0, %s218
    %s220 = sphi 0, %s218
    %s221 = sphi 0, %s220
    %s235 = sphi 0, %s221
    %s241 = sphi 0, %s243
    %s244 = sphi 0, %s241
    %s245 = sphi 0, %s244
    %s261 = sphi 0, %s245
  $region4: #{skipconn_forward.1} parent=0 // loop_header_branch
    %19 = sbr.rel (%p17) target = $region8
  $region5: #{skipconn_forward.1} parent=0 // loop_body
    %s21 = ssub.s32 %s16, 1
    %s22 = ssub.s32 %s16, 2
    %s23 = sadd.s32 %s16, 1
    %s24 = ssub.s32 %s16, %s23
    %p25 = scmp.eq.s32.totalorder %s24, 0
    %s27 = sadd.s32 %s26, 1
    %s28 = scalar_select %p25, %s26, %s27
    %p31 = pneg %p25
    %p32 = scmp.eq.s32.totalorder %s16, 1
    %p33 = por %p31, %p32
    %p34 = scmp.ne.s32.totalorder %s26, %s29
    %p35 = scmp.eq.s32.totalorder %s16, 0
    %p36 = por %p34, %p35
    %p37 = scmp.ne.s32.totalorder %s26, %s29
    %p38 = scmp.eq.s32.totalorder %s21, 1
    %p39 = por %p37, %p38
    %p40 = scmp.ne.s32.totalorder %s29, %s30
    %p41 = scmp.eq.s32.totalorder %s21, 0
    %p42 = por %p40, %p41
    %p43 = scmp.ne.s32.totalorder %s29, %s30
    %p44 = scmp.eq.s32.totalorder %s22, 1
    %p45 = por %p43, %p44
    %p47 = scmp.ne.s32.totalorder %s30, %s46
    %p48 = scmp.eq.s32.totalorder %s22, 0
    %p49 = por %p47, %p48
    %s51 = sadd.s32 %s50, 1
    %p54 = scmp.eq.s32.totalorder %s16, 1
    %p55 = scmp.ne.s32.totalorder %s50, %s52
    %p56 = scmp.eq.s32.totalorder %s16, 0
    %p57 = por %p55, %p56
    %p58 = scmp.ne.s32.totalorder %s50, %s52
    %p59 = scmp.eq.s32.totalorder %s21, 1
    %p60 = por %p58, %p59
    %p61 = scmp.ne.s32.totalorder %s52, %s53
    %p62 = scmp.eq.s32.totalorder %s21, 0
    %p63 = por %p61, %p62
    %p64 = scmp.ne.s32.totalorder %s52, %s53
    %p65 = scmp.eq.s32.totalorder %s22, 1
    %p66 = por %p64, %p65
    %p68 = scmp.ne.s32.totalorder %s53, %s67
    %p69 = scmp.eq.s32.totalorder %s22, 0
    %p70 = por %p68, %p69
    %s72 = sadd.s32 %s71, 1
    %p75 = scmp.eq.s32.totalorder %s16, 1
    %p76 = scmp.ne.s32.totalorder %s71, %s73
    %p77 = scmp.eq.s32.totalorder %s16, 0
    %p78 = por %p76, %p77
    %p79 = scmp.ne.s32.totalorder %s71, %s73
    %p80 = scmp.eq.s32.totalorder %s21, 1
    %p81 = por %p79, %p80
    %p82 = scmp.ne.s32.totalorder %s73, %s74
    %p83 = scmp.eq.s32.totalorder %s21, 0
    %p84 = por %p82, %p83
    %p85 = scmp.ne.s32.totalorder %s73, %s74
    %p86 = scmp.eq.s32.totalorder %s22, 1
    %p87 = por %p85, %p86
    %p89 = scmp.ne.s32.totalorder %s74, %s88
    %p90 = scmp.eq.s32.totalorder %s22, 0
    %p91 = por %p89, %p90
    %s93 = sadd.s32 %s92, 1
    %p96 = scmp.eq.s32.totalorder %s16, 1
    %p97 = scmp.ne.s32.totalorder %s92, %s94
    %p98 = scmp.eq.s32.totalorder %s16, 0
    %p99 = por %p97, %p98
    %p100 = scmp.ne.s32.totalorder %s92, %s94
    %p101 = scmp.eq.s32.totalorder %s21, 1
    %p102 = por %p100, %p101
    %p103 = scmp.ne.s32.totalorder %s94, %s95
    %p104 = scmp.eq.s32.totalorder %s21, 0
    %p105 = por %p103, %p104
    %p106 = scmp.ne.s32.totalorder %s94, %s95
    %p107 = scmp.eq.s32.totalorder %s22, 1
    %p108 = por %p106, %p107
    %p110 = scmp.ne.s32.totalorder %s95, %s109
    %p111 = scmp.eq.s32.totalorder %s22, 0
    %p112 = por %p110, %p111
    %s114 = sadd.s32 %s113, 1
    %p117 = scmp.eq.s32.totalorder %s16, 1
    %p118 = scmp.ne.s32.totalorder %s113, %s115
    %p119 = scmp.eq.s32.totalorder %s16, 0
    %p120 = por %p118, %p119
    %p121 = scmp.ne.s32.totalorder %s113, %s115
    %p122 = scmp.eq.s32.totalorder %s21, 1
    %p123 = por %p121, %p122
    %p124 = scmp.ne.s32.totalorder %s115, %s116
    %p125 = scmp.eq.s32.totalorder %s21, 0
    %p126 = por %p124, %p125
    %p127 = scmp.ne.s32.totalorder %s115, %s116
    %p128 = scmp.eq.s32.totalorder %s22, 1
    %p129 = por %p127, %p128
    %p131 = scmp.ne.s32.totalorder %s116, %s130
    %p132 = scmp.eq.s32.totalorder %s22, 0
    %p133 = por %p131, %p132
    %s135 = sadd.s32 %s134, 1
    %p138 = scmp.eq.s32.totalorder %s16, 1
    %p139 = scmp.ne.s32.totalorder %s134, %s136
    %p140 = scmp.eq.s32.totalorder %s16, 0
    %p141 = por %p139, %p140
    %p142 = scmp.ne.s32.totalorder %s134, %s136
    %p143 = scmp.eq.s32.totalorder %s21, 1
    %p144 = por %p142, %p143
    %p145 = scmp.ne.s32.totalorder %s136, %s137
    %p146 = scmp.eq.s32.totalorder %s21, 0
    %p147 = por %p145, %p146
    %p148 = scmp.ne.s32.totalorder %s136, %s137
    %p149 = scmp.eq.s32.totalorder %s22, 1
    %p150 = por %p148, %p149
    %p152 = scmp.ne.s32.totalorder %s137, %s151
    %p153 = scmp.eq.s32.totalorder %s22, 0
    %p154 = por %p152, %p153
    %s156 = sadd.s32 %s155, 1
    %p159 = scmp.eq.s32.totalorder %s16, 1
    %p160 = scmp.ne.s32.totalorder %s155, %s157
    %p161 = scmp.eq.s32.totalorder %s16, 0
    %p162 = por %p160, %p161
    %p163 = scmp.ne.s32.totalorder %s155, %s157
    %p164 = scmp.eq.s32.totalorder %s21, 1
    %p165 = por %p163, %p164
    %p166 = scmp.ne.s32.totalorder %s157, %s158
    %p167 = scmp.eq.s32.totalorder %s21, 0
    %p168 = por %p166, %p167
    %p169 = scmp.ne.s32.totalorder %s157, %s158
    %p170 = scmp.eq.s32.totalorder %s22, 1
    %p171 = por %p169, %p170
    %p173 = scmp.ne.s32.totalorder %s158, %s172
    %p174 = scmp.eq.s32.totalorder %s22, 0
    %p175 = por %p173, %p174
    %s177 = sadd.s32 %s176, 1
    %p180 = scmp.eq.s32.totalorder %s16, 1
    %p181 = scmp.ne.s32.totalorder %s176, %s178
    %p182 = scmp.eq.s32.totalorder %s16, 0
    %p183 = por %p181, %p182
    %p184 = scmp.ne.s32.totalorder %s176, %s178
    %p185 = scmp.eq.s32.totalorder %s21, 1
    %p186 = por %p184, %p185
    %p187 = scmp.ne.s32.totalorder %s178, %s179
    %p188 = scmp.eq.s32.totalorder %s21, 0
    %p189 = por %p187, %p188
    %p190 = scmp.ne.s32.totalorder %s178, %s179
    %p191 = scmp.eq.s32.totalorder %s22, 1
    %p192 = por %p190, %p191
    %p194 = scmp.ne.s32.totalorder %s179, %s193
    %p195 = scmp.eq.s32.totalorder %s22, 0
    %p196 = por %p194, %p195
    %s198 = sadd.s32 %s197, 1
    %p201 = scmp.eq.s32.totalorder %s16, 1
    %p202 = scmp.ne.s32.totalorder %s197, %s199
    %p203 = scmp.eq.s32.totalorder %s16, 0
    %p204 = por %p202, %p203
    %p205 = scmp.ne.s32.totalorder %s197, %s199
    %p206 = scmp.eq.s32.totalorder %s21, 1
    %p207 = por %p205, %p206
    %p208 = scmp.ne.s32.totalorder %s199, %s200
    %p209 = scmp.eq.s32.totalorder %s21, 0
    %p210 = por %p208, %p209
    %p211 = scmp.ne.s32.totalorder %s199, %s200
    %p212 = scmp.eq.s32.totalorder %s22, 1
    %p213 = por %p211, %p212
    %p215 = scmp.ne.s32.totalorder %s200, %s214
    %p216 = scmp.eq.s32.totalorder %s22, 0
    %p217 = por %p215, %p216
    %s219 = sadd.s32 %s218, 1
    %p222 = scmp.eq.s32.totalorder %s16, 1
    %p223 = scmp.ne.s32.totalorder %s218, %s220
    %p224 = scmp.eq.s32.totalorder %s16, 0
    %p225 = por %p223, %p224
    %p226 = scmp.ne.s32.totalorder %s218, %s220
    %p227 = scmp.eq.s32.totalorder %s21, 1
    %p228 = por %p226, %p227
    %p229 = scmp.ne.s32.totalorder %s220, %s221
    %p230 = scmp.eq.s32.totalorder %s21, 0
    %p231 = por %p229, %p230
    %p232 = scmp.ne.s32.totalorder %s220, %s221
    %p233 = scmp.eq.s32.totalorder %s22, 1
    %p234 = por %p232, %p233
    %p236 = scmp.ne.s32.totalorder %s221, %s235
    %p237 = scmp.eq.s32.totalorder %s22, 0
    %p238 = por %p236, %p237
    %s239 = ssub.s32 %s16, %s23
    %p240 = scmp.eq.s32.totalorder %s239, 0
    %s242 = sadd.s32 %s241, 1
    %s243 = scalar_select %p240, %s241, %s242
    %p246 = pneg %p240
    %p247 = scmp.eq.s32.totalorder %s16, 1
    %p248 = por %p246, %p247
    %p249 = scmp.ne.s32.totalorder %s241, %s244
    %p250 = scmp.eq.s32.totalorder %s16, 0
    %p251 = por %p249, %p250
    %p252 = scmp.ne.s32.totalorder %s241, %s244
    %p253 = scmp.eq.s32.totalorder %s21, 1
    %p254 = por %p252, %p253
    %p255 = scmp.ne.s32.totalorder %s244, %s245
    %p256 = scmp.eq.s32.totalorder %s21, 0
    %p257 = por %p255, %p256
    %p258 = scmp.ne.s32.totalorder %s244, %s245
    %p259 = scmp.eq.s32.totalorder %s22, 1
    %p260 = por %p258, %p259
    %p262 = scmp.ne.s32.totalorder %s245, %s261
    %p263 = scmp.eq.s32.totalorder %s22, 0
    %p264 = por %p262, %p263
    %p265 = scmp.le.s32.totalorder 1, %s16
    %p266 = scmp.lt.s32.totalorder %s16, 3
    %p267 = pnand %p265, %p266
    %p268 = pneg %p267
    // Predicated region
    $region9: #{skipconn_forward.1} parent=5 // pred_check
      _
    $region10: #{skipconn_forward.1} parent=5 // pred_check_branch
      %270 = sbr.rel (%p267) target = $region12
    $region11: #{skipconn_forward.1} parent=5 // pred_region
      %s271 = ssub.s32 %s16, 1
      // Predicated region
      $region13: #{skipconn_forward.1} parent=11 // pred_check
        %p272 = pneg %p63
      $region14: #{skipconn_forward.1} parent=11 // pred_check_branch
        %274 = sbr.rel (%p272) target = $region16
      $region15: #{skipconn_forward.1} parent=11 // pred_region
        _
      $region16: #{skipconn_forward.1} parent=11 // pred_fallthru
        _
      // Predicated region
      $region17: #{skipconn_forward.1} parent=11 // pred_check
        %p275 = pneg %p84
      $region18: #{skipconn_forward.1} parent=11 // pred_check_branch
        %277 = sbr.rel (%p275) target = $region20
      $region19: #{skipconn_forward.1} parent=11 // pred_region
        _
      $region20: #{skipconn_forward.1} parent=11 // pred_fallthru
        _
      // Predicated region
      $region21: #{skipconn_forward.1} parent=11 // pred_check
        %p278 = pneg %p105
      $region22: #{skipconn_forward.1} parent=11 // pred_check_branch
        %280 = sbr.rel (%p278) target = $region24
      $region23: #{skipconn_forward.1} parent=11 // pred_region
        _
      $region24: #{skipconn_forward.1} parent=11 // pred_fallthru
        _
      // Predicated region
      $region25: #{skipconn_forward.1} parent=11 // pred_check
        %p281 = pneg %p126
      $region26: #{skipconn_forward.1} parent=11 // pred_check_branch
        %283 = sbr.rel (%p281) target = $region28
      $region27: #{skipconn_forward.1} parent=11 // pred_region
        _
      $region28: #{skipconn_forward.1} parent=11 // pred_fallthru
        _
      // Predicated region
      $region29: #{skipconn_forward.1} parent=11 // pred_check
        %p284 = pneg %p147
      $region30: #{skipconn_forward.1} parent=11 // pred_check_branch
        %286 = sbr.rel (%p284) target = $region32
      $region31: #{skipconn_forward.1} parent=11 // pred_region
        _
      $region32: #{skipconn_forward.1} parent=11 // pred_fallthru
        _
      // Predicated region
      $region33: #{skipconn_forward.1} parent=11 // pred_check
        %p287 = pneg %p168
      $region34: #{skipconn_forward.1} parent=11 // pred_check_branch
        %289 = sbr.rel (%p287) target = $region36
      $region35: #{skipconn_forward.1} parent=11 // pred_region
        _
      $region36: #{skipconn_forward.1} parent=11 // pred_fallthru
        _
      // Predicated region
      $region37: #{skipconn_forward.1} parent=11 // pred_check
        %p290 = pneg %p189
      $region38: #{skipconn_forward.1} parent=11 // pred_check_branch
        %292 = sbr.rel (%p290) target = $region40
      $region39: #{skipconn_forward.1} parent=11 // pred_region
        _
      $region40: #{skipconn_forward.1} parent=11 // pred_fallthru
        _
      // Predicated region
      $region41: #{skipconn_forward.1} parent=11 // pred_check
        %p293 = pneg %p210
      $region42: #{skipconn_forward.1} parent=11 // pred_check_branch
        %295 = sbr.rel (%p293) target = $region44
      $region43: #{skipconn_forward.1} parent=11 // pred_region
        _
      $region44: #{skipconn_forward.1} parent=11 // pred_fallthru
        _
      // Predicated region
      $region45: #{skipconn_forward.1} parent=11 // pred_check
        %p296 = pneg %p231
      $region46: #{skipconn_forward.1} parent=11 // pred_check_branch
        %298 = sbr.rel (%p296) target = $region48
      $region47: #{skipconn_forward.1} parent=11 // pred_region
        _
      $region48: #{skipconn_forward.1} parent=11 // pred_fallthru
        _
    $region12: #{skipconn_forward.1} parent=5 // pred_fallthru
      _
    %p299 = scmp.lt.s32.totalorder %s16, 2
    // Predicated region
    $region49: #{skipconn_forward.1} parent=5 // pred_check
      %p300 = pneg %p299
    $region50: #{skipconn_forward.1} parent=5 // pred_check_branch
      %302 = sbr.rel (%p300) target = $region52
    $region51: #{skipconn_forward.1} parent=5 // pred_region
      // Predicated region
      $region53: #{skipconn_forward.1} parent=51 // pred_check
        %p303 = pneg %p36
      $region54: #{skipconn_forward.1} parent=51 // pred_check_branch
        %305 = sbr.rel (%p303) target = $region56
      $region55: #{skipconn_forward.1} parent=51 // pred_region
        %s306 = smul.u32 64, %s16
        %p307 = scmp.lt.s32.totalorder %s306, 127
        %s308 = scalar_select %p307, %s306, 127
        %s309 = smul.addr %s308, 8
        %s310 = scalar_lea.vmem %s0, %s309
        %s311 = smul.u32 64, %s16
      $region56: #{skipconn_forward.1} parent=51 // pred_fallthru
        _
    $region52: #{skipconn_forward.1} parent=5 // pred_fallthru
      _
    %p312 = scmp.le.s32.totalorder 1, %s16
    %p313 = scmp.lt.s32.totalorder %s16, 3
    %p314 = pnand %p312, %p313
    %p315 = pneg %p314
    // Predicated region
    $region57: #{skipconn_forward.1} parent=5 // pred_check
      _
    $region58: #{skipconn_forward.1} parent=5 // pred_check_branch
      %317 = sbr.rel (%p314) target = $region60
    $region59: #{skipconn_forward.1} parent=5 // pred_region
      %s318 = ssub.s32 %s16, 1
      %s319 = smul.u32 64, %s21
      %p320 = scmp.lt.s32.totalorder %s319, 127
      %s321 = scalar_select %p320, %s319, 127
      %s322 = smul.addr %s321, 8
      %s323 = scalar_lea.vmem %s0, %s322
      %p324 = pneg %p42
      %p325 = pneg %p39
      %p326 = pneg %p63
      %p327 = pneg %p60
      %p328 = pneg %p84
      %p329 = pneg %p81
      %p330 = pneg %p105
      %p331 = pneg %p102
      %p332 = pneg %p126
      %p333 = pneg %p123
      %p334 = pneg %p147
      %p335 = pneg %p144
      %p336 = pneg %p168
      %p337 = pneg %p165
      %p338 = pneg %p189
      %p339 = pneg %p186
      %p340 = pneg %p210
      %p341 = pneg %p207
      %p342 = pneg %p231
      %p343 = pneg %p228
      %p344 = pneg %p257
      %p345 = pneg %p254
      %s346 = smul.u32 64, %s21
      %p347 = scmp.lt.s32.totalorder %s346, 127
      %s348 = scalar_select %p347, %s346, 127
      %s349 = smul.addr %s348, 8
      %s350 = scalar_lea.vmem %s10, %s349
      %s351 = smul.u32 64, %s21
      %p352 = scmp.lt.s32.totalorder %s351, 127
      %s353 = scalar_select %p352, %s351, 127
      %s354 = smul.addr %s353, 8
      %s355 = scalar_lea.vmem %s0, %s354
      %s356 = smul.u32 64, %s21
      %s357 = smul.u32 64, %s21
      %p358 = scmp.lt.s32.totalorder %s357, 127
      %s359 = scalar_select %p358, %s357, 127
      %s360 = smul.addr %s359, 8
      %s361 = scalar_lea.vmem %s10, %s360
      %s362 = smul.u32 64, %s21
      %v363 = vld [vmem:[%s355] sm:$0xff]
      %v364 = vld [vmem:[%s355 + $0x8] sm:$0xff]
      %v365 = vld [vmem:[%s355 + $0x10] sm:$0xff]
      %v366 = vld [vmem:[%s355 + $0x18] sm:$0xff]
      %v367 = vld [vmem:[%s355 + $0x20] sm:$0xff]
      %v368 = vld [vmem:[%s355 + $0x28] sm:$0xff]
      %v369 = vld [vmem:[%s355 + $0x30] sm:$0xff]
      %v370 = vld [vmem:[%s355 + $0x38] sm:$0xff]
      %v371 = vld [vmem:[%s355 + $0x40] sm:$0xff]
      %v372 = vld [vmem:[%s355 + $0x48] sm:$0xff]
      %v373 = vld [vmem:[%s355 + $0x50] sm:$0xff]
      %v374 = vld [vmem:[%s355 + $0x58] sm:$0xff]
      %v375 = vld [vmem:[%s355 + $0x60] sm:$0xff]
      %v376 = vld [vmem:[%s355 + $0x68] sm:$0xff]
      %v377 = vld [vmem:[%s355 + $0x70] sm:$0xff]
      %v378 = vld [vmem:[%s355 + $0x78] sm:$0xff]
      %v379 = vld [vmem:[%s355 + $0x80] sm:$0xff]
      %v380 = vld [vmem:[%s355 + $0x88] sm:$0xff]
      %v381 = vld [vmem:[%s355 + $0x90] sm:$0xff]
      %v382 = vld [vmem:[%s355 + $0x98] sm:$0xff]
      %v383 = vld [vmem:[%s355 + $0xa0] sm:$0xff]
      %v384 = vld [vmem:[%s355 + $0xa8] sm:$0xff]
      %v385 = vld [vmem:[%s355 + $0xb0] sm:$0xff]
      %v386 = vld [vmem:[%s355 + $0xb8] sm:$0xff]
      %v387 = vld [vmem:[%s355 + $0xc0] sm:$0xff]
      %v388 = vld [vmem:[%s355 + $0xc8] sm:$0xff]
      %v389 = vld [vmem:[%s355 + $0xd0] sm:$0xff]
      %v390 = vld [vmem:[%s355 + $0xd8] sm:$0xff]
      %v391 = vld [vmem:[%s355 + $0xe0] sm:$0xff]
      %v392 = vld [vmem:[%s355 + $0xe8] sm:$0xff]
      %v393 = vld [vmem:[%s355 + $0xf0] sm:$0xff]
      %v394 = vld [vmem:[%s355 + $0xf8] sm:$0xff]
      %v395 = vld [vmem:[%s355 + $0x100] sm:$0xff]
      %v396 = vld [vmem:[%s355 + $0x108] sm:$0xff]
      %v397 = vld [vmem:[%s355 + $0x110] sm:$0xff]
      %v398 = vld [vmem:[%s355 + $0x118] sm:$0xff]
      %v399 = vld [vmem:[%s355 + $0x120] sm:$0xff]
      %v400 = vld [vmem:[%s355 + $0x128] sm:$0xff]
      %v401 = vld [vmem:[%s355 + $0x130] sm:$0xff]
      %v402 = vld [vmem:[%s355 + $0x138] sm:$0xff]
      %v403 = vld [vmem:[%s355 + $0x140] sm:$0xff]
      %v404 = vld [vmem:[%s355 + $0x148] sm:$0xff]
      %v405 = vld [vmem:[%s355 + $0x150] sm:$0xff]
      %v406 = vld [vmem:[%s355 + $0x158] sm:$0xff]
      %v407 = vld [vmem:[%s355 + $0x160] sm:$0xff]
      %v408 = vld [vmem:[%s355 + $0x168] sm:$0xff]
      %v409 = vld [vmem:[%s355 + $0x170] sm:$0xff]
      %v410 = vld [vmem:[%s355 + $0x178] sm:$0xff]
      %v411 = vld [vmem:[%s355 + $0x180] sm:$0xff]
      %v412 = vld [vmem:[%s355 + $0x188] sm:$0xff]
      %v413 = vld [vmem:[%s355 + $0x190] sm:$0xff]
      %v414 = vld [vmem:[%s355 + $0x198] sm:$0xff]
      %v415 = vld [vmem:[%s355 + $0x1a0] sm:$0xff]
      %v416 = vld [vmem:[%s355 + $0x1a8] sm:$0xff]
      %v417 = vld [vmem:[%s355 + $0x1b0] sm:$0xff]
      %v418 = vld [vmem:[%s355 + $0x1b8] sm:$0xff]
      %v419 = vld [vmem:[%s355 + $0x1c0] sm:$0xff]
      %v420 = vld [vmem:[%s355 + $0x1c8] sm:$0xff]
      %v421 = vld [vmem:[%s355 + $0x1d0] sm:$0xff]
      %v422 = vld [vmem:[%s355 + $0x1d8] sm:$0xff]
      %v423 = vld [vmem:[%s355 + $0x1e0] sm:$0xff]
      %v424 = vld [vmem:[%s355 + $0x1e8] sm:$0xff]
      %v425 = vld [vmem:[%s355 + $0x1f0] sm:$0xff]
      %v426 = vld [vmem:[%s355 + $0x1f8] sm:$0xff]
      %v427 = vld [vmem:[%s1] sm:$0x7]
      %429 = vset.pattern.permute.xlu0 0
      %430 = vperm.xlu0 %429, %v363
      %v431 = vpop.permute.xlu0 %430
      %434 = vset.pattern.permute.xlu0 0
      %435 = vperm.xlu0 %434, %v364
      %v436 = vpop.permute.xlu0 %435
      %439 = vset.pattern.permute.xlu0 0
      %440 = vperm.xlu0 %439, %v365
      %v441 = vpop.permute.xlu0 %440
      %444 = vset.pattern.permute.xlu0 0
      %445 = vperm.xlu0 %444, %v366
      %v446 = vpop.permute.xlu0 %445
      %449 = vset.pattern.permute.xlu0 0
      %450 = vperm.xlu0 %449, %v367
      %v451 = vpop.permute.xlu0 %450
      %454 = vset.pattern.permute.xlu0 0
      %455 = vperm.xlu0 %454, %v368
      %v456 = vpop.permute.xlu0 %455
      %459 = vset.pattern.permute.xlu0 0
      %460 = vperm.xlu0 %459, %v369
      %v461 = vpop.permute.xlu0 %460
      %464 = vset.pattern.permute.xlu0 0
      %465 = vperm.xlu0 %464, %v370
      %v466 = vpop.permute.xlu0 %465
      %469 = vset.pattern.permute.xlu0 0
      %470 = vperm.xlu0 %469, %v371
      %v471 = vpop.permute.xlu0 %470
      %474 = vset.pattern.permute.xlu0 0
      %475 = vperm.xlu0 %474, %v372
      %v476 = vpop.permute.xlu0 %475
      %479 = vset.pattern.permute.xlu0 0
      %480 = vperm.xlu0 %479, %v373
      %v481 = vpop.permute.xlu0 %480
      %484 = vset.pattern.permute.xlu0 0
      %485 = vperm.xlu0 %484, %v374
      %v486 = vpop.permute.xlu0 %485
      %489 = vset.pattern.permute.xlu0 0
      %490 = vperm.xlu0 %489, %v375
      %v491 = vpop.permute.xlu0 %490
      %494 = vset.pattern.permute.xlu0 0
      %495 = vperm.xlu0 %494, %v376
      %v496 = vpop.permute.xlu0 %495
      %499 = vset.pattern.permute.xlu0 0
      %500 = vperm.xlu0 %499, %v377
      %v501 = vpop.permute.xlu0 %500
      %504 = vset.pattern.permute.xlu0 0
      %505 = vperm.xlu0 %504, %v378
      %v506 = vpop.permute.xlu0 %505
      %509 = vset.pattern.permute.xlu0 0
      %510 = vperm.xlu0 %509, %v379
      %v511 = vpop.permute.xlu0 %510
      %514 = vset.pattern.permute.xlu0 0
      %515 = vperm.xlu0 %514, %v380
      %v516 = vpop.permute.xlu0 %515
      %519 = vset.pattern.permute.xlu0 0
      %520 = vperm.xlu0 %519, %v381
      %v521 = vpop.permute.xlu0 %520
      %524 = vset.pattern.permute.xlu0 0
      %525 = vperm.xlu0 %524, %v382
      %v526 = vpop.permute.xlu0 %525
      %529 = vset.pattern.permute.xlu0 0
      %530 = vperm.xlu0 %529, %v383
      %v531 = vpop.permute.xlu0 %530
      %534 = vset.pattern.permute.xlu0 0
      %535 = vperm.xlu0 %534, %v384
      %v536 = vpop.permute.xlu0 %535
      %539 = vset.pattern.permute.xlu0 0
      %540 = vperm.xlu0 %539, %v385
      %v541 = vpop.permute.xlu0 %540
      %544 = vset.pattern.permute.xlu0 0
      %545 = vperm.xlu0 %544, %v386
      %v546 = vpop.permute.xlu0 %545
      %549 = vset.pattern.permute.xlu0 0
      %550 = vperm.xlu0 %549, %v387
      %v551 = vpop.permute.xlu0 %550
      %554 = vset.pattern.permute.xlu0 0
      %555 = vperm.xlu0 %554, %v388
      %v556 = vpop.permute.xlu0 %555
      %559 = vset.pattern.permute.xlu0 0
      %560 = vperm.xlu0 %559, %v389
      %v561 = vpop.permute.xlu0 %560
      %564 = vset.pattern.permute.xlu0 0
      %565 = vperm.xlu0 %564, %v390
      %v566 = vpop.permute.xlu0 %565
      %569 = vset.pattern.permute.xlu0 0
      %570 = vperm.xlu0 %569, %v391
      %v571 = vpop.permute.xlu0 %570
      %574 = vset.pattern.permute.xlu0 0
      %575 = vperm.xlu0 %574, %v392
      %v576 = vpop.permute.xlu0 %575
      %579 = vset.pattern.permute.xlu0 0
      %580 = vperm.xlu0 %579, %v393
      %v581 = vpop.permute.xlu0 %580
      %584 = vset.pattern.permute.xlu0 0
      %585 = vperm.xlu0 %584, %v394
      %v586 = vpop.permute.xlu0 %585
      %589 = vset.pattern.permute.xlu0 0
      %590 = vperm.xlu0 %589, %v395
      %v591 = vpop.permute.xlu0 %590
      %594 = vset.pattern.permute.xlu0 0
      %595 = vperm.xlu0 %594, %v396
      %v596 = vpop.permute.xlu0 %595
      %599 = vset.pattern.permute.xlu0 0
      %600 = vperm.xlu0 %599, %v397
      %v601 = vpop.permute.xlu0 %600
      %604 = vset.pattern.permute.xlu0 0
      %605 = vperm.xlu0 %604, %v398
      %v606 = vpop.permute.xlu0 %605
      %609 = vset.pattern.permute.xlu0 0
      %610 = vperm.xlu0 %609, %v399
      %v611 = vpop.permute.xlu0 %610
      %614 = vset.pattern.permute.xlu0 0
      %615 = vperm.xlu0 %614, %v400
      %v616 = vpop.permute.xlu0 %615
      %619 = vset.pattern.permute.xlu0 0
      %620 = vperm.xlu0 %619, %v401
      %v621 = vpop.permute.xlu0 %620
      %624 = vset.pattern.permute.xlu0 0
      %625 = vperm.xlu0 %624, %v402
      %v626 = vpop.permute.xlu0 %625
      %629 = vset.pattern.permute.xlu0 0
      %630 = vperm.xlu0 %629, %v403
      %v631 = vpop.permute.xlu0 %630
      %634 = vset.pattern.permute.xlu0 0
      %635 = vperm.xlu0 %634, %v404
      %v636 = vpop.permute.xlu0 %635
      %639 = vset.pattern.permute.xlu0 0
      %640 = vperm.xlu0 %639, %v405
      %v641 = vpop.permute.xlu0 %640
      %644 = vset.pattern.permute.xlu0 0
      %645 = vperm.xlu0 %644, %v406
      %v646 = vpop.permute.xlu0 %645
      %649 = vset.pattern.permute.xlu0 0
      %650 = vperm.xlu0 %649, %v407
      %v651 = vpop.permute.xlu0 %650
      %654 = vset.pattern.permute.xlu0 0
      %655 = vperm.xlu0 %654, %v408
      %v656 = vpop.permute.xlu0 %655
      %659 = vset.pattern.permute.xlu0 0
      %660 = vperm.xlu0 %659, %v409
      %v661 = vpop.permute.xlu0 %660
      %664 = vset.pattern.permute.xlu0 0
      %665 = vperm.xlu0 %664, %v410
      %v666 = vpop.permute.xlu0 %665
      %669 = vset.pattern.permute.xlu0 0
      %670 = vperm.xlu0 %669, %v411
      %v671 = vpop.permute.xlu0 %670
      %674 = vset.pattern.permute.xlu0 0
      %675 = vperm.xlu0 %674, %v412
      %v676 = vpop.permute.xlu0 %675
      %679 = vset.pattern.permute.xlu0 0
      %680 = vperm.xlu0 %679, %v413
      %v681 = vpop.permute.xlu0 %680
      %684 = vset.pattern.permute.xlu0 0
      %685 = vperm.xlu0 %684, %v414
      %v686 = vpop.permute.xlu0 %685
      %689 = vset.pattern.permute.xlu0 0
      %690 = vperm.xlu0 %689, %v415
      %v691 = vpop.permute.xlu0 %690
      %694 = vset.pattern.permute.xlu0 0
      %695 = vperm.xlu0 %694, %v416
      %v696 = vpop.permute.xlu0 %695
      %699 = vset.pattern.permute.xlu0 0
      %700 = vperm.xlu0 %699, %v417
      %v701 = vpop.permute.xlu0 %700
      %704 = vset.pattern.permute.xlu0 0
      %705 = vperm.xlu0 %704, %v418
      %v706 = vpop.permute.xlu0 %705
      %709 = vset.pattern.permute.xlu0 0
      %710 = vperm.xlu0 %709, %v419
      %v711 = vpop.permute.xlu0 %710
      %714 = vset.pattern.permute.xlu0 0
      %715 = vperm.xlu0 %714, %v420
      %v716 = vpop.permute.xlu0 %715
      %719 = vset.pattern.permute.xlu0 0
      %720 = vperm.xlu0 %719, %v421
      %v721 = vpop.permute.xlu0 %720
      %724 = vset.pattern.permute.xlu0 0
      %725 = vperm.xlu0 %724, %v422
      %v726 = vpop.permute.xlu0 %725
      %729 = vset.pattern.permute.xlu0 0
      %730 = vperm.xlu0 %729, %v423
      %v731 = vpop.permute.xlu0 %730
      %734 = vset.pattern.permute.xlu0 0
      %735 = vperm.xlu0 %734, %v424
      %v736 = vpop.permute.xlu0 %735
      %739 = vset.pattern.permute.xlu0 0
      %740 = vperm.xlu0 %739, %v425
      %v741 = vpop.permute.xlu0 %740
      %744 = vset.pattern.permute.xlu0 0
      %745 = vperm.xlu0 %744, %v426
      %v746 = vpop.permute.xlu0 %745
      %v748 = vlaneseq
      %v749 = vshrl.u32 %v748, 7
      %v750 = vsub.s32 0, %v749
      %v751 = vrot.slane %v427, %v750
      %v752 = vmul.f32 %v431, %v751
      %v753 = vmul.f32 %v436, %v751
      %v754 = vmul.f32 %v441, %v751
      %v755 = vmul.f32 %v446, %v751
      %v756 = vmul.f32 %v451, %v751
      %v757 = vmul.f32 %v456, %v751
      %v758 = vmul.f32 %v461, %v751
      %v759 = vmul.f32 %v466, %v751
      %v760 = vmul.f32 %v471, %v751
      %v761 = vmul.f32 %v476, %v751
      %v762 = vmul.f32 %v481, %v751
      %v763 = vmul.f32 %v486, %v751
      %v764 = vmul.f32 %v491, %v751
      %v765 = vmul.f32 %v496, %v751
      %v766 = vmul.f32 %v501, %v751
      %v767 = vmul.f32 %v506, %v751
      %v768 = vmul.f32 %v511, %v751
      %v769 = vmul.f32 %v516, %v751
      %v770 = vmul.f32 %v521, %v751
      %v771 = vmul.f32 %v526, %v751
      %v772 = vmul.f32 %v531, %v751
      %v773 = vmul.f32 %v536, %v751
      %v774 = vmul.f32 %v541, %v751
      %v775 = vmul.f32 %v546, %v751
      %v776 = vmul.f32 %v551, %v751
      %v777 = vmul.f32 %v556, %v751
      %v778 = vmul.f32 %v561, %v751
      %v779 = vmul.f32 %v566, %v751
      %v780 = vmul.f32 %v571, %v751
      %v781 = vmul.f32 %v576, %v751
      %v782 = vmul.f32 %v581, %v751
      %v783 = vmul.f32 %v586, %v751
      %v784 = vmul.f32 %v591, %v751
      %v785 = vmul.f32 %v596, %v751
      %v786 = vmul.f32 %v601, %v751
      %v787 = vmul.f32 %v606, %v751
      %v788 = vmul.f32 %v611, %v751
      %v789 = vmul.f32 %v616, %v751
      %v790 = vmul.f32 %v621, %v751
      %v791 = vmul.f32 %v626, %v751
      %v792 = vmul.f32 %v631, %v751
      %v793 = vmul.f32 %v636, %v751
      %v794 = vmul.f32 %v641, %v751
      %v795 = vmul.f32 %v646, %v751
      %v796 = vmul.f32 %v651, %v751
      %v797 = vmul.f32 %v656, %v751
      %v798 = vmul.f32 %v661, %v751
      %v799 = vmul.f32 %v666, %v751
      %v800 = vmul.f32 %v671, %v751
      %v801 = vmul.f32 %v676, %v751
      %v802 = vmul.f32 %v681, %v751
      %v803 = vmul.f32 %v686, %v751
      %v804 = vmul.f32 %v691, %v751
      %v805 = vmul.f32 %v696, %v751
      %v806 = vmul.f32 %v701, %v751
      %v807 = vmul.f32 %v706, %v751
      %v808 = vmul.f32 %v711, %v751
      %v809 = vmul.f32 %v716, %v751
      %v810 = vmul.f32 %v721, %v751
      %v811 = vmul.f32 %v726, %v751
      %v812 = vmul.f32 %v731, %v751
      %v813 = vmul.f32 %v736, %v751
      %v814 = vmul.f32 %v741, %v751
      %v815 = vmul.f32 %v746, %v751
      %v816 = vlaneseq
      %v817 = vshrl.u32 %v816, 7
      %v818 = vsub.s32 2, %v817
      %v819 = vrot.slane %v427, %v818
      %v820 = vadd.f32 %v819, %v752
      %v821 = vadd.f32 %v819, %v753
      %v822 = vadd.f32 %v819, %v754
      %v823 = vadd.f32 %v819, %v755
      %v824 = vadd.f32 %v819, %v756
      %v825 = vadd.f32 %v819, %v757
      %v826 = vadd.f32 %v819, %v758
      %v827 = vadd.f32 %v819, %v759
      %v828 = vadd.f32 %v819, %v760
      %v829 = vadd.f32 %v819, %v761
      %v830 = vadd.f32 %v819, %v762
      %v831 = vadd.f32 %v819, %v763
      %v832 = vadd.f32 %v819, %v764
      %v833 = vadd.f32 %v819, %v765
      %v834 = vadd.f32 %v819, %v766
      %v835 = vadd.f32 %v819, %v767
      %v836 = vadd.f32 %v819, %v768
      %v837 = vadd.f32 %v819, %v769
      %v838 = vadd.f32 %v819, %v770
      %v839 = vadd.f32 %v819, %v771
      %v840 = vadd.f32 %v819, %v772
      %v841 = vadd.f32 %v819, %v773
      %v842 = vadd.f32 %v819, %v774
      %v843 = vadd.f32 %v819, %v775
      %v844 = vadd.f32 %v819, %v776
      %v845 = vadd.f32 %v819, %v777
      %v846 = vadd.f32 %v819, %v778
      %v847 = vadd.f32 %v819, %v779
      %v848 = vadd.f32 %v819, %v780
      %v849 = vadd.f32 %v819, %v781
      %v850 = vadd.f32 %v819, %v782
      %v851 = vadd.f32 %v819, %v783
      %v852 = vadd.f32 %v819, %v784
      %v853 = vadd.f32 %v819, %v785
      %v854 = vadd.f32 %v819, %v786
      %v855 = vadd.f32 %v819, %v787
      %v856 = vadd.f32 %v819, %v788
      %v857 = vadd.f32 %v819, %v789
      %v858 = vadd.f32 %v819, %v790
      %v859 = vadd.f32 %v819, %v791
      %v860 = vadd.f32 %v819, %v792
      %v861 = vadd.f32 %v819, %v793
      %v862 = vadd.f32 %v819, %v794
      %v863 = vadd.f32 %v819, %v795
      %v864 = vadd.f32 %v819, %v796
      %v865 = vadd.f32 %v819, %v797
      %v866 = vadd.f32 %v819, %v798
      %v867 = vadd.f32 %v819, %v799
      %v868 = vadd.f32 %v819, %v800
      %v869 = vadd.f32 %v819, %v801
      %v870 = vadd.f32 %v819, %v802
      %v871 = vadd.f32 %v819, %v803
      %v872 = vadd.f32 %v819, %v804
      %v873 = vadd.f32 %v819, %v805
      %v874 = vadd.f32 %v819, %v806
      %v875 = vadd.f32 %v819, %v807
      %v876 = vadd.f32 %v819, %v808
      %v877 = vadd.f32 %v819, %v809
      %v878 = vadd.f32 %v819, %v810
      %v879 = vadd.f32 %v819, %v811
      %v880 = vadd.f32 %v819, %v812
      %v881 = vadd.f32 %v819, %v813
      %v882 = vadd.f32 %v819, %v814
      %v883 = vadd.f32 %v819, %v815
      %884 = vset.pattern.permute.xlu0 1
      %885 = vperm.xlu0 %884, %v363
      %v886 = vpop.permute.xlu0 %885
      %888 = vset.pattern.permute.xlu0 1
      %889 = vperm.xlu0 %888, %v364
      %v890 = vpop.permute.xlu0 %889
      %892 = vset.pattern.permute.xlu0 1
      %893 = vperm.xlu0 %892, %v365
      %v894 = vpop.permute.xlu0 %893
      %896 = vset.pattern.permute.xlu0 1
      %897 = vperm.xlu0 %896, %v366
      %v898 = vpop.permute.xlu0 %897
      %900 = vset.pattern.permute.xlu0 1
      %901 = vperm.xlu0 %900, %v367
      %v902 = vpop.permute.xlu0 %901
      %904 = vset.pattern.permute.xlu0 1
      %905 = vperm.xlu0 %904, %v368
      %v906 = vpop.permute.xlu0 %905
      %908 = vset.pattern.permute.xlu0 1
      %909 = vperm.xlu0 %908, %v369
      %v910 = vpop.permute.xlu0 %909
      %912 = vset.pattern.permute.xlu0 1
      %913 = vperm.xlu0 %912, %v370
      %v914 = vpop.permute.xlu0 %913
      %916 = vset.pattern.permute.xlu0 1
      %917 = vperm.xlu0 %916, %v371
      %v918 = vpop.permute.xlu0 %917
      %920 = vset.pattern.permute.xlu0 1
      %921 = vperm.xlu0 %920, %v372
      %v922 = vpop.permute.xlu0 %921
      %924 = vset.pattern.permute.xlu0 1
      %925 = vperm.xlu0 %924, %v373
      %v926 = vpop.permute.xlu0 %925
      %928 = vset.pattern.permute.xlu0 1
      %929 = vperm.xlu0 %928, %v374
      %v930 = vpop.permute.xlu0 %929
      %932 = vset.pattern.permute.xlu0 1
      %933 = vperm.xlu0 %932, %v375
      %v934 = vpop.permute.xlu0 %933
      %936 = vset.pattern.permute.xlu0 1
      %937 = vperm.xlu0 %936, %v376
      %v938 = vpop.permute.xlu0 %937
      %940 = vset.pattern.permute.xlu0 1
      %941 = vperm.xlu0 %940, %v377
      %v942 = vpop.permute.xlu0 %941
      %944 = vset.pattern.permute.xlu0 1
      %945 = vperm.xlu0 %944, %v378
      %v946 = vpop.permute.xlu0 %945
      %948 = vset.pattern.permute.xlu0 1
      %949 = vperm.xlu0 %948, %v379
      %v950 = vpop.permute.xlu0 %949
      %952 = vset.pattern.permute.xlu0 1
      %953 = vperm.xlu0 %952, %v380
      %v954 = vpop.permute.xlu0 %953
      %956 = vset.pattern.permute.xlu0 1
      %957 = vperm.xlu0 %956, %v381
      %v958 = vpop.permute.xlu0 %957
      %960 = vset.pattern.permute.xlu0 1
      %961 = vperm.xlu0 %960, %v382
      %v962 = vpop.permute.xlu0 %961
      %964 = vset.pattern.permute.xlu0 1
      %965 = vperm.xlu0 %964, %v383
      %v966 = vpop.permute.xlu0 %965
      %968 = vset.pattern.permute.xlu0 1
      %969 = vperm.xlu0 %968, %v384
      %v970 = vpop.permute.xlu0 %969
      %972 = vset.pattern.permute.xlu0 1
      %973 = vperm.xlu0 %972, %v385
      %v974 = vpop.permute.xlu0 %973
      %976 = vset.pattern.permute.xlu0 1
      %977 = vperm.xlu0 %976, %v386
      %v978 = vpop.permute.xlu0 %977
      %980 = vset.pattern.permute.xlu0 1
      %981 = vperm.xlu0 %980, %v387
      %v982 = vpop.permute.xlu0 %981
      %984 = vset.pattern.permute.xlu0 1
      %985 = vperm.xlu0 %984, %v388
      %v986 = vpop.permute.xlu0 %985
      %988 = vset.pattern.permute.xlu0 1
      %989 = vperm.xlu0 %988, %v389
      %v990 = vpop.permute.xlu0 %989
      %992 = vset.pattern.permute.xlu0 1
      %993 = vperm.xlu0 %992, %v390
      %v994 = vpop.permute.xlu0 %993
      %996 = vset.pattern.permute.xlu0 1
      %997 = vperm.xlu0 %996, %v391
      %v998 = vpop.permute.xlu0 %997
      %1000 = vset.pattern.permute.xlu0 1
      %1001 = vperm.xlu0 %1000, %v392
      %v1002 = vpop.permute.xlu0 %1001
      %1004 = vset.pattern.permute.xlu0 1
      %1005 = vperm.xlu0 %1004, %v393
      %v1006 = vpop.permute.xlu0 %1005
      %1008 = vset.pattern.permute.xlu0 1
      %1009 = vperm.xlu0 %1008, %v394
      %v1010 = vpop.permute.xlu0 %1009
      %1012 = vset.pattern.permute.xlu0 1
      %1013 = vperm.xlu0 %1012, %v395
      %v1014 = vpop.permute.xlu0 %1013
      %1016 = vset.pattern.permute.xlu0 1
      %1017 = vperm.xlu0 %1016, %v396
      %v1018 = vpop.permute.xlu0 %1017
      %1020 = vset.pattern.permute.xlu0 1
      %1021 = vperm.xlu0 %1020, %v397
      %v1022 = vpop.permute.xlu0 %1021
      %1024 = vset.pattern.permute.xlu0 1
      %1025 = vperm.xlu0 %1024, %v398
      %v1026 = vpop.permute.xlu0 %1025
      %1028 = vset.pattern.permute.xlu0 1
      %1029 = vperm.xlu0 %1028, %v399
      %v1030 = vpop.permute.xlu0 %1029
      %1032 = vset.pattern.permute.xlu0 1
      %1033 = vperm.xlu0 %1032, %v400
      %v1034 = vpop.permute.xlu0 %1033
      %1036 = vset.pattern.permute.xlu0 1
      %1037 = vperm.xlu0 %1036, %v401
      %v1038 = vpop.permute.xlu0 %1037
      %1040 = vset.pattern.permute.xlu0 1
      %1041 = vperm.xlu0 %1040, %v402
      %v1042 = vpop.permute.xlu0 %1041
      %1044 = vset.pattern.permute.xlu0 1
      %1045 = vperm.xlu0 %1044, %v403
      %v1046 = vpop.permute.xlu0 %1045
      %1048 = vset.pattern.permute.xlu0 1
      %1049 = vperm.xlu0 %1048, %v404
      %v1050 = vpop.permute.xlu0 %1049
      %1052 = vset.pattern.permute.xlu0 1
      %1053 = vperm.xlu0 %1052, %v405
      %v1054 = vpop.permute.xlu0 %1053
      %1056 = vset.pattern.permute.xlu0 1
      %1057 = vperm.xlu0 %1056, %v406
      %v1058 = vpop.permute.xlu0 %1057
      %1060 = vset.pattern.permute.xlu0 1
      %1061 = vperm.xlu0 %1060, %v407
      %v1062 = vpop.permute.xlu0 %1061
      %1064 = vset.pattern.permute.xlu0 1
      %1065 = vperm.xlu0 %1064, %v408
      %v1066 = vpop.permute.xlu0 %1065
      %1068 = vset.pattern.permute.xlu0 1
      %1069 = vperm.xlu0 %1068, %v409
      %v1070 = vpop.permute.xlu0 %1069
      %1072 = vset.pattern.permute.xlu0 1
      %1073 = vperm.xlu0 %1072, %v410
      %v1074 = vpop.permute.xlu0 %1073
      %1076 = vset.pattern.permute.xlu0 1
      %1077 = vperm.xlu0 %1076, %v411
      %v1078 = vpop.permute.xlu0 %1077
      %1080 = vset.pattern.permute.xlu0 1
      %1081 = vperm.xlu0 %1080, %v412
      %v1082 = vpop.permute.xlu0 %1081
      %1084 = vset.pattern.permute.xlu0 1
      %1085 = vperm.xlu0 %1084, %v413
      %v1086 = vpop.permute.xlu0 %1085
      %1088 = vset.pattern.permute.xlu0 1
      %1089 = vperm.xlu0 %1088, %v414
      %v1090 = vpop.permute.xlu0 %1089
      %1092 = vset.pattern.permute.xlu0 1
      %1093 = vperm.xlu0 %1092, %v415
      %v1094 = vpop.permute.xlu0 %1093
      %1096 = vset.pattern.permute.xlu0 1
      %1097 = vperm.xlu0 %1096, %v416
      %v1098 = vpop.permute.xlu0 %1097
      %1100 = vset.pattern.permute.xlu0 1
      %1101 = vperm.xlu0 %1100, %v417
      %v1102 = vpop.permute.xlu0 %1101
      %1104 = vset.pattern.permute.xlu0 1
      %1105 = vperm.xlu0 %1104, %v418
      %v1106 = vpop.permute.xlu0 %1105
      %1108 = vset.pattern.permute.xlu0 1
      %1109 = vperm.xlu0 %1108, %v419
      %v1110 = vpop.permute.xlu0 %1109
      %1112 = vset.pattern.permute.xlu0 1
      %1113 = vperm.xlu0 %1112, %v420
      %v1114 = vpop.permute.xlu0 %1113
      %1116 = vset.pattern.permute.xlu0 1
      %1117 = vperm.xlu0 %1116, %v421
      %v1118 = vpop.permute.xlu0 %1117
      %1120 = vset.pattern.permute.xlu0 1
      %1121 = vperm.xlu0 %1120, %v422
      %v1122 = vpop.permute.xlu0 %1121
      %1124 = vset.pattern.permute.xlu0 1
      %1125 = vperm.xlu0 %1124, %v423
      %v1126 = vpop.permute.xlu0 %1125
      %1128 = vset.pattern.permute.xlu0 1
      %1129 = vperm.xlu0 %1128, %v424
      %v1130 = vpop.permute.xlu0 %1129
      %1132 = vset.pattern.permute.xlu0 1
      %1133 = vperm.xlu0 %1132, %v425
      %v1134 = vpop.permute.xlu0 %1133
      %1136 = vset.pattern.permute.xlu0 1
      %1137 = vperm.xlu0 %1136, %v426
      %v1138 = vpop.permute.xlu0 %1137
      %v1140 = vlaneseq
      %v1141 = vshrl.u32 %v1140, 7
      %v1142 = vsub.s32 1, %v1141
      %v1143 = vrot.slane %v427, %v1142
      %v1144 = vmul.f32 %v886, %v1143
      %v1145 = vmul.f32 %v890, %v1143
      %v1146 = vmul.f32 %v894, %v1143
      %v1147 = vmul.f32 %v898, %v1143
      %v1148 = vmul.f32 %v902, %v1143
      %v1149 = vmul.f32 %v906, %v1143
      %v1150 = vmul.f32 %v910, %v1143
      %v1151 = vmul.f32 %v914, %v1143
      %v1152 = vmul.f32 %v918, %v1143
      %v1153 = vmul.f32 %v922, %v1143
      %v1154 = vmul.f32 %v926, %v1143
      %v1155 = vmul.f32 %v930, %v1143
      %v1156 = vmul.f32 %v934, %v1143
      %v1157 = vmul.f32 %v938, %v1143
      %v1158 = vmul.f32 %v942, %v1143
      %v1159 = vmul.f32 %v946, %v1143
      %v1160 = vmul.f32 %v950, %v1143
      %v1161 = vmul.f32 %v954, %v1143
      %v1162 = vmul.f32 %v958, %v1143
      %v1163 = vmul.f32 %v962, %v1143
      %v1164 = vmul.f32 %v966, %v1143
      %v1165 = vmul.f32 %v970, %v1143
      %v1166 = vmul.f32 %v974, %v1143
      %v1167 = vmul.f32 %v978, %v1143
      %v1168 = vmul.f32 %v982, %v1143
      %v1169 = vmul.f32 %v986, %v1143
      %v1170 = vmul.f32 %v990, %v1143
      %v1171 = vmul.f32 %v994, %v1143
      %v1172 = vmul.f32 %v998, %v1143
      %v1173 = vmul.f32 %v1002, %v1143
      %v1174 = vmul.f32 %v1006, %v1143
      %v1175 = vmul.f32 %v1010, %v1143
      %v1176 = vmul.f32 %v1014, %v1143
      %v1177 = vmul.f32 %v1018, %v1143
      %v1178 = vmul.f32 %v1022, %v1143
      %v1179 = vmul.f32 %v1026, %v1143
      %v1180 = vmul.f32 %v1030, %v1143
      %v1181 = vmul.f32 %v1034, %v1143
      %v1182 = vmul.f32 %v1038, %v1143
      %v1183 = vmul.f32 %v1042, %v1143
      %v1184 = vmul.f32 %v1046, %v1143
      %v1185 = vmul.f32 %v1050, %v1143
      %v1186 = vmul.f32 %v1054, %v1143
      %v1187 = vmul.f32 %v1058, %v1143
      %v1188 = vmul.f32 %v1062, %v1143
      %v1189 = vmul.f32 %v1066, %v1143
      %v1190 = vmul.f32 %v1070, %v1143
      %v1191 = vmul.f32 %v1074, %v1143
      %v1192 = vmul.f32 %v1078, %v1143
      %v1193 = vmul.f32 %v1082, %v1143
      %v1194 = vmul.f32 %v1086, %v1143
      %v1195 = vmul.f32 %v1090, %v1143
      %v1196 = vmul.f32 %v1094, %v1143
      %v1197 = vmul.f32 %v1098, %v1143
      %v1198 = vmul.f32 %v1102, %v1143
      %v1199 = vmul.f32 %v1106, %v1143
      %v1200 = vmul.f32 %v1110, %v1143
      %v1201 = vmul.f32 %v1114, %v1143
      %v1202 = vmul.f32 %v1118, %v1143
      %v1203 = vmul.f32 %v1122, %v1143
      %v1204 = vmul.f32 %v1126, %v1143
      %v1205 = vmul.f32 %v1130, %v1143
      %v1206 = vmul.f32 %v1134, %v1143
      %v1207 = vmul.f32 %v1138, %v1143
      %v1208 = vadd.f32 %v820, %v1144
      %v1209 = vadd.f32 %v821, %v1145
      %v1210 = vadd.f32 %v822, %v1146
      %v1211 = vadd.f32 %v823, %v1147
      %v1212 = vadd.f32 %v824, %v1148
      %v1213 = vadd.f32 %v825, %v1149
      %v1214 = vadd.f32 %v826, %v1150
      %v1215 = vadd.f32 %v827, %v1151
      %v1216 = vadd.f32 %v828, %v1152
      %v1217 = vadd.f32 %v829, %v1153
      %v1218 = vadd.f32 %v830, %v1154
      %v1219 = vadd.f32 %v831, %v1155
      %v1220 = vadd.f32 %v832, %v1156
      %v1221 = vadd.f32 %v833, %v1157
      %v1222 = vadd.f32 %v834, %v1158
      %v1223 = vadd.f32 %v835, %v1159
      %v1224 = vadd.f32 %v836, %v1160
      %v1225 = vadd.f32 %v837, %v1161
      %v1226 = vadd.f32 %v838, %v1162
      %v1227 = vadd.f32 %v839, %v1163
      %v1228 = vadd.f32 %v840, %v1164
      %v1229 = vadd.f32 %v841, %v1165
      %v1230 = vadd.f32 %v842, %v1166
      %v1231 = vadd.f32 %v843, %v1167
      %v1232 = vadd.f32 %v844, %v1168
      %v1233 = vadd.f32 %v845, %v1169
      %v1234 = vadd.f32 %v846, %v1170
      %v1235 = vadd.f32 %v847, %v1171
      %v1236 = vadd.f32 %v848, %v1172
      %v1237 = vadd.f32 %v849, %v1173
      %v1238 = vadd.f32 %v850, %v1174
      %v1239 = vadd.f32 %v851, %v1175
      %v1240 = vadd.f32 %v852, %v1176
      %v1241 = vadd.f32 %v853, %v1177
      %v1242 = vadd.f32 %v854, %v1178
      %v1243 = vadd.f32 %v855, %v1179
      %v1244 = vadd.f32 %v856, %v1180
      %v1245 = vadd.f32 %v857, %v1181
      %v1246 = vadd.f32 %v858, %v1182
      %v1247 = vadd.f32 %v859, %v1183
      %v1248 = vadd.f32 %v860, %v1184
      %v1249 = vadd.f32 %v861, %v1185
      %v1250 = vadd.f32 %v862, %v1186
      %v1251 = vadd.f32 %v863, %v1187
      %v1252 = vadd.f32 %v864, %v1188
      %v1253 = vadd.f32 %v865, %v1189
      %v1254 = vadd.f32 %v866, %v1190
      %v1255 = vadd.f32 %v867, %v1191
      %v1256 = vadd.f32 %v868, %v1192
      %v1257 = vadd.f32 %v869, %v1193
      %v1258 = vadd.f32 %v870, %v1194
      %v1259 = vadd.f32 %v871, %v1195
      %v1260 = vadd.f32 %v872, %v1196
      %v1261 = vadd.f32 %v873, %v1197
      %v1262 = vadd.f32 %v874, %v1198
      %v1263 = vadd.f32 %v875, %v1199
      %v1264 = vadd.f32 %v876, %v1200
      %v1265 = vadd.f32 %v877, %v1201
      %v1266 = vadd.f32 %v878, %v1202
      %v1267 = vadd.f32 %v879, %v1203
      %v1268 = vadd.f32 %v880, %v1204
      %v1269 = vadd.f32 %v881, %v1205
      %v1270 = vadd.f32 %v882, %v1206
      %v1271 = vadd.f32 %v883, %v1207
      %v1272 = vld [vmem:[%s2] sm:$0x7]
      %v1273 = vlaneseq
      %v1274 = vshrl.u32 %v1273, 7
      %v1275 = vsub.s32 0, %v1274
      %v1276 = vrot.slane %v1272, %v1275
      %v1277 = vmul.f32 %v431, %v1276
      %v1278 = vmul.f32 %v436, %v1276
      %v1279 = vmul.f32 %v441, %v1276
      %v1280 = vmul.f32 %v446, %v1276
      %v1281 = vmul.f32 %v451, %v1276
      %v1282 = vmul.f32 %v456, %v1276
      %v1283 = vmul.f32 %v461, %v1276
      %v1284 = vmul.f32 %v466, %v1276
      %v1285 = vmul.f32 %v471, %v1276
      %v1286 = vmul.f32 %v476, %v1276
      %v1287 = vmul.f32 %v481, %v1276
      %v1288 = vmul.f32 %v486, %v1276
      %v1289 = vmul.f32 %v491, %v1276
      %v1290 = vmul.f32 %v496, %v1276
      %v1291 = vmul.f32 %v501, %v1276
      %v1292 = vmul.f32 %v506, %v1276
      %v1293 = vmul.f32 %v511, %v1276
      %v1294 = vmul.f32 %v516, %v1276
      %v1295 = vmul.f32 %v521, %v1276
      %v1296 = vmul.f32 %v526, %v1276
      %v1297 = vmul.f32 %v531, %v1276
      %v1298 = vmul.f32 %v536, %v1276
      %v1299 = vmul.f32 %v541, %v1276
      %v1300 = vmul.f32 %v546, %v1276
      %v1301 = vmul.f32 %v551, %v1276
      %v1302 = vmul.f32 %v556, %v1276
      %v1303 = vmul.f32 %v561, %v1276
      %v1304 = vmul.f32 %v566, %v1276
      %v1305 = vmul.f32 %v571, %v1276
      %v1306 = vmul.f32 %v576, %v1276
      %v1307 = vmul.f32 %v581, %v1276
      %v1308 = vmul.f32 %v586, %v1276
      %v1309 = vmul.f32 %v591, %v1276
      %v1310 = vmul.f32 %v596, %v1276
      %v1311 = vmul.f32 %v601, %v1276
      %v1312 = vmul.f32 %v606, %v1276
      %v1313 = vmul.f32 %v611, %v1276
      %v1314 = vmul.f32 %v616, %v1276
      %v1315 = vmul.f32 %v621, %v1276
      %v1316 = vmul.f32 %v626, %v1276
      %v1317 = vmul.f32 %v631, %v1276
      %v1318 = vmul.f32 %v636, %v1276
      %v1319 = vmul.f32 %v641, %v1276
      %v1320 = vmul.f32 %v646, %v1276
      %v1321 = vmul.f32 %v651, %v1276
      %v1322 = vmul.f32 %v656, %v1276
      %v1323 = vmul.f32 %v661, %v1276
      %v1324 = vmul.f32 %v666, %v1276
      %v1325 = vmul.f32 %v671, %v1276
      %v1326 = vmul.f32 %v676, %v1276
      %v1327 = vmul.f32 %v681, %v1276
      %v1328 = vmul.f32 %v686, %v1276
      %v1329 = vmul.f32 %v691, %v1276
      %v1330 = vmul.f32 %v696, %v1276
      %v1331 = vmul.f32 %v701, %v1276
      %v1332 = vmul.f32 %v706, %v1276
      %v1333 = vmul.f32 %v711, %v1276
      %v1334 = vmul.f32 %v716, %v1276
      %v1335 = vmul.f32 %v721, %v1276
      %v1336 = vmul.f32 %v726, %v1276
      %v1337 = vmul.f32 %v731, %v1276
      %v1338 = vmul.f32 %v736, %v1276
      %v1339 = vmul.f32 %v741, %v1276
      %v1340 = vmul.f32 %v746, %v1276
      %v1341 = vlaneseq
      %v1342 = vshrl.u32 %v1341, 7
      %v1343 = vsub.s32 2, %v1342
      %v1344 = vrot.slane %v1272, %v1343
      %v1345 = vadd.f32 %v1344, %v1277
      %v1346 = vadd.f32 %v1344, %v1278
      %v1347 = vadd.f32 %v1344, %v1279
      %v1348 = vadd.f32 %v1344, %v1280
      %v1349 = vadd.f32 %v1344, %v1281
      %v1350 = vadd.f32 %v1344, %v1282
      %v1351 = vadd.f32 %v1344, %v1283
      %v1352 = vadd.f32 %v1344, %v1284
      %v1353 = vadd.f32 %v1344, %v1285
      %v1354 = vadd.f32 %v1344, %v1286
      %v1355 = vadd.f32 %v1344, %v1287
      %v1356 = vadd.f32 %v1344, %v1288
      %v1357 = vadd.f32 %v1344, %v1289
      %v1358 = vadd.f32 %v1344, %v1290
      %v1359 = vadd.f32 %v1344, %v1291
      %v1360 = vadd.f32 %v1344, %v1292
      %v1361 = vadd.f32 %v1344, %v1293
      %v1362 = vadd.f32 %v1344, %v1294
      %v1363 = vadd.f32 %v1344, %v1295
      %v1364 = vadd.f32 %v1344, %v1296
      %v1365 = vadd.f32 %v1344, %v1297
      %v1366 = vadd.f32 %v1344, %v1298
      %v1367 = vadd.f32 %v1344, %v1299
      %v1368 = vadd.f32 %v1344, %v1300
      %v1369 = vadd.f32 %v1344, %v1301
      %v1370 = vadd.f32 %v1344, %v1302
      %v1371 = vadd.f32 %v1344, %v1303
      %v1372 = vadd.f32 %v1344, %v1304
      %v1373 = vadd.f32 %v1344, %v1305
      %v1374 = vadd.f32 %v1344, %v1306
      %v1375 = vadd.f32 %v1344, %v1307
      %v1376 = vadd.f32 %v1344, %v1308
      %v1377 = vadd.f32 %v1344, %v1309
      %v1378 = vadd.f32 %v1344, %v1310
      %v1379 = vadd.f32 %v1344, %v1311
      %v1380 = vadd.f32 %v1344, %v1312
      %v1381 = vadd.f32 %v1344, %v1313
      %v1382 = vadd.f32 %v1344, %v1314
      %v1383 = vadd.f32 %v1344, %v1315
      %v1384 = vadd.f32 %v1344, %v1316
      %v1385 = vadd.f32 %v1344, %v1317
      %v1386 = vadd.f32 %v1344, %v1318
      %v1387 = vadd.f32 %v1344, %v1319
      %v1388 = vadd.f32 %v1344, %v1320
      %v1389 = vadd.f32 %v1344, %v1321
      %v1390 = vadd.f32 %v1344, %v1322
      %v1391 = vadd.f32 %v1344, %v1323
      %v1392 = vadd.f32 %v1344, %v1324
      %v1393 = vadd.f32 %v1344, %v1325
      %v1394 = vadd.f32 %v1344, %v1326
      %v1395 = vadd.f32 %v1344, %v1327
      %v1396 = vadd.f32 %v1344, %v1328
      %v1397 = vadd.f32 %v1344, %v1329
      %v1398 = vadd.f32 %v1344, %v1330
      %v1399 = vadd.f32 %v1344, %v1331
      %v1400 = vadd.f32 %v1344, %v1332
      %v1401 = vadd.f32 %v1344, %v1333
      %v1402 = vadd.f32 %v1344, %v1334
      %v1403 = vadd.f32 %v1344, %v1335
      %v1404 = vadd.f32 %v1344, %v1336
      %v1405 = vadd.f32 %v1344, %v1337
      %v1406 = vadd.f32 %v1344, %v1338
      %v1407 = vadd.f32 %v1344, %v1339
      %v1408 = vadd.f32 %v1344, %v1340
      %v1409 = vlaneseq
      %v1410 = vshrl.u32 %v1409, 7
      %v1411 = vsub.s32 1, %v1410
      %v1412 = vrot.slane %v1272, %v1411
      %v1413 = vmul.f32 %v886, %v1412
      %v1414 = vmul.f32 %v890, %v1412
      %v1415 = vmul.f32 %v894, %v1412
      %v1416 = vmul.f32 %v898, %v1412
      %v1417 = vmul.f32 %v902, %v1412
      %v1418 = vmul.f32 %v906, %v1412
      %v1419 = vmul.f32 %v910, %v1412
      %v1420 = vmul.f32 %v914, %v1412
      %v1421 = vmul.f32 %v918, %v1412
      %v1422 = vmul.f32 %v922, %v1412
      %v1423 = vmul.f32 %v926, %v1412
      %v1424 = vmul.f32 %v930, %v1412
      %v1425 = vmul.f32 %v934, %v1412
      %v1426 = vmul.f32 %v938, %v1412
      %v1427 = vmul.f32 %v942, %v1412
      %v1428 = vmul.f32 %v946, %v1412
      %v1429 = vmul.f32 %v950, %v1412
      %v1430 = vmul.f32 %v954, %v1412
      %v1431 = vmul.f32 %v958, %v1412
      %v1432 = vmul.f32 %v962, %v1412
      %v1433 = vmul.f32 %v966, %v1412
      %v1434 = vmul.f32 %v970, %v1412
      %v1435 = vmul.f32 %v974, %v1412
      %v1436 = vmul.f32 %v978, %v1412
      %v1437 = vmul.f32 %v982, %v1412
      %v1438 = vmul.f32 %v986, %v1412
      %v1439 = vmul.f32 %v990, %v1412
      %v1440 = vmul.f32 %v994, %v1412
      %v1441 = vmul.f32 %v998, %v1412
      %v1442 = vmul.f32 %v1002, %v1412
      %v1443 = vmul.f32 %v1006, %v1412
      %v1444 = vmul.f32 %v1010, %v1412
      %v1445 = vmul.f32 %v1014, %v1412
      %v1446 = vmul.f32 %v1018, %v1412
      %v1447 = vmul.f32 %v1022, %v1412
      %v1448 = vmul.f32 %v1026, %v1412
      %v1449 = vmul.f32 %v1030, %v1412
      %v1450 = vmul.f32 %v1034, %v1412
      %v1451 = vmul.f32 %v1038, %v1412
      %v1452 = vmul.f32 %v1042, %v1412
      %v1453 = vmul.f32 %v1046, %v1412
      %v1454 = vmul.f32 %v1050, %v1412
      %v1455 = vmul.f32 %v1054, %v1412
      %v1456 = vmul.f32 %v1058, %v1412
      %v1457 = vmul.f32 %v1062, %v1412
      %v1458 = vmul.f32 %v1066, %v1412
      %v1459 = vmul.f32 %v1070, %v1412
      %v1460 = vmul.f32 %v1074, %v1412
      %v1461 = vmul.f32 %v1078, %v1412
      %v1462 = vmul.f32 %v1082, %v1412
      %v1463 = vmul.f32 %v1086, %v1412
      %v1464 = vmul.f32 %v1090, %v1412
      %v1465 = vmul.f32 %v1094, %v1412
      %v1466 = vmul.f32 %v1098, %v1412
      %v1467 = vmul.f32 %v1102, %v1412
      %v1468 = vmul.f32 %v1106, %v1412
      %v1469 = vmul.f32 %v1110, %v1412
      %v1470 = vmul.f32 %v1114, %v1412
      %v1471 = vmul.f32 %v1118, %v1412
      %v1472 = vmul.f32 %v1122, %v1412
      %v1473 = vmul.f32 %v1126, %v1412
      %v1474 = vmul.f32 %v1130, %v1412
      %v1475 = vmul.f32 %v1134, %v1412
      %v1476 = vmul.f32 %v1138, %v1412
      %v1477 = vadd.f32 %v1345, %v1413
      %v1478 = vadd.f32 %v1346, %v1414
      %v1479 = vadd.f32 %v1347, %v1415
      %v1480 = vadd.f32 %v1348, %v1416
      %v1481 = vadd.f32 %v1349, %v1417
      %v1482 = vadd.f32 %v1350, %v1418
      %v1483 = vadd.f32 %v1351, %v1419
      %v1484 = vadd.f32 %v1352, %v1420
      %v1485 = vadd.f32 %v1353, %v1421
      %v1486 = vadd.f32 %v1354, %v1422
      %v1487 = vadd.f32 %v1355, %v1423
      %v1488 = vadd.f32 %v1356, %v1424
      %v1489 = vadd.f32 %v1357, %v1425
      %v1490 = vadd.f32 %v1358, %v1426
      %v1491 = vadd.f32 %v1359, %v1427
      %v1492 = vadd.f32 %v1360, %v1428
      %v1493 = vadd.f32 %v1361, %v1429
      %v1494 = vadd.f32 %v1362, %v1430
      %v1495 = vadd.f32 %v1363, %v1431
      %v1496 = vadd.f32 %v1364, %v1432
      %v1497 = vadd.f32 %v1365, %v1433
      %v1498 = vadd.f32 %v1366, %v1434
      %v1499 = vadd.f32 %v1367, %v1435
      %v1500 = vadd.f32 %v1368, %v1436
      %v1501 = vadd.f32 %v1369, %v1437
      %v1502 = vadd.f32 %v1370, %v1438
      %v1503 = vadd.f32 %v1371, %v1439
      %v1504 = vadd.f32 %v1372, %v1440
      %v1505 = vadd.f32 %v1373, %v1441
      %v1506 = vadd.f32 %v1374, %v1442
      %v1507 = vadd.f32 %v1375, %v1443
      %v1508 = vadd.f32 %v1376, %v1444
      %v1509 = vadd.f32 %v1377, %v1445
      %v1510 = vadd.f32 %v1378, %v1446
      %v1511 = vadd.f32 %v1379, %v1447
      %v1512 = vadd.f32 %v1380, %v1448
      %v1513 = vadd.f32 %v1381, %v1449
      %v1514 = vadd.f32 %v1382, %v1450
      %v1515 = vadd.f32 %v1383, %v1451
      %v1516 = vadd.f32 %v1384, %v1452
      %v1517 = vadd.f32 %v1385, %v1453
      %v1518 = vadd.f32 %v1386, %v1454
      %v1519 = vadd.f32 %v1387, %v1455
      %v1520 = vadd.f32 %v1388, %v1456
      %v1521 = vadd.f32 %v1389, %v1457
      %v1522 = vadd.f32 %v1390, %v1458
      %v1523 = vadd.f32 %v1391, %v1459
      %v1524 = vadd.f32 %v1392, %v1460
      %v1525 = vadd.f32 %v1393, %v1461
      %v1526 = vadd.f32 %v1394, %v1462
      %v1527 = vadd.f32 %v1395, %v1463
      %v1528 = vadd.f32 %v1396, %v1464
      %v1529 = vadd.f32 %v1397, %v1465
      %v1530 = vadd.f32 %v1398, %v1466
      %v1531 = vadd.f32 %v1399, %v1467
      %v1532 = vadd.f32 %v1400, %v1468
      %v1533 = vadd.f32 %v1401, %v1469
      %v1534 = vadd.f32 %v1402, %v1470
      %v1535 = vadd.f32 %v1403, %v1471
      %v1536 = vadd.f32 %v1404, %v1472
      %v1537 = vadd.f32 %v1405, %v1473
      %v1538 = vadd.f32 %v1406, %v1474
      %v1539 = vadd.f32 %v1407, %v1475
      %v1540 = vadd.f32 %v1408, %v1476
      %v1541 = vmax.f32 %v1477, 0.0
      %v1542 = vmax.f32 %v1478, 0.0
      %v1543 = vmax.f32 %v1479, 0.0
      %v1544 = vmax.f32 %v1480, 0.0
      %v1545 = vmax.f32 %v1481, 0.0
      %v1546 = vmax.f32 %v1482, 0.0
      %v1547 = vmax.f32 %v1483, 0.0
      %v1548 = vmax.f32 %v1484, 0.0
      %v1549 = vmax.f32 %v1485, 0.0
      %v1550 = vmax.f32 %v1486, 0.0
      %v1551 = vmax.f32 %v1487, 0.0
      %v1552 = vmax.f32 %v1488, 0.0
      %v1553 = vmax.f32 %v1489, 0.0
      %v1554 = vmax.f32 %v1490, 0.0
      %v1555 = vmax.f32 %v1491, 0.0
      %v1556 = vmax.f32 %v1492, 0.0
      %v1557 = vmax.f32 %v1493, 0.0
      %v1558 = vmax.f32 %v1494, 0.0
      %v1559 = vmax.f32 %v1495, 0.0
      %v1560 = vmax.f32 %v1496, 0.0
      %v1561 = vmax.f32 %v1497, 0.0
      %v1562 = vmax.f32 %v1498, 0.0
      %v1563 = vmax.f32 %v1499, 0.0
      %v1564 = vmax.f32 %v1500, 0.0
      %v1565 = vmax.f32 %v1501, 0.0
      %v1566 = vmax.f32 %v1502, 0.0
      %v1567 = vmax.f32 %v1503, 0.0
      %v1568 = vmax.f32 %v1504, 0.0
      %v1569 = vmax.f32 %v1505, 0.0
      %v1570 = vmax.f32 %v1506, 0.0
      %v1571 = vmax.f32 %v1507, 0.0
      %v1572 = vmax.f32 %v1508, 0.0
      %v1573 = vmax.f32 %v1509, 0.0
      %v1574 = vmax.f32 %v1510, 0.0
      %v1575 = vmax.f32 %v1511, 0.0
      %v1576 = vmax.f32 %v1512, 0.0
      %v1577 = vmax.f32 %v1513, 0.0
      %v1578 = vmax.f32 %v1514, 0.0
      %v1579 = vmax.f32 %v1515, 0.0
      %v1580 = vmax.f32 %v1516, 0.0
      %v1581 = vmax.f32 %v1517, 0.0
      %v1582 = vmax.f32 %v1518, 0.0
      %v1583 = vmax.f32 %v1519, 0.0
      %v1584 = vmax.f32 %v1520, 0.0
      %v1585 = vmax.f32 %v1521, 0.0
      %v1586 = vmax.f32 %v1522, 0.0
      %v1587 = vmax.f32 %v1523, 0.0
      %v1588 = vmax.f32 %v1524, 0.0
      %v1589 = vmax.f32 %v1525, 0.0
      %v1590 = vmax.f32 %v1526, 0.0
      %v1591 = vmax.f32 %v1527, 0.0
      %v1592 = vmax.f32 %v1528, 0.0
      %v1593 = vmax.f32 %v1529, 0.0
      %v1594 = vmax.f32 %v1530, 0.0
      %v1595 = vmax.f32 %v1531, 0.0
      %v1596 = vmax.f32 %v1532, 0.0
      %v1597 = vmax.f32 %v1533, 0.0
      %v1598 = vmax.f32 %v1534, 0.0
      %v1599 = vmax.f32 %v1535, 0.0
      %v1600 = vmax.f32 %v1536, 0.0
      %v1601 = vmax.f32 %v1537, 0.0
      %v1602 = vmax.f32 %v1538, 0.0
      %v1603 = vmax.f32 %v1539, 0.0
      %v1604 = vmax.f32 %v1540, 0.0
      %1669 = vrot.lane.b32.xlu0 %v1541, 32
      %v1670 = vpop.permute.xlu0 %1669
      %1671 = vrot.lane.b32.xlu0 %v1542, 32
      %v1672 = vpop.permute.xlu0 %1671
      %1673 = vrot.lane.b32.xlu0 %v1543, 32
      %v1674 = vpop.permute.xlu0 %1673
      %1675 = vrot.lane.b32.xlu0 %v1544, 32
      %v1676 = vpop.permute.xlu0 %1675
      %1677 = vrot.lane.b32.xlu0 %v1545, 32
      %v1678 = vpop.permute.xlu0 %1677
      %1679 = vrot.lane.b32.xlu0 %v1546, 32
      %v1680 = vpop.permute.xlu0 %1679
      %1681 = vrot.lane.b32.xlu0 %v1547, 32
      %v1682 = vpop.permute.xlu0 %1681
      %1683 = vrot.lane.b32.xlu0 %v1548, 32
      %v1684 = vpop.permute.xlu0 %1683
      %1685 = vrot.lane.b32.xlu0 %v1549, 32
      %v1686 = vpop.permute.xlu0 %1685
      %1687 = vrot.lane.b32.xlu0 %v1550, 32
      %v1688 = vpop.permute.xlu0 %1687
      %1689 = vrot.lane.b32.xlu0 %v1551, 32
      %v1690 = vpop.permute.xlu0 %1689
      %1691 = vrot.lane.b32.xlu0 %v1552, 32
      %v1692 = vpop.permute.xlu0 %1691
      %1693 = vrot.lane.b32.xlu0 %v1553, 32
      %v1694 = vpop.permute.xlu0 %1693
      %1695 = vrot.lane.b32.xlu0 %v1554, 32
      %v1696 = vpop.permute.xlu0 %1695
      %1697 = vrot.lane.b32.xlu0 %v1555, 32
      %v1698 = vpop.permute.xlu0 %1697
      %1699 = vrot.lane.b32.xlu0 %v1556, 32
      %v1700 = vpop.permute.xlu0 %1699
      %1701 = vrot.lane.b32.xlu0 %v1557, 32
      %v1702 = vpop.permute.xlu0 %1701
      %1703 = vrot.lane.b32.xlu0 %v1558, 32
      %v1704 = vpop.permute.xlu0 %1703
      %1705 = vrot.lane.b32.xlu0 %v1559, 32
      %v1706 = vpop.permute.xlu0 %1705
      %1707 = vrot.lane.b32.xlu0 %v1560, 32
      %v1708 = vpop.permute.xlu0 %1707
      %1709 = vrot.lane.b32.xlu0 %v1561, 32
      %v1710 = vpop.permute.xlu0 %1709
      %1711 = vrot.lane.b32.xlu0 %v1562, 32
      %v1712 = vpop.permute.xlu0 %1711
      %1713 = vrot.lane.b32.xlu0 %v1563, 32
      %v1714 = vpop.permute.xlu0 %1713
      %1715 = vrot.lane.b32.xlu0 %v1564, 32
      %v1716 = vpop.permute.xlu0 %1715
      %1717 = vrot.lane.b32.xlu0 %v1565, 32
      %v1718 = vpop.permute.xlu0 %1717
      %1719 = vrot.lane.b32.xlu0 %v1566, 32
      %v1720 = vpop.permute.xlu0 %1719
      %1721 = vrot.lane.b32.xlu0 %v1567, 32
      %v1722 = vpop.permute.xlu0 %1721
      %1723 = vrot.lane.b32.xlu0 %v1568, 32
      %v1724 = vpop.permute.xlu0 %1723
      %1725 = vrot.lane.b32.xlu0 %v1569, 32
      %v1726 = vpop.permute.xlu0 %1725
      %1727 = vrot.lane.b32.xlu0 %v1570, 32
      %v1728 = vpop.permute.xlu0 %1727
      %1729 = vrot.lane.b32.xlu0 %v1571, 32
      %v1730 = vpop.permute.xlu0 %1729
      %1731 = vrot.lane.b32.xlu0 %v1572, 32
      %v1732 = vpop.permute.xlu0 %1731
      %1733 = vrot.lane.b32.xlu0 %v1573, 32
      %v1734 = vpop.permute.xlu0 %1733
      %1735 = vrot.lane.b32.xlu0 %v1574, 32
      %v1736 = vpop.permute.xlu0 %1735
      %1737 = vrot.lane.b32.xlu0 %v1575, 32
      %v1738 = vpop.permute.xlu0 %1737
      %1739 = vrot.lane.b32.xlu0 %v1576, 32
      %v1740 = vpop.permute.xlu0 %1739
      %1741 = vrot.lane.b32.xlu0 %v1577, 32
      %v1742 = vpop.permute.xlu0 %1741
      %1743 = vrot.lane.b32.xlu0 %v1578, 32
      %v1744 = vpop.permute.xlu0 %1743
      %1745 = vrot.lane.b32.xlu0 %v1579, 32
      %v1746 = vpop.permute.xlu0 %1745
      %1747 = vrot.lane.b32.xlu0 %v1580, 32
      %v1748 = vpop.permute.xlu0 %1747
      %1749 = vrot.lane.b32.xlu0 %v1581, 32
      %v1750 = vpop.permute.xlu0 %1749
      %1751 = vrot.lane.b32.xlu0 %v1582, 32
      %v1752 = vpop.permute.xlu0 %1751
      %1753 = vrot.lane.b32.xlu0 %v1583, 32
      %v1754 = vpop.permute.xlu0 %1753
      %1755 = vrot.lane.b32.xlu0 %v1584, 32
      %v1756 = vpop.permute.xlu0 %1755
      %1757 = vrot.lane.b32.xlu0 %v1585, 32
      %v1758 = vpop.permute.xlu0 %1757
      %1759 = vrot.lane.b32.xlu0 %v1586, 32
      %v1760 = vpop.permute.xlu0 %1759
      %1761 = vrot.lane.b32.xlu0 %v1587, 32
      %v1762 = vpop.permute.xlu0 %1761
      %1763 = vrot.lane.b32.xlu0 %v1588, 32
      %v1764 = vpop.permute.xlu0 %1763
      %1765 = vrot.lane.b32.xlu0 %v1589, 32
      %v1766 = vpop.permute.xlu0 %1765
      %1767 = vrot.lane.b32.xlu0 %v1590, 32
      %v1768 = vpop.permute.xlu0 %1767
      %1769 = vrot.lane.b32.xlu0 %v1591, 32
      %v1770 = vpop.permute.xlu0 %1769
      %1771 = vrot.lane.b32.xlu0 %v1592, 32
      %v1772 = vpop.permute.xlu0 %1771
      %1773 = vrot.lane.b32.xlu0 %v1593, 32
      %v1774 = vpop.permute.xlu0 %1773
      %1775 = vrot.lane.b32.xlu0 %v1594, 32
      %v1776 = vpop.permute.xlu0 %1775
      %1777 = vrot.lane.b32.xlu0 %v1595, 32
      %v1778 = vpop.permute.xlu0 %1777
      %1779 = vrot.lane.b32.xlu0 %v1596, 32
      %v1780 = vpop.permute.xlu0 %1779
      %1781 = vrot.lane.b32.xlu0 %v1597, 32
      %v1782 = vpop.permute.xlu0 %1781
      %1783 = vrot.lane.b32.xlu0 %v1598, 32
      %v1784 = vpop.permute.xlu0 %1783
      %1785 = vrot.lane.b32.xlu0 %v1599, 32
      %v1786 = vpop.permute.xlu0 %1785
      %1787 = vrot.lane.b32.xlu0 %v1600, 32
      %v1788 = vpop.permute.xlu0 %1787
      %1789 = vrot.lane.b32.xlu0 %v1601, 32
      %v1790 = vpop.permute.xlu0 %1789
      %1791 = vrot.lane.b32.xlu0 %v1602, 32
      %v1792 = vpop.permute.xlu0 %1791
      %1793 = vrot.lane.b32.xlu0 %v1603, 32
      %v1794 = vpop.permute.xlu0 %1793
      %1795 = vrot.lane.b32.xlu0 %v1604, 32
      %v1796 = vpop.permute.xlu0 %1795
      %vm1861 = vcmask 261120
      %v1862 = vsel %vm1861, %v1208, %v1670
      %v1863 = vsel %vm1861, %v1209, %v1672
      %v1864 = vsel %vm1861, %v1210, %v1674
      %v1865 = vsel %vm1861, %v1211, %v1676
      %v1866 = vsel %vm1861, %v1212, %v1678
      %v1867 = vsel %vm1861, %v1213, %v1680
      %v1868 = vsel %vm1861, %v1214, %v1682
      %v1869 = vsel %vm1861, %v1215, %v1684
      %v1870 = vsel %vm1861, %v1216, %v1686
      %v1871 = vsel %vm1861, %v1217, %v1688
      %v1872 = vsel %vm1861, %v1218, %v1690
      %v1873 = vsel %vm1861, %v1219, %v1692
      %v1874 = vsel %vm1861, %v1220, %v1694
      %v1875 = vsel %vm1861, %v1221, %v1696
      %v1876 = vsel %vm1861, %v1222, %v1698
      %v1877 = vsel %vm1861, %v1223, %v1700
      %v1878 = vsel %vm1861, %v1224, %v1702
      %v1879 = vsel %vm1861, %v1225, %v1704
      %v1880 = vsel %vm1861, %v1226, %v1706
      %v1881 = vsel %vm1861, %v1227, %v1708
      %v1882 = vsel %vm1861, %v1228, %v1710
      %v1883 = vsel %vm1861, %v1229, %v1712
      %v1884 = vsel %vm1861, %v1230, %v1714
      %v1885 = vsel %vm1861, %v1231, %v1716
      %v1886 = vsel %vm1861, %v1232, %v1718
      %v1887 = vsel %vm1861, %v1233, %v1720
      %v1888 = vsel %vm1861, %v1234, %v1722
      %v1889 = vsel %vm1861, %v1235, %v1724
      %v1890 = vsel %vm1861, %v1236, %v1726
      %v1891 = vsel %vm1861, %v1237, %v1728
      %v1892 = vsel %vm1861, %v1238, %v1730
      %v1893 = vsel %vm1861, %v1239, %v1732
      %v1894 = vsel %vm1861, %v1240, %v1734
      %v1895 = vsel %vm1861, %v1241, %v1736
      %v1896 = vsel %vm1861, %v1242, %v1738
      %v1897 = vsel %vm1861, %v1243, %v1740
      %v1898 = vsel %vm1861, %v1244, %v1742
      %v1899 = vsel %vm1861, %v1245, %v1744
      %v1900 = vsel %vm1861, %v1246, %v1746
      %v1901 = vsel %vm1861, %v1247, %v1748
      %v1902 = vsel %vm1861, %v1248, %v1750
      %v1903 = vsel %vm1861, %v1249, %v1752
      %v1904 = vsel %vm1861, %v1250, %v1754
      %v1905 = vsel %vm1861, %v1251, %v1756
      %v1906 = vsel %vm1861, %v1252, %v1758
      %v1907 = vsel %vm1861, %v1253, %v1760
      %v1908 = vsel %vm1861, %v1254, %v1762
      %v1909 = vsel %vm1861, %v1255, %v1764
      %v1910 = vsel %vm1861, %v1256, %v1766
      %v1911 = vsel %vm1861, %v1257, %v1768
      %v1912 = vsel %vm1861, %v1258, %v1770
      %v1913 = vsel %vm1861, %v1259, %v1772
      %v1914 = vsel %vm1861, %v1260, %v1774
      %v1915 = vsel %vm1861, %v1261, %v1776
      %v1916 = vsel %vm1861, %v1262, %v1778
      %v1917 = vsel %vm1861, %v1263, %v1780
      %v1918 = vsel %vm1861, %v1264, %v1782
      %v1919 = vsel %vm1861, %v1265, %v1784
      %v1920 = vsel %vm1861, %v1266, %v1786
      %v1921 = vsel %vm1861, %v1267, %v1788
      %v1922 = vsel %vm1861, %v1268, %v1790
      %v1923 = vsel %vm1861, %v1269, %v1792
      %v1924 = vsel %vm1861, %v1270, %v1794
      %v1925 = vsel %vm1861, %v1271, %v1796
      %v1926 = vld [vmem:[%s6] sm:$0xff]
      %v1927 = vld [vmem:[%s6 + $0x8] sm:$0xff]
      %v1928 = vld [vmem:[%s6 + $0x10] sm:$0xff]
      %v1929 = vld [vmem:[%s6 + $0x18] sm:$0xff]
      %v1930 = vld [vmem:[%s6 + $0x20] sm:$0xff]
      %v1931 = vld [vmem:[%s6 + $0x28] sm:$0xff]
      %v1932 = vld [vmem:[%s6 + $0x30] sm:$0xff]
      %v1933 = vld [vmem:[%s6 + $0x38] sm:$0xff]
      %v1934 = vld [vmem:[%s3] sm:$0x7]
      %v1935 = vlaneseq
      %v1936 = vshrl.u32 %v1935, 7
      %v1937 = vsub.s32 0, %v1936
      %v1938 = vrot.slane %v1934, %v1937
      %v1939 = vmul.f32 %v431, %v1938
      %v1940 = vmul.f32 %v436, %v1938
      %v1941 = vmul.f32 %v441, %v1938
      %v1942 = vmul.f32 %v446, %v1938
      %v1943 = vmul.f32 %v451, %v1938
      %v1944 = vmul.f32 %v456, %v1938
      %v1945 = vmul.f32 %v461, %v1938
      %v1946 = vmul.f32 %v466, %v1938
      %v1947 = vmul.f32 %v471, %v1938
      %v1948 = vmul.f32 %v476, %v1938
      %v1949 = vmul.f32 %v481, %v1938
      %v1950 = vmul.f32 %v486, %v1938
      %v1951 = vmul.f32 %v491, %v1938
      %v1952 = vmul.f32 %v496, %v1938
      %v1953 = vmul.f32 %v501, %v1938
      %v1954 = vmul.f32 %v506, %v1938
      %v1955 = vmul.f32 %v511, %v1938
      %v1956 = vmul.f32 %v516, %v1938
      %v1957 = vmul.f32 %v521, %v1938
      %v1958 = vmul.f32 %v526, %v1938
      %v1959 = vmul.f32 %v531, %v1938
      %v1960 = vmul.f32 %v536, %v1938
      %v1961 = vmul.f32 %v541, %v1938
      %v1962 = vmul.f32 %v546, %v1938
      %v1963 = vmul.f32 %v551, %v1938
      %v1964 = vmul.f32 %v556, %v1938
      %v1965 = vmul.f32 %v561, %v1938
      %v1966 = vmul.f32 %v566, %v1938
      %v1967 = vmul.f32 %v571, %v1938
      %v1968 = vmul.f32 %v576, %v1938
      %v1969 = vmul.f32 %v581, %v1938
      %v1970 = vmul.f32 %v586, %v1938
      %v1971 = vmul.f32 %v591, %v1938
      %v1972 = vmul.f32 %v596, %v1938
      %v1973 = vmul.f32 %v601, %v1938
      %v1974 = vmul.f32 %v606, %v1938
      %v1975 = vmul.f32 %v611, %v1938
      %v1976 = vmul.f32 %v616, %v1938
      %v1977 = vmul.f32 %v621, %v1938
      %v1978 = vmul.f32 %v626, %v1938
      %v1979 = vmul.f32 %v631, %v1938
      %v1980 = vmul.f32 %v636, %v1938
      %v1981 = vmul.f32 %v641, %v1938
      %v1982 = vmul.f32 %v646, %v1938
      %v1983 = vmul.f32 %v651, %v1938
      %v1984 = vmul.f32 %v656, %v1938
      %v1985 = vmul.f32 %v661, %v1938
      %v1986 = vmul.f32 %v666, %v1938
      %v1987 = vmul.f32 %v671, %v1938
      %v1988 = vmul.f32 %v676, %v1938
      %v1989 = vmul.f32 %v681, %v1938
      %v1990 = vmul.f32 %v686, %v1938
      %v1991 = vmul.f32 %v691, %v1938
      %v1992 = vmul.f32 %v696, %v1938
      %v1993 = vmul.f32 %v701, %v1938
      %v1994 = vmul.f32 %v706, %v1938
      %v1995 = vmul.f32 %v711, %v1938
      %v1996 = vmul.f32 %v716, %v1938
      %v1997 = vmul.f32 %v721, %v1938
      %v1998 = vmul.f32 %v726, %v1938
      %v1999 = vmul.f32 %v731, %v1938
      %v2000 = vmul.f32 %v736, %v1938
      %v2001 = vmul.f32 %v741, %v1938
      %v2002 = vmul.f32 %v746, %v1938
      %v2003 = vlaneseq
      %v2004 = vshrl.u32 %v2003, 7
      %v2005 = vsub.s32 2, %v2004
      %v2006 = vrot.slane %v1934, %v2005
      %v2007 = vadd.f32 %v2006, %v1939
      %v2008 = vadd.f32 %v2006, %v1940
      %v2009 = vadd.f32 %v2006, %v1941
      %v2010 = vadd.f32 %v2006, %v1942
      %v2011 = vadd.f32 %v2006, %v1943
      %v2012 = vadd.f32 %v2006, %v1944
      %v2013 = vadd.f32 %v2006, %v1945
      %v2014 = vadd.f32 %v2006, %v1946
      %v2015 = vadd.f32 %v2006, %v1947
      %v2016 = vadd.f32 %v2006, %v1948
      %v2017 = vadd.f32 %v2006, %v1949
      %v2018 = vadd.f32 %v2006, %v1950
      %v2019 = vadd.f32 %v2006, %v1951
      %v2020 = vadd.f32 %v2006, %v1952
      %v2021 = vadd.f32 %v2006, %v1953
      %v2022 = vadd.f32 %v2006, %v1954
      %v2023 = vadd.f32 %v2006, %v1955
      %v2024 = vadd.f32 %v2006, %v1956
      %v2025 = vadd.f32 %v2006, %v1957
      %v2026 = vadd.f32 %v2006, %v1958
      %v2027 = vadd.f32 %v2006, %v1959
      %v2028 = vadd.f32 %v2006, %v1960
      %v2029 = vadd.f32 %v2006, %v1961
      %v2030 = vadd.f32 %v2006, %v1962
      %v2031 = vadd.f32 %v2006, %v1963
      %v2032 = vadd.f32 %v2006, %v1964
      %v2033 = vadd.f32 %v2006, %v1965
      %v2034 = vadd.f32 %v2006, %v1966
      %v2035 = vadd.f32 %v2006, %v1967
      %v2036 = vadd.f32 %v2006, %v1968
      %v2037 = vadd.f32 %v2006, %v1969
      %v2038 = vadd.f32 %v2006, %v1970
      %v2039 = vadd.f32 %v2006, %v1971
      %v2040 = vadd.f32 %v2006, %v1972
      %v2041 = vadd.f32 %v2006, %v1973
      %v2042 = vadd.f32 %v2006, %v1974
      %v2043 = vadd.f32 %v2006, %v1975
      %v2044 = vadd.f32 %v2006, %v1976
      %v2045 = vadd.f32 %v2006, %v1977
      %v2046 = vadd.f32 %v2006, %v1978
      %v2047 = vadd.f32 %v2006, %v1979
      %v2048 = vadd.f32 %v2006, %v1980
      %v2049 = vadd.f32 %v2006, %v1981
      %v2050 = vadd.f32 %v2006, %v1982
      %v2051 = vadd.f32 %v2006, %v1983
      %v2052 = vadd.f32 %v2006, %v1984
      %v2053 = vadd.f32 %v2006, %v1985
      %v2054 = vadd.f32 %v2006, %v1986
      %v2055 = vadd.f32 %v2006, %v1987
      %v2056 = vadd.f32 %v2006, %v1988
      %v2057 = vadd.f32 %v2006, %v1989
      %v2058 = vadd.f32 %v2006, %v1990
      %v2059 = vadd.f32 %v2006, %v1991
      %v2060 = vadd.f32 %v2006, %v1992
      %v2061 = vadd.f32 %v2006, %v1993
      %v2062 = vadd.f32 %v2006, %v1994
      %v2063 = vadd.f32 %v2006, %v1995
      %v2064 = vadd.f32 %v2006, %v1996
      %v2065 = vadd.f32 %v2006, %v1997
      %v2066 = vadd.f32 %v2006, %v1998
      %v2067 = vadd.f32 %v2006, %v1999
      %v2068 = vadd.f32 %v2006, %v2000
      %v2069 = vadd.f32 %v2006, %v2001
      %v2070 = vadd.f32 %v2006, %v2002
      %v2071 = vlaneseq
      %v2072 = vshrl.u32 %v2071, 7
      %v2073 = vsub.s32 1, %v2072
      %v2074 = vrot.slane %v1934, %v2073
      %v2075 = vmul.f32 %v886, %v2074
      %v2076 = vmul.f32 %v890, %v2074
      %v2077 = vmul.f32 %v894, %v2074
      %v2078 = vmul.f32 %v898, %v2074
      %v2079 = vmul.f32 %v902, %v2074
      %v2080 = vmul.f32 %v906, %v2074
      %v2081 = vmul.f32 %v910, %v2074
      %v2082 = vmul.f32 %v914, %v2074
      %v2083 = vmul.f32 %v918, %v2074
      %v2084 = vmul.f32 %v922, %v2074
      %v2085 = vmul.f32 %v926, %v2074
      %v2086 = vmul.f32 %v930, %v2074
      %v2087 = vmul.f32 %v934, %v2074
      %v2088 = vmul.f32 %v938, %v2074
      %v2089 = vmul.f32 %v942, %v2074
      %v2090 = vmul.f32 %v946, %v2074
      %v2091 = vmul.f32 %v950, %v2074
      %v2092 = vmul.f32 %v954, %v2074
      %v2093 = vmul.f32 %v958, %v2074
      %v2094 = vmul.f32 %v962, %v2074
      %v2095 = vmul.f32 %v966, %v2074
      %v2096 = vmul.f32 %v970, %v2074
      %v2097 = vmul.f32 %v974, %v2074
      %v2098 = vmul.f32 %v978, %v2074
      %v2099 = vmul.f32 %v982, %v2074
      %v2100 = vmul.f32 %v986, %v2074
      %v2101 = vmul.f32 %v990, %v2074
      %v2102 = vmul.f32 %v994, %v2074
      %v2103 = vmul.f32 %v998, %v2074
      %v2104 = vmul.f32 %v1002, %v2074
      %v2105 = vmul.f32 %v1006, %v2074
      %v2106 = vmul.f32 %v1010, %v2074
      %v2107 = vmul.f32 %v1014, %v2074
      %v2108 = vmul.f32 %v1018, %v2074
      %v2109 = vmul.f32 %v1022, %v2074
      %v2110 = vmul.f32 %v1026, %v2074
      %v2111 = vmul.f32 %v1030, %v2074
      %v2112 = vmul.f32 %v1034, %v2074
      %v2113 = vmul.f32 %v1038, %v2074
      %v2114 = vmul.f32 %v1042, %v2074
      %v2115 = vmul.f32 %v1046, %v2074
      %v2116 = vmul.f32 %v1050, %v2074
      %v2117 = vmul.f32 %v1054, %v2074
      %v2118 = vmul.f32 %v1058, %v2074
      %v2119 = vmul.f32 %v1062, %v2074
      %v2120 = vmul.f32 %v1066, %v2074
      %v2121 = vmul.f32 %v1070, %v2074
      %v2122 = vmul.f32 %v1074, %v2074
      %v2123 = vmul.f32 %v1078, %v2074
      %v2124 = vmul.f32 %v1082, %v2074
      %v2125 = vmul.f32 %v1086, %v2074
      %v2126 = vmul.f32 %v1090, %v2074
      %v2127 = vmul.f32 %v1094, %v2074
      %v2128 = vmul.f32 %v1098, %v2074
      %v2129 = vmul.f32 %v1102, %v2074
      %v2130 = vmul.f32 %v1106, %v2074
      %v2131 = vmul.f32 %v1110, %v2074
      %v2132 = vmul.f32 %v1114, %v2074
      %v2133 = vmul.f32 %v1118, %v2074
      %v2134 = vmul.f32 %v1122, %v2074
      %v2135 = vmul.f32 %v1126, %v2074
      %v2136 = vmul.f32 %v1130, %v2074
      %v2137 = vmul.f32 %v1134, %v2074
      %v2138 = vmul.f32 %v1138, %v2074
      %v2139 = vadd.f32 %v2007, %v2075
      %v2140 = vadd.f32 %v2008, %v2076
      %v2141 = vadd.f32 %v2009, %v2077
      %v2142 = vadd.f32 %v2010, %v2078
      %v2143 = vadd.f32 %v2011, %v2079
      %v2144 = vadd.f32 %v2012, %v2080
      %v2145 = vadd.f32 %v2013, %v2081
      %v2146 = vadd.f32 %v2014, %v2082
      %v2147 = vadd.f32 %v2015, %v2083
      %v2148 = vadd.f32 %v2016, %v2084
      %v2149 = vadd.f32 %v2017, %v2085
      %v2150 = vadd.f32 %v2018, %v2086
      %v2151 = vadd.f32 %v2019, %v2087
      %v2152 = vadd.f32 %v2020, %v2088
      %v2153 = vadd.f32 %v2021, %v2089
      %v2154 = vadd.f32 %v2022, %v2090
      %v2155 = vadd.f32 %v2023, %v2091
      %v2156 = vadd.f32 %v2024, %v2092
      %v2157 = vadd.f32 %v2025, %v2093
      %v2158 = vadd.f32 %v2026, %v2094
      %v2159 = vadd.f32 %v2027, %v2095
      %v2160 = vadd.f32 %v2028, %v2096
      %v2161 = vadd.f32 %v2029, %v2097
      %v2162 = vadd.f32 %v2030, %v2098
      %v2163 = vadd.f32 %v2031, %v2099
      %v2164 = vadd.f32 %v2032, %v2100
      %v2165 = vadd.f32 %v2033, %v2101
      %v2166 = vadd.f32 %v2034, %v2102
      %v2167 = vadd.f32 %v2035, %v2103
      %v2168 = vadd.f32 %v2036, %v2104
      %v2169 = vadd.f32 %v2037, %v2105
      %v2170 = vadd.f32 %v2038, %v2106
      %v2171 = vadd.f32 %v2039, %v2107
      %v2172 = vadd.f32 %v2040, %v2108
      %v2173 = vadd.f32 %v2041, %v2109
      %v2174 = vadd.f32 %v2042, %v2110
      %v2175 = vadd.f32 %v2043, %v2111
      %v2176 = vadd.f32 %v2044, %v2112
      %v2177 = vadd.f32 %v2045, %v2113
      %v2178 = vadd.f32 %v2046, %v2114
      %v2179 = vadd.f32 %v2047, %v2115
      %v2180 = vadd.f32 %v2048, %v2116
      %v2181 = vadd.f32 %v2049, %v2117
      %v2182 = vadd.f32 %v2050, %v2118
      %v2183 = vadd.f32 %v2051, %v2119
      %v2184 = vadd.f32 %v2052, %v2120
      %v2185 = vadd.f32 %v2053, %v2121
      %v2186 = vadd.f32 %v2054, %v2122
      %v2187 = vadd.f32 %v2055, %v2123
      %v2188 = vadd.f32 %v2056, %v2124
      %v2189 = vadd.f32 %v2057, %v2125
      %v2190 = vadd.f32 %v2058, %v2126
      %v2191 = vadd.f32 %v2059, %v2127
      %v2192 = vadd.f32 %v2060, %v2128
      %v2193 = vadd.f32 %v2061, %v2129
      %v2194 = vadd.f32 %v2062, %v2130
      %v2195 = vadd.f32 %v2063, %v2131
      %v2196 = vadd.f32 %v2064, %v2132
      %v2197 = vadd.f32 %v2065, %v2133
      %v2198 = vadd.f32 %v2066, %v2134
      %v2199 = vadd.f32 %v2067, %v2135
      %v2200 = vadd.f32 %v2068, %v2136
      %v2201 = vadd.f32 %v2069, %v2137
      %v2202 = vadd.f32 %v2070, %v2138
      %vm2203 = vcmask 523264
      %v2205 = vsel %vm2203, %v1862, 0
      %v2208 = vsel %vm2203, %v1863, 0
      %v2211 = vsel %vm2203, %v1864, 0
      %v2214 = vsel %vm2203, %v1865, 0
      %v2217 = vsel %vm2203, %v1866, 0
      %v2220 = vsel %vm2203, %v1867, 0
      %v2223 = vsel %vm2203, %v1868, 0
      %v2226 = vsel %vm2203, %v1869, 0
      %v2229 = vsel %vm2203, %v1870, 0
      %v2232 = vsel %vm2203, %v1871, 0
      %v2235 = vsel %vm2203, %v1872, 0
      %v2238 = vsel %vm2203, %v1873, 0
      %v2241 = vsel %vm2203, %v1874, 0
      %v2244 = vsel %vm2203, %v1875, 0
      %v2247 = vsel %vm2203, %v1876, 0
      %v2250 = vsel %vm2203, %v1877, 0
      %v2253 = vsel %vm2203, %v1878, 0
      %v2256 = vsel %vm2203, %v1879, 0
      %v2259 = vsel %vm2203, %v1880, 0
      %v2262 = vsel %vm2203, %v1881, 0
      %v2265 = vsel %vm2203, %v1882, 0
      %v2268 = vsel %vm2203, %v1883, 0
      %v2271 = vsel %vm2203, %v1884, 0
      %v2274 = vsel %vm2203, %v1885, 0
      %v2277 = vsel %vm2203, %v1886, 0
      %v2280 = vsel %vm2203, %v1887, 0
      %v2283 = vsel %vm2203, %v1888, 0
      %v2286 = vsel %vm2203, %v1889, 0
      %v2289 = vsel %vm2203, %v1890, 0
      %v2292 = vsel %vm2203, %v1891, 0
      %v2295 = vsel %vm2203, %v1892, 0
      %v2298 = vsel %vm2203, %v1893, 0
      %v2301 = vsel %vm2203, %v1894, 0
      %v2304 = vsel %vm2203, %v1895, 0
      %v2307 = vsel %vm2203, %v1896, 0
      %v2310 = vsel %vm2203, %v1897, 0
      %v2313 = vsel %vm2203, %v1898, 0
      %v2316 = vsel %vm2203, %v1899, 0
      %v2319 = vsel %vm2203, %v1900, 0
      %v2322 = vsel %vm2203, %v1901, 0
      %v2325 = vsel %vm2203, %v1902, 0
      %v2328 = vsel %vm2203, %v1903, 0
      %v2331 = vsel %vm2203, %v1904, 0
      %v2334 = vsel %vm2203, %v1905, 0
      %v2337 = vsel %vm2203, %v1906, 0
      %v2340 = vsel %vm2203, %v1907, 0
      %v2343 = vsel %vm2203, %v1908, 0
      %v2346 = vsel %vm2203, %v1909, 0
      %v2349 = vsel %vm2203, %v1910, 0
      %v2352 = vsel %vm2203, %v1911, 0
      %v2355 = vsel %vm2203, %v1912, 0
      %v2358 = vsel %vm2203, %v1913, 0
      %v2361 = vsel %vm2203, %v1914, 0
      %v2364 = vsel %vm2203, %v1915, 0
      %v2367 = vsel %vm2203, %v1916, 0
      %v2370 = vsel %vm2203, %v1917, 0
      %v2373 = vsel %vm2203, %v1918, 0
      %v2376 = vsel %vm2203, %v1919, 0
      %v2379 = vsel %vm2203, %v1920, 0
      %v2382 = vsel %vm2203, %v1921, 0
      %v2385 = vsel %vm2203, %v1922, 0
      %v2388 = vsel %vm2203, %v1923, 0
      %v2391 = vsel %vm2203, %v1924, 0
      %v2394 = vsel %vm2203, %v1925, 0
      %2396 = vmatprep.subr.mxu0 0.0
      %2397 = vmatpush1.msra.mxu0 %v1926
      %2398 = vmatprep.subr.mxu0 0.0
      %2399 = vmatpush1.msra.mxu0 %v1927
      %2400 = vmatprep.subr.mxu0 0.0
      %2401 = vmatpush1.msra.mxu0 %v1928
      %2402 = vmatprep.subr.mxu0 0.0
      %2403 = vmatpush1.msra.mxu0 %v1929
      %2404 = vmatprep.subr.mxu0 0.0
      %2405 = vmatpush1.msra.mxu0 %v1930
      %2406 = vmatprep.subr.mxu0 0.0
      %2407 = vmatpush1.msra.mxu0 %v1931
      %2408 = vmatprep.subr.mxu0 0.0
      %2409 = vmatpush1.msra.mxu0 %v1932
      %2410 = vmatprep.subr.mxu0 0.0
      %2411 = vmatpush1.msra.mxu0 %v1933
      %2412 = vmatprep.subr.mxu0 0.0
      %2413 = vmatpush1.msra.mxu0 0.0
      %2414 = vmatprep.subr.mxu0 0.0
      %2415 = vmatpush1.msra.mxu0 0.0
      %2416 = vmatprep.subr.mxu0 0.0
      %2417 = vmatpush1.msra.mxu0 0.0
      %2418 = vmatprep.subr.mxu0 0.0
      %2419 = vmatpush1.msra.mxu0 0.0
      %2420 = vmatprep.subr.mxu0 0.0
      %2421 = vmatpush1.msra.mxu0 0.0
      %2422 = vmatprep.subr.mxu0 0.0
      %2423 = vmatpush1.msra.mxu0 0.0
      %2424 = vmatprep.subr.mxu0 0.0
      %2425 = vmatpush1.msra.mxu0 0.0
      %2426 = vmatprep.subr.mxu0 0.0
      %2427 = vmatpush1.msra.mxu0 0.0
      %2428 = vmatprep.subr.mxu0 0.0
      %2429 = vmatpush1.msra.mxu0 0.0
      %2430 = vmatprep.subr.mxu0 0.0
      %2431 = vmatpush1.msra.mxu0 0.0
      %2432 = vmatprep.subr.mxu0 0.0
      %2433 = vmatpush1.msra.mxu0 0.0
      %2434 = vmatprep.subr.mxu0 0.0
      %2435 = vmatpush1.msra.mxu0 0.0
      %2436 = vmatprep.subr.mxu0 0.0
      %2437 = vmatpush1.msra.mxu0 0.0
      %2438 = vmatprep.subr.mxu0 0.0
      %2439 = vmatpush1.msra.mxu0 0.0
      %2440 = vmatprep.subr.mxu0 0.0
      %2441 = vmatpush1.msra.mxu0 0.0
      %2442 = vmatprep.subr.mxu0 0.0
      %2443 = vmatpush1.msra.mxu0 0.0
      %2444 = vmatprep.subr.mxu0 0.0
      %2445 = vmatpush1.msra.mxu0 0.0
      %2446 = vmatprep.subr.mxu0 0.0
      %2447 = vmatpush1.msra.mxu0 0.0
      %2448 = vmatprep.subr.mxu0 0.0
      %2449 = vmatpush1.msra.mxu0 0.0
      %2450 = vmatprep.subr.mxu0 0.0
      %2451 = vmatpush1.msra.mxu0 0.0
      %2452 = vmatprep.subr.mxu0 0.0
      %2453 = vmatpush1.msra.mxu0 0.0
      %2454 = vmatprep.subr.mxu0 0.0
      %2455 = vmatpush1.msra.mxu0 0.0
      %2456 = vmatprep.subr.mxu0 0.0
      %2457 = vmatpush1.msra.mxu0 0.0
      %2458 = vmatprep.subr.mxu0 0.0
      %2459 = vmatpush1.msra.mxu0 0.0
      %2460 = vmatprep.mubr.f32.mxu0 0.0
      %2461 = vmatmul.mubr.f32.gmra.mrb[0].mxu0 %v2205
      %v2462 = vpop.f32.mrb[0].mxu0
      %v2463 = vadd.f32 %v2139, %v2462
      %v2464 = vpop.f32.mrb[0].mxu0
      %2465 = vmatprep.mubr.f32.mxu0 0.0
      %2466 = vmatmul.mubr.f32.gmra.mrb[0].mxu0 %v2208
      %v2467 = vpop.f32.mrb[0].mxu0
      %v2468 = vadd.f32 %v2140, %v2467
      %v2469 = vpop.f32.mrb[0].mxu0
      %2470 = vmatprep.mubr.f32.mxu0 0.0
      %2471 = vmatmul.mubr.f32.gmra.mrb[0].mxu0 %v2211
      %v2472 = vpop.f32.mrb[0].mxu0
      %v2473 = vadd.f32 %v2141, %v2472
      %v2474 = vpop.f32.mrb[0].mxu0
      %2475 = vmatprep.mubr.f32.mxu0 0.0
      %2476 = vmatmul.mubr.f32.gmra.mrb[0].mxu0 %v2214
      %v2477 = vpop.f32.mrb[0].mxu0
      %v2478 = vadd.f32 %v2142, %v2477
      %v2479 = vpop.f32.mrb[0].mxu0
      %2480 = vmatprep.mubr.f32.mxu0 0.0
      %2481 = vmatmul.mubr.f32.gmra.mrb[0].mxu0 %v2217
      %v2482 = vpop.f32.mrb[0].mxu0
      %v2483 = vadd.f32 %v2143, %v2482
      %v2484 = vpop.f32.mrb[0].mxu0
      %2485 = vmatprep.mubr.f32.mxu0 0.0
      %2486 = vmatmul.mubr.f32.gmra.mrb[0].mxu0 %v2220
      %v2487 = vpop.f32.mrb[0].mxu0
      %v2488 = vadd.f32 %v2144, %v2487
      %v2489 = vpop.f32.mrb[0].mxu0
      %2490 = vmatprep.mubr.f32.mxu0 0.0
      %2491 = vmatmul.mubr.f32.gmra.mrb[0].mxu0 %v2223
      %v2492 = vpop.f32.mrb[0].mxu0
      %v2493 = vadd.f32 %v2145, %v2492
      %v2494 = vpop.f32.mrb[0].mxu0
      %2495 = vmatprep.mubr.f32.mxu0 0.0
      %2496 = vmatmul.mubr.f32.gmra.mrb[0].mxu0 %v2226
      %v2497 = vpop.f32.mrb[0].mxu0
      %v2498 = vadd.f32 %v2146, %v2497
      %v2499 = vpop.f32.mrb[0].mxu0
      %2500 = vmatprep.mubr.f32.mxu0 0.0
      %2501 = vmatmul.mubr.f32.gmra.mrb[0].mxu0 %v2229
      %v2502 = vpop.f32.mrb[0].mxu0
      %v2503 = vadd.f32 %v2147, %v2502
      %v2504 = vpop.f32.mrb[0].mxu0
      %2505 = vmatprep.mubr.f32.mxu0 0.0
      %2506 = vmatmul.mubr.f32.gmra.mrb[0].mxu0 %v2232
      %v2507 = vpop.f32.mrb[0].mxu0
      %v2508 = vadd.f32 %v2148, %v2507
      %v2509 = vpop.f32.mrb[0].mxu0
      %2510 = vmatprep.mubr.f32.mxu0 0.0
      %2511 = vmatmul.mubr.f32.gmra.mrb[0].mxu0 %v2235
      %v2512 = vpop.f32.mrb[0].mxu0
      %v2513 = vadd.f32 %v2149, %v2512
      %v2514 = vpop.f32.mrb[0].mxu0
      %2515 = vmatprep.mubr.f32.mxu0 0.0
      %2516 = vmatmul.mubr.f32.gmra.mrb[0].mxu0 %v2238
      %v2517 = vpop.f32.mrb[0].mxu0
      %v2518 = vadd.f32 %v2150, %v2517
      %v2519 = vpop.f32.mrb[0].mxu0
      %2520 = vmatprep.mubr.f32.mxu0 0.0
      %2521 = vmatmul.mubr.f32.gmra.mrb[0].mxu0 %v2241
      %v2522 = vpop.f32.mrb[0].mxu0
      %v2523 = vadd.f32 %v2151, %v2522
      %v2524 = vpop.f32.mrb[0].mxu0
      %2525 = vmatprep.mubr.f32.mxu0 0.0
      %2526 = vmatmul.mubr.f32.gmra.mrb[0].mxu0 %v2244
      %v2527 = vpop.f32.mrb[0].mxu0
      %v2528 = vadd.f32 %v2152, %v2527
      %v2529 = vpop.f32.mrb[0].mxu0
      %2530 = vmatprep.mubr.f32.mxu0 0.0
      %2531 = vmatmul.mubr.f32.gmra.mrb[0].mxu0 %v2247
      %v2532 = vpop.f32.mrb[0].mxu0
      %v2533 = vadd.f32 %v2153, %v2532
      %v2534 = vpop.f32.mrb[0].mxu0
      %2535 = vmatprep.mubr.f32.mxu0 0.0
      %2536 = vmatmul.mubr.f32.gmra.mrb[0].mxu0 %v2250
      %v2537 = vpop.f32.mrb[0].mxu0
      %v2538 = vadd.f32 %v2154, %v2537
      %v2539 = vpop.f32.mrb[0].mxu0
      %2540 = vmatprep.mubr.f32.mxu0 0.0
      %2541 = vmatmul.mubr.f32.gmra.mrb[0].mxu0 %v2253
      %v2542 = vpop.f32.mrb[0].mxu0
      %v2543 = vadd.f32 %v2155, %v2542
      %v2544 = vpop.f32.mrb[0].mxu0
      %2545 = vmatprep.mubr.f32.mxu0 0.0
      %2546 = vmatmul.mubr.f32.gmra.mrb[0].mxu0 %v2256
      %v2547 = vpop.f32.mrb[0].mxu0
      %v2548 = vadd.f32 %v2156, %v2547
      %v2549 = vpop.f32.mrb[0].mxu0
      %2550 = vmatprep.mubr.f32.mxu0 0.0
      %2551 = vmatmul.mubr.f32.gmra.mrb[0].mxu0 %v2259
      %v2552 = vpop.f32.mrb[0].mxu0
      %v2553 = vadd.f32 %v2157, %v2552
      %v2554 = vpop.f32.mrb[0].mxu0
      %2555 = vmatprep.mubr.f32.mxu0 0.0
      %2556 = vmatmul.mubr.f32.gmra.mrb[0].mxu0 %v2262
      %v2557 = vpop.f32.mrb[0].mxu0
      %v2558 = vadd.f32 %v2158, %v2557
      %v2559 = vpop.f32.mrb[0].mxu0
      %2560 = vmatprep.mubr.f32.mxu0 0.0
      %2561 = vmatmul.mubr.f32.gmra.mrb[0].mxu0 %v2265
      %v2562 = vpop.f32.mrb[0].mxu0
      %v2563 = vadd.f32 %v2159, %v2562
      %v2564 = vpop.f32.mrb[0].mxu0
      %2565 = vmatprep.mubr.f32.mxu0 0.0
      %2566 = vmatmul.mubr.f32.gmra.mrb[0].mxu0 %v2268
      %v2567 = vpop.f32.mrb[0].mxu0
      %v2568 = vadd.f32 %v2160, %v2567
      %v2569 = vpop.f32.mrb[0].mxu0
      %2570 = vmatprep.mubr.f32.mxu0 0.0
      %2571 = vmatmul.mubr.f32.gmra.mrb[0].mxu0 %v2271
      %v2572 = vpop.f32.mrb[0].mxu0
      %v2573 = vadd.f32 %v2161, %v2572
      %v2574 = vpop.f32.mrb[0].mxu0
      %2575 = vmatprep.mubr.f32.mxu0 0.0
      %2576 = vmatmul.mubr.f32.gmra.mrb[0].mxu0 %v2274
      %v2577 = vpop.f32.mrb[0].mxu0
      %v2578 = vadd.f32 %v2162, %v2577
      %v2579 = vpop.f32.mrb[0].mxu0
      %2580 = vmatprep.mubr.f32.mxu0 0.0
      %2581 = vmatmul.mubr.f32.gmra.mrb[0].mxu0 %v2277
      %v2582 = vpop.f32.mrb[0].mxu0
      %v2583 = vadd.f32 %v2163, %v2582
      %v2584 = vpop.f32.mrb[0].mxu0
      %2585 = vmatprep.mubr.f32.mxu0 0.0
      %2586 = vmatmul.mubr.f32.gmra.mrb[0].mxu0 %v2280
      %v2587 = vpop.f32.mrb[0].mxu0
      %v2588 = vadd.f32 %v2164, %v2587
      %v2589 = vpop.f32.mrb[0].mxu0
      %2590 = vmatprep.mubr.f32.mxu0 0.0
      %2591 = vmatmul.mubr.f32.gmra.mrb[0].mxu0 %v2283
      %v2592 = vpop.f32.mrb[0].mxu0
      %v2593 = vadd.f32 %v2165, %v2592
      %v2594 = vpop.f32.mrb[0].mxu0
      %2595 = vmatprep.mubr.f32.mxu0 0.0
      %2596 = vmatmul.mubr.f32.gmra.mrb[0].mxu0 %v2286
      %v2597 = vpop.f32.mrb[0].mxu0
      %v2598 = vadd.f32 %v2166, %v2597
      %v2599 = vpop.f32.mrb[0].mxu0
      %2600 = vmatprep.mubr.f32.mxu0 0.0
      %2601 = vmatmul.mubr.f32.gmra.mrb[0].mxu0 %v2289
      %v2602 = vpop.f32.mrb[0].mxu0
      %v2603 = vadd.f32 %v2167, %v2602
      %v2604 = vpop.f32.mrb[0].mxu0
      %2605 = vmatprep.mubr.f32.mxu0 0.0
      %2606 = vmatmul.mubr.f32.gmra.mrb[0].mxu0 %v2292
      %v2607 = vpop.f32.mrb[0].mxu0
      %v2608 = vadd.f32 %v2168, %v2607
      %v2609 = vpop.f32.mrb[0].mxu0
      %2610 = vmatprep.mubr.f32.mxu0 0.0
      %2611 = vmatmul.mubr.f32.gmra.mrb[0].mxu0 %v2295
      %v2612 = vpop.f32.mrb[0].mxu0
      %v2613 = vadd.f32 %v2169, %v2612
      %v2614 = vpop.f32.mrb[0].mxu0
      %2615 = vmatprep.mubr.f32.mxu0 0.0
      %2616 = vmatmul.mubr.f32.gmra.mrb[0].mxu0 %v2298
      %v2617 = vpop.f32.mrb[0].mxu0
      %v2618 = vadd.f32 %v2170, %v2617
      %v2619 = vpop.f32.mrb[0].mxu0
      %2620 = vmatprep.mubr.f32.mxu0 0.0
      %2621 = vmatmul.mubr.f32.gmra.mrb[0].mxu0 %v2301
      %v2622 = vpop.f32.mrb[0].mxu0
      %v2623 = vadd.f32 %v2171, %v2622
      %v2624 = vpop.f32.mrb[0].mxu0
      %2625 = vmatprep.mubr.f32.mxu0 0.0
      %2626 = vmatmul.mubr.f32.gmra.mrb[0].mxu0 %v2304
      %v2627 = vpop.f32.mrb[0].mxu0
      %v2628 = vadd.f32 %v2172, %v2627
      %v2629 = vpop.f32.mrb[0].mxu0
      %2630 = vmatprep.mubr.f32.mxu0 0.0
      %2631 = vmatmul.mubr.f32.gmra.mrb[0].mxu0 %v2307
      %v2632 = vpop.f32.mrb[0].mxu0
      %v2633 = vadd.f32 %v2173, %v2632
      %v2634 = vpop.f32.mrb[0].mxu0
      %2635 = vmatprep.mubr.f32.mxu0 0.0
      %2636 = vmatmul.mubr.f32.gmra.mrb[0].mxu0 %v2310
      %v2637 = vpop.f32.mrb[0].mxu0
      %v2638 = vadd.f32 %v2174, %v2637
      %v2639 = vpop.f32.mrb[0].mxu0
      %2640 = vmatprep.mubr.f32.mxu0 0.0
      %2641 = vmatmul.mubr.f32.gmra.mrb[0].mxu0 %v2313
      %v2642 = vpop.f32.mrb[0].mxu0
      %v2643 = vadd.f32 %v2175, %v2642
      %v2644 = vpop.f32.mrb[0].mxu0
      %2645 = vmatprep.mubr.f32.mxu0 0.0
      %2646 = vmatmul.mubr.f32.gmra.mrb[0].mxu0 %v2316
      %v2647 = vpop.f32.mrb[0].mxu0
      %v2648 = vadd.f32 %v2176, %v2647
      %v2649 = vpop.f32.mrb[0].mxu0
      %2650 = vmatprep.mubr.f32.mxu0 0.0
      %2651 = vmatmul.mubr.f32.gmra.mrb[0].mxu0 %v2319
      %v2652 = vpop.f32.mrb[0].mxu0
      %v2653 = vadd.f32 %v2177, %v2652
      %v2654 = vpop.f32.mrb[0].mxu0
      %2655 = vmatprep.mubr.f32.mxu0 0.0
      %2656 = vmatmul.mubr.f32.gmra.mrb[0].mxu0 %v2322
      %v2657 = vpop.f32.mrb[0].mxu0
      %v2658 = vadd.f32 %v2178, %v2657
      %v2659 = vpop.f32.mrb[0].mxu0
      %2660 = vmatprep.mubr.f32.mxu0 0.0
      %2661 = vmatmul.mubr.f32.gmra.mrb[0].mxu0 %v2325
      %v2662 = vpop.f32.mrb[0].mxu0
      %v2663 = vadd.f32 %v2179, %v2662
      %v2664 = vpop.f32.mrb[0].mxu0
      %2665 = vmatprep.mubr.f32.mxu0 0.0
      %2666 = vmatmul.mubr.f32.gmra.mrb[0].mxu0 %v2328
      %v2667 = vpop.f32.mrb[0].mxu0
      %v2668 = vadd.f32 %v2180, %v2667
      %v2669 = vpop.f32.mrb[0].mxu0
      %2670 = vmatprep.mubr.f32.mxu0 0.0
      %2671 = vmatmul.mubr.f32.gmra.mrb[0].mxu0 %v2331
      %v2672 = vpop.f32.mrb[0].mxu0
      %v2673 = vadd.f32 %v2181, %v2672
      %v2674 = vpop.f32.mrb[0].mxu0
      %2675 = vmatprep.mubr.f32.mxu0 0.0
      %2676 = vmatmul.mubr.f32.gmra.mrb[0].mxu0 %v2334
      %v2677 = vpop.f32.mrb[0].mxu0
      %v2678 = vadd.f32 %v2182, %v2677
      %v2679 = vpop.f32.mrb[0].mxu0
      %2680 = vmatprep.mubr.f32.mxu0 0.0
      %2681 = vmatmul.mubr.f32.gmra.mrb[0].mxu0 %v2337
      %v2682 = vpop.f32.mrb[0].mxu0
      %v2683 = vadd.f32 %v2183, %v2682
      %v2684 = vpop.f32.mrb[0].mxu0
      %2685 = vmatprep.mubr.f32.mxu0 0.0
      %2686 = vmatmul.mubr.f32.gmra.mrb[0].mxu0 %v2340
      %v2687 = vpop.f32.mrb[0].mxu0
      %v2688 = vadd.f32 %v2184, %v2687
      %v2689 = vpop.f32.mrb[0].mxu0
      %2690 = vmatprep.mubr.f32.mxu0 0.0
      %2691 = vmatmul.mubr.f32.gmra.mrb[0].mxu0 %v2343
      %v2692 = vpop.f32.mrb[0].mxu0
      %v2693 = vadd.f32 %v2185, %v2692
      %v2694 = vpop.f32.mrb[0].mxu0
      %2695 = vmatprep.mubr.f32.mxu0 0.0
      %2696 = vmatmul.mubr.f32.gmra.mrb[0].mxu0 %v2346
      %v2697 = vpop.f32.mrb[0].mxu0
      %v2698 = vadd.f32 %v2186, %v2697
      %v2699 = vpop.f32.mrb[0].mxu0
      %2700 = vmatprep.mubr.f32.mxu0 0.0
      %2701 = vmatmul.mubr.f32.gmra.mrb[0].mxu0 %v2349
      %v2702 = vpop.f32.mrb[0].mxu0
      %v2703 = vadd.f32 %v2187, %v2702
      %v2704 = vpop.f32.mrb[0].mxu0
      %2705 = vmatprep.mubr.f32.mxu0 0.0
      %2706 = vmatmul.mubr.f32.gmra.mrb[0].mxu0 %v2352
      %v2707 = vpop.f32.mrb[0].mxu0
      %v2708 = vadd.f32 %v2188, %v2707
      %v2709 = vpop.f32.mrb[0].mxu0
      %2710 = vmatprep.mubr.f32.mxu0 0.0
      %2711 = vmatmul.mubr.f32.gmra.mrb[0].mxu0 %v2355
      %v2712 = vpop.f32.mrb[0].mxu0
      %v2713 = vadd.f32 %v2189, %v2712
      %v2714 = vpop.f32.mrb[0].mxu0
      %2715 = vmatprep.mubr.f32.mxu0 0.0
      %2716 = vmatmul.mubr.f32.gmra.mrb[0].mxu0 %v2358
      %v2717 = vpop.f32.mrb[0].mxu0
      %v2718 = vadd.f32 %v2190, %v2717
      %v2719 = vpop.f32.mrb[0].mxu0
      %2720 = vmatprep.mubr.f32.mxu0 0.0
      %2721 = vmatmul.mubr.f32.gmra.mrb[0].mxu0 %v2361
      %v2722 = vpop.f32.mrb[0].mxu0
      %v2723 = vadd.f32 %v2191, %v2722
      %v2724 = vpop.f32.mrb[0].mxu0
      %2725 = vmatprep.mubr.f32.mxu0 0.0
      %2726 = vmatmul.mubr.f32.gmra.mrb[0].mxu0 %v2364
      %v2727 = vpop.f32.mrb[0].mxu0
      %v2728 = vadd.f32 %v2192, %v2727
      %v2729 = vpop.f32.mrb[0].mxu0
      %2730 = vmatprep.mubr.f32.mxu0 0.0
      %2731 = vmatmul.mubr.f32.gmra.mrb[0].mxu0 %v2367
      %v2732 = vpop.f32.mrb[0].mxu0
      %v2733 = vadd.f32 %v2193, %v2732
      %v2734 = vpop.f32.mrb[0].mxu0
      %2735 = vmatprep.mubr.f32.mxu0 0.0
      %2736 = vmatmul.mubr.f32.gmra.mrb[0].mxu0 %v2370
      %v2737 = vpop.f32.mrb[0].mxu0
      %v2738 = vadd.f32 %v2194, %v2737
      %v2739 = vpop.f32.mrb[0].mxu0
      %2740 = vmatprep.mubr.f32.mxu0 0.0
      %2741 = vmatmul.mubr.f32.gmra.mrb[0].mxu0 %v2373
      %v2742 = vpop.f32.mrb[0].mxu0
      %v2743 = vadd.f32 %v2195, %v2742
      %v2744 = vpop.f32.mrb[0].mxu0
      %2745 = vmatprep.mubr.f32.mxu0 0.0
      %2746 = vmatmul.mubr.f32.gmra.mrb[0].mxu0 %v2376
      %v2747 = vpop.f32.mrb[0].mxu0
      %v2748 = vadd.f32 %v2196, %v2747
      %v2749 = vpop.f32.mrb[0].mxu0
      %2750 = vmatprep.mubr.f32.mxu0 0.0
      %2751 = vmatmul.mubr.f32.gmra.mrb[0].mxu0 %v2379
      %v2752 = vpop.f32.mrb[0].mxu0
      %v2753 = vadd.f32 %v2197, %v2752
      %v2754 = vpop.f32.mrb[0].mxu0
      %2755 = vmatprep.mubr.f32.mxu0 0.0
      %2756 = vmatmul.mubr.f32.gmra.mrb[0].mxu0 %v2382
      %v2757 = vpop.f32.mrb[0].mxu0
      %v2758 = vadd.f32 %v2198, %v2757
      %v2759 = vpop.f32.mrb[0].mxu0
      %2760 = vmatprep.mubr.f32.mxu0 0.0
      %2761 = vmatmul.mubr.f32.gmra.mrb[0].mxu0 %v2385
      %v2762 = vpop.f32.mrb[0].mxu0
      %v2763 = vadd.f32 %v2199, %v2762
      %v2764 = vpop.f32.mrb[0].mxu0
      %2765 = vmatprep.mubr.f32.mxu0 0.0
      %2766 = vmatmul.mubr.f32.gmra.mrb[0].mxu0 %v2388
      %v2767 = vpop.f32.mrb[0].mxu0
      %v2768 = vadd.f32 %v2200, %v2767
      %v2769 = vpop.f32.mrb[0].mxu0
      %2770 = vmatprep.mubr.f32.mxu0 0.0
      %2771 = vmatmul.mubr.f32.gmra.mrb[0].mxu0 %v2391
      %v2772 = vpop.f32.mrb[0].mxu0
      %v2773 = vadd.f32 %v2201, %v2772
      %v2774 = vpop.f32.mrb[0].mxu0
      %2775 = vmatprep.mubr.f32.mxu0 0.0
      %2776 = vmatmul.mubr.f32.gmra.mrb[0].mxu0 %v2394
      %v2777 = vpop.f32.mrb[0].mxu0
      %v2778 = vadd.f32 %v2202, %v2777
      %v2779 = vpop.f32.mrb[0].mxu0
      %2780 = vdwg.mxu0
      %v2781 = vmax.f32 %v2463, 0.0
      %v2782 = vmax.f32 %v2468, 0.0
      %v2783 = vmax.f32 %v2473, 0.0
      %v2784 = vmax.f32 %v2478, 0.0
      %v2785 = vmax.f32 %v2483, 0.0
      %v2786 = vmax.f32 %v2488, 0.0
      %v2787 = vmax.f32 %v2493, 0.0
      %v2788 = vmax.f32 %v2498, 0.0
      %v2789 = vmax.f32 %v2503, 0.0
      %v2790 = vmax.f32 %v2508, 0.0
      %v2791 = vmax.f32 %v2513, 0.0
      %v2792 = vmax.f32 %v2518, 0.0
      %v2793 = vmax.f32 %v2523, 0.0
      %v2794 = vmax.f32 %v2528, 0.0
      %v2795 = vmax.f32 %v2533, 0.0
      %v2796 = vmax.f32 %v2538, 0.0
      %v2797 = vmax.f32 %v2543, 0.0
      %v2798 = vmax.f32 %v2548, 0.0
      %v2799 = vmax.f32 %v2553, 0.0
      %v2800 = vmax.f32 %v2558, 0.0
      %v2801 = vmax.f32 %v2563, 0.0
      %v2802 = vmax.f32 %v2568, 0.0
      %v2803 = vmax.f32 %v2573, 0.0
      %v2804 = vmax.f32 %v2578, 0.0
      %v2805 = vmax.f32 %v2583, 0.0
      %v2806 = vmax.f32 %v2588, 0.0
      %v2807 = vmax.f32 %v2593, 0.0
      %v2808 = vmax.f32 %v2598, 0.0
      %v2809 = vmax.f32 %v2603, 0.0
      %v2810 = vmax.f32 %v2608, 0.0
      %v2811 = vmax.f32 %v2613, 0.0
      %v2812 = vmax.f32 %v2618, 0.0
      %v2813 = vmax.f32 %v2623, 0.0
      %v2814 = vmax.f32 %v2628, 0.0
      %v2815 = vmax.f32 %v2633, 0.0
      %v2816 = vmax.f32 %v2638, 0.0
      %v2817 = vmax.f32 %v2643, 0.0
      %v2818 = vmax.f32 %v2648, 0.0
      %v2819 = vmax.f32 %v2653, 0.0
      %v2820 = vmax.f32 %v2658, 0.0
      %v2821 = vmax.f32 %v2663, 0.0
      %v2822 = vmax.f32 %v2668, 0.0
      %v2823 = vmax.f32 %v2673, 0.0
      %v2824 = vmax.f32 %v2678, 0.0
      %v2825 = vmax.f32 %v2683, 0.0
      %v2826 = vmax.f32 %v2688, 0.0
      %v2827 = vmax.f32 %v2693, 0.0
      %v2828 = vmax.f32 %v2698, 0.0
      %v2829 = vmax.f32 %v2703, 0.0
      %v2830 = vmax.f32 %v2708, 0.0
      %v2831 = vmax.f32 %v2713, 0.0
      %v2832 = vmax.f32 %v2718, 0.0
      %v2833 = vmax.f32 %v2723, 0.0
      %v2834 = vmax.f32 %v2728, 0.0
      %v2835 = vmax.f32 %v2733, 0.0
      %v2836 = vmax.f32 %v2738, 0.0
      %v2837 = vmax.f32 %v2743, 0.0
      %v2838 = vmax.f32 %v2748, 0.0
      %v2839 = vmax.f32 %v2753, 0.0
      %v2840 = vmax.f32 %v2758, 0.0
      %v2841 = vmax.f32 %v2763, 0.0
      %v2842 = vmax.f32 %v2768, 0.0
      %v2843 = vmax.f32 %v2773, 0.0
      %v2844 = vmax.f32 %v2778, 0.0
      %2909 = vrot.lane.b32.xlu0 %v2781, 32
      %v2910 = vpop.permute.xlu0 %2909
      %2911 = vrot.lane.b32.xlu0 %v2782, 32
      %v2912 = vpop.permute.xlu0 %2911
      %2913 = vrot.lane.b32.xlu0 %v2783, 32
      %v2914 = vpop.permute.xlu0 %2913
      %2915 = vrot.lane.b32.xlu0 %v2784, 32
      %v2916 = vpop.permute.xlu0 %2915
      %2917 = vrot.lane.b32.xlu0 %v2785, 32
      %v2918 = vpop.permute.xlu0 %2917
      %2919 = vrot.lane.b32.xlu0 %v2786, 32
      %v2920 = vpop.permute.xlu0 %2919
      %2921 = vrot.lane.b32.xlu0 %v2787, 32
      %v2922 = vpop.permute.xlu0 %2921
      %2923 = vrot.lane.b32.xlu0 %v2788, 32
      %v2924 = vpop.permute.xlu0 %2923
      %2925 = vrot.lane.b32.xlu0 %v2789, 32
      %v2926 = vpop.permute.xlu0 %2925
      %2927 = vrot.lane.b32.xlu0 %v2790, 32
      %v2928 = vpop.permute.xlu0 %2927
      %2929 = vrot.lane.b32.xlu0 %v2791, 32
      %v2930 = vpop.permute.xlu0 %2929
      %2931 = vrot.lane.b32.xlu0 %v2792, 32
      %v2932 = vpop.permute.xlu0 %2931
      %2933 = vrot.lane.b32.xlu0 %v2793, 32
      %v2934 = vpop.permute.xlu0 %2933
      %2935 = vrot.lane.b32.xlu0 %v2794, 32
      %v2936 = vpop.permute.xlu0 %2935
      %2937 = vrot.lane.b32.xlu0 %v2795, 32
      %v2938 = vpop.permute.xlu0 %2937
      %2939 = vrot.lane.b32.xlu0 %v2796, 32
      %v2940 = vpop.permute.xlu0 %2939
      %2941 = vrot.lane.b32.xlu0 %v2797, 32
      %v2942 = vpop.permute.xlu0 %2941
      %2943 = vrot.lane.b32.xlu0 %v2798, 32
      %v2944 = vpop.permute.xlu0 %2943
      %2945 = vrot.lane.b32.xlu0 %v2799, 32
      %v2946 = vpop.permute.xlu0 %2945
      %2947 = vrot.lane.b32.xlu0 %v2800, 32
      %v2948 = vpop.permute.xlu0 %2947
      %2949 = vrot.lane.b32.xlu0 %v2801, 32
      %v2950 = vpop.permute.xlu0 %2949
      %2951 = vrot.lane.b32.xlu0 %v2802, 32
      %v2952 = vpop.permute.xlu0 %2951
      %2953 = vrot.lane.b32.xlu0 %v2803, 32
      %v2954 = vpop.permute.xlu0 %2953
      %2955 = vrot.lane.b32.xlu0 %v2804, 32
      %v2956 = vpop.permute.xlu0 %2955
      %2957 = vrot.lane.b32.xlu0 %v2805, 32
      %v2958 = vpop.permute.xlu0 %2957
      %2959 = vrot.lane.b32.xlu0 %v2806, 32
      %v2960 = vpop.permute.xlu0 %2959
      %2961 = vrot.lane.b32.xlu0 %v2807, 32
      %v2962 = vpop.permute.xlu0 %2961
      %2963 = vrot.lane.b32.xlu0 %v2808, 32
      %v2964 = vpop.permute.xlu0 %2963
      %2965 = vrot.lane.b32.xlu0 %v2809, 32
      %v2966 = vpop.permute.xlu0 %2965
      %2967 = vrot.lane.b32.xlu0 %v2810, 32
      %v2968 = vpop.permute.xlu0 %2967
      %2969 = vrot.lane.b32.xlu0 %v2811, 32
      %v2970 = vpop.permute.xlu0 %2969
      %2971 = vrot.lane.b32.xlu0 %v2812, 32
      %v2972 = vpop.permute.xlu0 %2971
      %2973 = vrot.lane.b32.xlu0 %v2813, 32
      %v2974 = vpop.permute.xlu0 %2973
      %2975 = vrot.lane.b32.xlu0 %v2814, 32
      %v2976 = vpop.permute.xlu0 %2975
      %2977 = vrot.lane.b32.xlu0 %v2815, 32
      %v2978 = vpop.permute.xlu0 %2977
      %2979 = vrot.lane.b32.xlu0 %v2816, 32
      %v2980 = vpop.permute.xlu0 %2979
      %2981 = vrot.lane.b32.xlu0 %v2817, 32
      %v2982 = vpop.permute.xlu0 %2981
      %2983 = vrot.lane.b32.xlu0 %v2818, 32
      %v2984 = vpop.permute.xlu0 %2983
      %2985 = vrot.lane.b32.xlu0 %v2819, 32
      %v2986 = vpop.permute.xlu0 %2985
      %2987 = vrot.lane.b32.xlu0 %v2820, 32
      %v2988 = vpop.permute.xlu0 %2987
      %2989 = vrot.lane.b32.xlu0 %v2821, 32
      %v2990 = vpop.permute.xlu0 %2989
      %2991 = vrot.lane.b32.xlu0 %v2822, 32
      %v2992 = vpop.permute.xlu0 %2991
      %2993 = vrot.lane.b32.xlu0 %v2823, 32
      %v2994 = vpop.permute.xlu0 %2993
      %2995 = vrot.lane.b32.xlu0 %v2824, 32
      %v2996 = vpop.permute.xlu0 %2995
      %2997 = vrot.lane.b32.xlu0 %v2825, 32
      %v2998 = vpop.permute.xlu0 %2997
      %2999 = vrot.lane.b32.xlu0 %v2826, 32
      %v3000 = vpop.permute.xlu0 %2999
      %3001 = vrot.lane.b32.xlu0 %v2827, 32
      %v3002 = vpop.permute.xlu0 %3001
      %3003 = vrot.lane.b32.xlu0 %v2828, 32
      %v3004 = vpop.permute.xlu0 %3003
      %3005 = vrot.lane.b32.xlu0 %v2829, 32
      %v3006 = vpop.permute.xlu0 %3005
      %3007 = vrot.lane.b32.xlu0 %v2830, 32
      %v3008 = vpop.permute.xlu0 %3007
      %3009 = vrot.lane.b32.xlu0 %v2831, 32
      %v3010 = vpop.permute.xlu0 %3009
      %3011 = vrot.lane.b32.xlu0 %v2832, 32
      %v3012 = vpop.permute.xlu0 %3011
      %3013 = vrot.lane.b32.xlu0 %v2833, 32
      %v3014 = vpop.permute.xlu0 %3013
      %3015 = vrot.lane.b32.xlu0 %v2834, 32
      %v3016 = vpop.permute.xlu0 %3015
      %3017 = vrot.lane.b32.xlu0 %v2835, 32
      %v3018 = vpop.permute.xlu0 %3017
      %3019 = vrot.lane.b32.xlu0 %v2836, 32
      %v3020 = vpop.permute.xlu0 %3019
      %3021 = vrot.lane.b32.xlu0 %v2837, 32
      %v3022 = vpop.permute.xlu0 %3021
      %3023 = vrot.lane.b32.xlu0 %v2838, 32
      %v3024 = vpop.permute.xlu0 %3023
      %3025 = vrot.lane.b32.xlu0 %v2839, 32
      %v3026 = vpop.permute.xlu0 %3025
      %3027 = vrot.lane.b32.xlu0 %v2840, 32
      %v3028 = vpop.permute.xlu0 %3027
      %3029 = vrot.lane.b32.xlu0 %v2841, 32
      %v3030 = vpop.permute.xlu0 %3029
      %3031 = vrot.lane.b32.xlu0 %v2842, 32
      %v3032 = vpop.permute.xlu0 %3031
      %3033 = vrot.lane.b32.xlu0 %v2843, 32
      %v3034 = vpop.permute.xlu0 %3033
      %3035 = vrot.lane.b32.xlu0 %v2844, 32
      %v3036 = vpop.permute.xlu0 %3035
      %v3101 = vsel %vm1861, %v1541, %v2910
      %v3102 = vsel %vm1861, %v1542, %v2912
      %v3103 = vsel %vm1861, %v1543, %v2914
      %v3104 = vsel %vm1861, %v1544, %v2916
      %v3105 = vsel %vm1861, %v1545, %v2918
      %v3106 = vsel %vm1861, %v1546, %v2920
      %v3107 = vsel %vm1861, %v1547, %v2922
      %v3108 = vsel %vm1861, %v1548, %v2924
      %v3109 = vsel %vm1861, %v1549, %v2926
      %v3110 = vsel %vm1861, %v1550, %v2928
      %v3111 = vsel %vm1861, %v1551, %v2930
      %v3112 = vsel %vm1861, %v1552, %v2932
      %v3113 = vsel %vm1861, %v1553, %v2934
      %v3114 = vsel %vm1861, %v1554, %v2936
      %v3115 = vsel %vm1861, %v1555, %v2938
      %v3116 = vsel %vm1861, %v1556, %v2940
      %v3117 = vsel %vm1861, %v1557, %v2942
      %v3118 = vsel %vm1861, %v1558, %v2944
      %v3119 = vsel %vm1861, %v1559, %v2946
      %v3120 = vsel %vm1861, %v1560, %v2948
      %v3121 = vsel %vm1861, %v1561, %v2950
      %v3122 = vsel %vm1861, %v1562, %v2952
      %v3123 = vsel %vm1861, %v1563, %v2954
      %v3124 = vsel %vm1861, %v1564, %v2956
      %v3125 = vsel %vm1861, %v1565, %v2958
      %v3126 = vsel %vm1861, %v1566, %v2960
      %v3127 = vsel %vm1861, %v1567, %v2962
      %v3128 = vsel %vm1861, %v1568, %v2964
      %v3129 = vsel %vm1861, %v1569, %v2966
      %v3130 = vsel %vm1861, %v1570, %v2968
      %v3131 = vsel %vm1861, %v1571, %v2970
      %v3132 = vsel %vm1861, %v1572, %v2972
      %v3133 = vsel %vm1861, %v1573, %v2974
      %v3134 = vsel %vm1861, %v1574, %v2976
      %v3135 = vsel %vm1861, %v1575, %v2978
      %v3136 = vsel %vm1861, %v1576, %v2980
      %v3137 = vsel %vm1861, %v1577, %v2982
      %v3138 = vsel %vm1861, %v1578, %v2984
      %v3139 = vsel %vm1861, %v1579, %v2986
      %v3140 = vsel %vm1861, %v1580, %v2988
      %v3141 = vsel %vm1861, %v1581, %v2990
      %v3142 = vsel %vm1861, %v1582, %v2992
      %v3143 = vsel %vm1861, %v1583, %v2994
      %v3144 = vsel %vm1861, %v1584, %v2996
      %v3145 = vsel %vm1861, %v1585, %v2998
      %v3146 = vsel %vm1861, %v1586, %v3000
      %v3147 = vsel %vm1861, %v1587, %v3002
      %v3148 = vsel %vm1861, %v1588, %v3004
      %v3149 = vsel %vm1861, %v1589, %v3006
      %v3150 = vsel %vm1861, %v1590, %v3008
      %v3151 = vsel %vm1861, %v1591, %v3010
      %v3152 = vsel %vm1861, %v1592, %v3012
      %v3153 = vsel %vm1861, %v1593, %v3014
      %v3154 = vsel %vm1861, %v1594, %v3016
      %v3155 = vsel %vm1861, %v1595, %v3018
      %v3156 = vsel %vm1861, %v1596, %v3020
      %v3157 = vsel %vm1861, %v1597, %v3022
      %v3158 = vsel %vm1861, %v1598, %v3024
      %v3159 = vsel %vm1861, %v1599, %v3026
      %v3160 = vsel %vm1861, %v1600, %v3028
      %v3161 = vsel %vm1861, %v1601, %v3030
      %v3162 = vsel %vm1861, %v1602, %v3032
      %v3163 = vsel %vm1861, %v1603, %v3034
      %v3164 = vsel %vm1861, %v1604, %v3036
      %v3165 = vld [vmem:[%s7] sm:$0xff]
      %v3166 = vld [vmem:[%s7 + $0x8] sm:$0xff]
      %v3167 = vld [vmem:[%s7 + $0x10] sm:$0xff]
      %v3168 = vld [vmem:[%s7 + $0x18] sm:$0xff]
      %v3169 = vld [vmem:[%s7 + $0x20] sm:$0xff]
      %v3170 = vld [vmem:[%s7 + $0x28] sm:$0xff]
      %v3171 = vld [vmem:[%s7 + $0x30] sm:$0xff]
      %v3172 = vld [vmem:[%s7 + $0x38] sm:$0xff]
      %v3173 = vld [vmem:[%s4] sm:$0x7]
      %v3174 = vlaneseq
      %v3175 = vshrl.u32 %v3174, 7
      %v3176 = vsub.s32 0, %v3175
      %v3177 = vrot.slane %v3173, %v3176
      %v3178 = vmul.f32 %v431, %v3177
      %v3179 = vmul.f32 %v436, %v3177
      %v3180 = vmul.f32 %v441, %v3177
      %v3181 = vmul.f32 %v446, %v3177
      %v3182 = vmul.f32 %v451, %v3177
      %v3183 = vmul.f32 %v456, %v3177
      %v3184 = vmul.f32 %v461, %v3177
      %v3185 = vmul.f32 %v466, %v3177
      %v3186 = vmul.f32 %v471, %v3177
      %v3187 = vmul.f32 %v476, %v3177
      %v3188 = vmul.f32 %v481, %v3177
      %v3189 = vmul.f32 %v486, %v3177
      %v3190 = vmul.f32 %v491, %v3177
      %v3191 = vmul.f32 %v496, %v3177
      %v3192 = vmul.f32 %v501, %v3177
      %v3193 = vmul.f32 %v506, %v3177
      %v3194 = vmul.f32 %v511, %v3177
      %v3195 = vmul.f32 %v516, %v3177
      %v3196 = vmul.f32 %v521, %v3177
      %v3197 = vmul.f32 %v526, %v3177
      %v3198 = vmul.f32 %v531, %v3177
      %v3199 = vmul.f32 %v536, %v3177
      %v3200 = vmul.f32 %v541, %v3177
      %v3201 = vmul.f32 %v546, %v3177
      %v3202 = vmul.f32 %v551, %v3177
      %v3203 = vmul.f32 %v556, %v3177
      %v3204 = vmul.f32 %v561, %v3177
      %v3205 = vmul.f32 %v566, %v3177
      %v3206 = vmul.f32 %v571, %v3177
      %v3207 = vmul.f32 %v576, %v3177
      %v3208 = vmul.f32 %v581, %v3177
      %v3209 = vmul.f32 %v586, %v3177
      %v3210 = vmul.f32 %v591, %v3177
      %v3211 = vmul.f32 %v596, %v3177
      %v3212 = vmul.f32 %v601, %v3177
      %v3213 = vmul.f32 %v606, %v3177
      %v3214 = vmul.f32 %v611, %v3177
      %v3215 = vmul.f32 %v616, %v3177
      %v3216 = vmul.f32 %v621, %v3177
      %v3217 = vmul.f32 %v626, %v3177
      %v3218 = vmul.f32 %v631, %v3177
      %v3219 = vmul.f32 %v636, %v3177
      %v3220 = vmul.f32 %v641, %v3177
      %v3221 = vmul.f32 %v646, %v3177
      %v3222 = vmul.f32 %v651, %v3177
      %v3223 = vmul.f32 %v656, %v3177
      %v3224 = vmul.f32 %v661, %v3177
      %v3225 = vmul.f32 %v666, %v3177
      %v3226 = vmul.f32 %v671, %v3177
      %v3227 = vmul.f32 %v676, %v3177
      %v3228 = vmul.f32 %v681, %v3177
      %v3229 = vmul.f32 %v686, %v3177
      %v3230 = vmul.f32 %v691, %v3177
      %v3231 = vmul.f32 %v696, %v3177
      %v3232 = vmul.f32 %v701, %v3177
      %v3233 = vmul.f32 %v706, %v3177
      %v3234 = vmul.f32 %v711, %v3177
      %v3235 = vmul.f32 %v716, %v3177
      %v3236 = vmul.f32 %v721, %v3177
      %v3237 = vmul.f32 %v726, %v3177
      %v3238 = vmul.f32 %v731, %v3177
      %v3239 = vmul.f32 %v736, %v3177
      %v3240 = vmul.f32 %v741, %v3177
      %v3241 = vmul.f32 %v746, %v3177
      %v3242 = vlaneseq
      %v3243 = vshrl.u32 %v3242, 7
      %v3244 = vsub.s32 2, %v3243
      %v3245 = vrot.slane %v3173, %v3244
      %v3246 = vadd.f32 %v3245, %v3178
      %v3247 = vadd.f32 %v3245, %v3179
      %v3248 = vadd.f32 %v3245, %v3180
      %v3249 = vadd.f32 %v3245, %v3181
      %v3250 = vadd.f32 %v3245, %v3182
      %v3251 = vadd.f32 %v3245, %v3183
      %v3252 = vadd.f32 %v3245, %v3184
      %v3253 = vadd.f32 %v3245, %v3185
      %v3254 = vadd.f32 %v3245, %v3186
      %v3255 = vadd.f32 %v3245, %v3187
      %v3256 = vadd.f32 %v3245, %v3188
      %v3257 = vadd.f32 %v3245, %v3189
      %v3258 = vadd.f32 %v3245, %v3190
      %v3259 = vadd.f32 %v3245, %v3191
      %v3260 = vadd.f32 %v3245, %v3192
      %v3261 = vadd.f32 %v3245, %v3193
      %v3262 = vadd.f32 %v3245, %v3194
      %v3263 = vadd.f32 %v3245, %v3195
      %v3264 = vadd.f32 %v3245, %v3196
      %v3265 = vadd.f32 %v3245, %v3197
      %v3266 = vadd.f32 %v3245, %v3198
      %v3267 = vadd.f32 %v3245, %v3199
      %v3268 = vadd.f32 %v3245, %v3200
      %v3269 = vadd.f32 %v3245, %v3201
      %v3270 = vadd.f32 %v3245, %v3202
      %v3271 = vadd.f32 %v3245, %v3203
      %v3272 = vadd.f32 %v3245, %v3204
      %v3273 = vadd.f32 %v3245, %v3205
      %v3274 = vadd.f32 %v3245, %v3206
      %v3275 = vadd.f32 %v3245, %v3207
      %v3276 = vadd.f32 %v3245, %v3208
      %v3277 = vadd.f32 %v3245, %v3209
      %v3278 = vadd.f32 %v3245, %v3210
      %v3279 = vadd.f32 %v3245, %v3211
      %v3280 = vadd.f32 %v3245, %v3212
      %v3281 = vadd.f32 %v3245, %v3213
      %v3282 = vadd.f32 %v3245, %v3214
      %v3283 = vadd.f32 %v3245, %v3215
      %v3284 = vadd.f32 %v3245, %v3216
      %v3285 = vadd.f32 %v3245, %v3217
      %v3286 = vadd.f32 %v3245, %v3218
      %v3287 = vadd.f32 %v3245, %v3219
      %v3288 = vadd.f32 %v3245, %v3220
      %v3289 = vadd.f32 %v3245, %v3221
      %v3290 = vadd.f32 %v3245, %v3222
      %v3291 = vadd.f32 %v3245, %v3223
      %v3292 = vadd.f32 %v3245, %v3224
      %v3293 = vadd.f32 %v3245, %v3225
      %v3294 = vadd.f32 %v3245, %v3226
      %v3295 = vadd.f32 %v3245, %v3227
      %v3296 = vadd.f32 %v3245, %v3228
      %v3297 = vadd.f32 %v3245, %v3229
      %v3298 = vadd.f32 %v3245, %v3230
      %v3299 = vadd.f32 %v3245, %v3231
      %v3300 = vadd.f32 %v3245, %v3232
      %v3301 = vadd.f32 %v3245, %v3233
      %v3302 = vadd.f32 %v3245, %v3234
      %v3303 = vadd.f32 %v3245, %v3235
      %v3304 = vadd.f32 %v3245, %v3236
      %v3305 = vadd.f32 %v3245, %v3237
      %v3306 = vadd.f32 %v3245, %v3238
      %v3307 = vadd.f32 %v3245, %v3239
      %v3308 = vadd.f32 %v3245, %v3240
      %v3309 = vadd.f32 %v3245, %v3241
      %v3310 = vlaneseq
      %v3311 = vshrl.u32 %v3310, 7
      %v3312 = vsub.s32 1, %v3311
      %v3313 = vrot.slane %v3173, %v3312
      %v3314 = vmul.f32 %v886, %v3313
      %v3315 = vmul.f32 %v890, %v3313
      %v3316 = vmul.f32 %v894, %v3313
      %v3317 = vmul.f32 %v898, %v3313
      %v3318 = vmul.f32 %v902, %v3313
      %v3319 = vmul.f32 %v906, %v3313
      %v3320 = vmul.f32 %v910, %v3313
      %v3321 = vmul.f32 %v914, %v3313
      %v3322 = vmul.f32 %v918, %v3313
      %v3323 = vmul.f32 %v922, %v3313
      %v3324 = vmul.f32 %v926, %v3313
      %v3325 = vmul.f32 %v930, %v3313
      %v3326 = vmul.f32 %v934, %v3313
      %v3327 = vmul.f32 %v938, %v3313
      %v3328 = vmul.f32 %v942, %v3313
      %v3329 = vmul.f32 %v946, %v3313
      %v3330 = vmul.f32 %v950, %v3313
      %v3331 = vmul.f32 %v954, %v3313
      %v3332 = vmul.f32 %v958, %v3313
      %v3333 = vmul.f32 %v962, %v3313
      %v3334 = vmul.f32 %v966, %v3313
      %v3335 = vmul.f32 %v970, %v3313
      %v3336 = vmul.f32 %v974, %v3313
      %v3337 = vmul.f32 %v978, %v3313
      %v3338 = vmul.f32 %v982, %v3313
      %v3339 = vmul.f32 %v986, %v3313
      %v3340 = vmul.f32 %v990, %v3313
      %v3341 = vmul.f32 %v994, %v3313
      %v3342 = vmul.f32 %v998, %v3313
      %v3343 = vmul.f32 %v1002, %v3313
      %v3344 = vmul.f32 %v1006, %v3313
      %v3345 = vmul.f32 %v1010, %v3313
      %v3346 = vmul.f32 %v1014, %v3313
      %v3347 = vmul.f32 %v1018, %v3313
      %v3348 = vmul.f32 %v1022, %v3313
      %v3349 = vmul.f32 %v1026, %v3313
      %v3350 = vmul.f32 %v1030, %v3313
      %v3351 = vmul.f32 %v1034, %v3313
      %v3352 = vmul.f32 %v1038, %v3313
      %v3353 = vmul.f32 %v1042, %v3313
      %v3354 = vmul.f32 %v1046, %v3313
      %v3355 = vmul.f32 %v1050, %v3313
      %v3356 = vmul.f32 %v1054, %v3313
      %v3357 = vmul.f32 %v1058, %v3313
      %v3358 = vmul.f32 %v1062, %v3313
      %v3359 = vmul.f32 %v1066, %v3313
      %v3360 = vmul.f32 %v1070, %v3313
      %v3361 = vmul.f32 %v1074, %v3313
      %v3362 = vmul.f32 %v1078, %v3313
      %v3363 = vmul.f32 %v1082, %v3313
      %v3364 = vmul.f32 %v1086, %v3313
      %v3365 = vmul.f32 %v1090, %v3313
      %v3366 = vmul.f32 %v1094, %v3313
      %v3367 = vmul.f32 %v1098, %v3313
      %v3368 = vmul.f32 %v1102, %v3313
      %v3369 = vmul.f32 %v1106, %v3313
      %v3370 = vmul.f32 %v1110, %v3313
      %v3371 = vmul.f32 %v1114, %v3313
      %v3372 = vmul.f32 %v1118, %v3313
      %v3373 = vmul.f32 %v1122, %v3313
      %v3374 = vmul.f32 %v1126, %v3313
      %v3375 = vmul.f32 %v1130, %v3313
      %v3376 = vmul.f32 %v1134, %v3313
      %v3377 = vmul.f32 %v1138, %v3313
      %v3378 = vadd.f32 %v3246, %v3314
      %v3379 = vadd.f32 %v3247, %v3315
      %v3380 = vadd.f32 %v3248, %v3316
      %v3381 = vadd.f32 %v3249, %v3317
      %v3382 = vadd.f32 %v3250, %v3318
      %v3383 = vadd.f32 %v3251, %v3319
      %v3384 = vadd.f32 %v3252, %v3320
      %v3385 = vadd.f32 %v3253, %v3321
      %v3386 = vadd.f32 %v3254, %v3322
      %v3387 = vadd.f32 %v3255, %v3323
      %v3388 = vadd.f32 %v3256, %v3324
      %v3389 = vadd.f32 %v3257, %v3325
      %v3390 = vadd.f32 %v3258, %v3326
      %v3391 = vadd.f32 %v3259, %v3327
      %v3392 = vadd.f32 %v3260, %v3328
      %v3393 = vadd.f32 %v3261, %v3329
      %v3394 = vadd.f32 %v3262, %v3330
      %v3395 = vadd.f32 %v3263, %v3331
      %v3396 = vadd.f32 %v3264, %v3332
      %v3397 = vadd.f32 %v3265, %v3333
      %v3398 = vadd.f32 %v3266, %v3334
      %v3399 = vadd.f32 %v3267, %v3335
      %v3400 = vadd.f32 %v3268, %v3336
      %v3401 = vadd.f32 %v3269, %v3337
      %v3402 = vadd.f32 %v3270, %v3338
      %v3403 = vadd.f32 %v3271, %v3339
      %v3404 = vadd.f32 %v3272, %v3340
      %v3405 = vadd.f32 %v3273, %v3341
      %v3406 = vadd.f32 %v3274, %v3342
      %v3407 = vadd.f32 %v3275, %v3343
      %v3408 = vadd.f32 %v3276, %v3344
      %v3409 = vadd.f32 %v3277, %v3345
      %v3410 = vadd.f32 %v3278, %v3346
      %v3411 = vadd.f32 %v3279, %v3347
      %v3412 = vadd.f32 %v3280, %v3348
      %v3413 = vadd.f32 %v3281, %v3349
      %v3414 = vadd.f32 %v3282, %v3350
      %v3415 = vadd.f32 %v3283, %v3351
      %v3416 = vadd.f32 %v3284, %v3352
      %v3417 = vadd.f32 %v3285, %v3353
      %v3418 = vadd.f32 %v3286, %v3354
      %v3419 = vadd.f32 %v3287, %v3355
      %v3420 = vadd.f32 %v3288, %v3356
      %v3421 = vadd.f32 %v3289, %v3357
      %v3422 = vadd.f32 %v3290, %v3358
      %v3423 = vadd.f32 %v3291, %v3359
      %v3424 = vadd.f32 %v3292, %v3360
      %v3425 = vadd.f32 %v3293, %v3361
      %v3426 = vadd.f32 %v3294, %v3362
      %v3427 = vadd.f32 %v3295, %v3363
      %v3428 = vadd.f32 %v3296, %v3364
      %v3429 = vadd.f32 %v3297, %v3365
      %v3430 = vadd.f32 %v3298, %v3366
      %v3431 = vadd.f32 %v3299, %v3367
      %v3432 = vadd.f32 %v3300, %v3368
      %v3433 = vadd.f32 %v3301, %v3369
      %v3434 = vadd.f32 %v3302, %v3370
      %v3435 = vadd.f32 %v3303, %v3371
      %v3436 = vadd.f32 %v3304, %v3372
      %v3437 = vadd.f32 %v3305, %v3373
      %v3438 = vadd.f32 %v3306, %v3374
      %v3439 = vadd.f32 %v3307, %v3375
      %v3440 = vadd.f32 %v3308, %v3376
      %v3441 = vadd.f32 %v3309, %v3377
      %v3443 = vsel %vm2203, %v3101, 0
      %v3446 = vsel %vm2203, %v3102, 0
      %v3449 = vsel %vm2203, %v3103, 0
      %v3452 = vsel %vm2203, %v3104, 0
      %v3455 = vsel %vm2203, %v3105, 0
      %v3458 = vsel %vm2203, %v3106, 0
      %v3461 = vsel %vm2203, %v3107, 0
      %v3464 = vsel %vm2203, %v3108, 0
      %v3467 = vsel %vm2203, %v3109, 0
      %v3470 = vsel %vm2203, %v3110, 0
      %v3473 = vsel %vm2203, %v3111, 0
      %v3476 = vsel %vm2203, %v3112, 0
      %v3479 = vsel %vm2203, %v3113, 0
      %v3482 = vsel %vm2203, %v3114, 0
      %v3485 = vsel %vm2203, %v3115, 0
      %v3488 = vsel %vm2203, %v3116, 0
      %v3491 = vsel %vm2203, %v3117, 0
      %v3494 = vsel %vm2203, %v3118, 0
      %v3497 = vsel %vm2203, %v3119, 0
      %v3500 = vsel %vm2203, %v3120, 0
      %v3503 = vsel %vm2203, %v3121, 0
      %v3506 = vsel %vm2203, %v3122, 0
      %v3509 = vsel %vm2203, %v3123, 0
      %v3512 = vsel %vm2203, %v3124, 0
      %v3515 = vsel %vm2203, %v3125, 0
      %v3518 = vsel %vm2203, %v3126, 0
      %v3521 = vsel %vm2203, %v3127, 0
      %v3524 = vsel %vm2203, %v3128, 0
      %v3527 = vsel %vm2203, %v3129, 0
      %v3530 = vsel %vm2203, %v3130, 0
      %v3533 = vsel %vm2203, %v3131, 0
      %v3536 = vsel %vm2203, %v3132, 0
      %v3539 = vsel %vm2203, %v3133, 0
      %v3542 = vsel %vm2203, %v3134, 0
      %v3545 = vsel %vm2203, %v3135, 0
      %v3548 = vsel %vm2203, %v3136, 0
      %v3551 = vsel %vm2203, %v3137, 0
      %v3554 = vsel %vm2203, %v3138, 0
      %v3557 = vsel %vm2203, %v3139, 0
      %v3560 = vsel %vm2203, %v3140, 0
      %v3563 = vsel %vm2203, %v3141, 0
      %v3566 = vsel %vm2203, %v3142, 0
      %v3569 = vsel %vm2203, %v3143, 0
      %v3572 = vsel %vm2203, %v3144, 0
      %v3575 = vsel %vm2203, %v3145, 0
      %v3578 = vsel %vm2203, %v3146, 0
      %v3581 = vsel %vm2203, %v3147, 0
      %v3584 = vsel %vm2203, %v3148, 0
      %v3587 = vsel %vm2203, %v3149, 0
      %v3590 = vsel %vm2203, %v3150, 0
      %v3593 = vsel %vm2203, %v3151, 0
      %v3596 = vsel %vm2203, %v3152, 0
      %v3599 = vsel %vm2203, %v3153, 0
      %v3602 = vsel %vm2203, %v3154, 0
      %v3605 = vsel %vm2203, %v3155, 0
      %v3608 = vsel %vm2203, %v3156, 0
      %v3611 = vsel %vm2203, %v3157, 0
      %v3614 = vsel %vm2203, %v3158, 0
      %v3617 = vsel %vm2203, %v3159, 0
      %v3620 = vsel %vm2203, %v3160, 0
      %v3623 = vsel %vm2203, %v3161, 0
      %v3626 = vsel %vm2203, %v3162, 0
      %v3629 = vsel %vm2203, %v3163, 0
      %v3632 = vsel %vm2203, %v3164, 0
      %3634 = vmatprep.subr.mxu0 0.0
      %3635 = vmatpush1.msra.mxu0 %v3165
      %3636 = vmatprep.subr.mxu0 0.0
      %3637 = vmatpush1.msra.mxu0 %v3166
      %3638 = vmatprep.subr.mxu0 0.0
      %3639 = vmatpush1.msra.mxu0 %v3167
      %3640 = vmatprep.subr.mxu0 0.0
      %3641 = vmatpush1.msra.mxu0 %v3168
      %3642 = vmatprep.subr.mxu0 0.0
      %3643 = vmatpush1.msra.mxu0 %v3169
      %3644 = vmatprep.subr.mxu0 0.0
      %3645 = vmatpush1.msra.mxu0 %v3170
      %3646 = vmatprep.subr.mxu0 0.0
      %3647 = vmatpush1.msra.mxu0 %v3171
      %3648 = vmatprep.subr.mxu0 0.0
      %3649 = vmatpush1.msra.mxu0 %v3172
      %3650 = vmatprep.subr.mxu0 0.0
      %3651 = vmatpush1.msra.mxu0 0.0
      %3652 = vmatprep.subr.mxu0 0.0
      %3653 = vmatpush1.msra.mxu0 0.0
      %3654 = vmatprep.subr.mxu0 0.0
      %3655 = vmatpush1.msra.mxu0 0.0
      %3656 = vmatprep.subr.mxu0 0.0
      %3657 = vmatpush1.msra.mxu0 0.0
      %3658 = vmatprep.subr.mxu0 0.0
      %3659 = vmatpush1.msra.mxu0 0.0
      %3660 = vmatprep.subr.mxu0 0.0
      %3661 = vmatpush1.msra.mxu0 0.0
      %3662 = vmatprep.subr.mxu0 0.0
      %3663 = vmatpush1.msra.mxu0 0.0
      %3664 = vmatprep.subr.mxu0 0.0
      %3665 = vmatpush1.msra.mxu0 0.0
      %3666 = vmatprep.subr.mxu0 0.0
      %3667 = vmatpush1.msra.mxu0 0.0
      %3668 = vmatprep.subr.mxu0 0.0
      %3669 = vmatpush1.msra.mxu0 0.0
      %3670 = vmatprep.subr.mxu0 0.0
      %3671 = vmatpush1.msra.mxu0 0.0
      %3672 = vmatprep.subr.mxu0 0.0
      %3673 = vmatpush1.msra.mxu0 0.0
      %3674 = vmatprep.subr.mxu0 0.0
      %3675 = vmatpush1.msra.mxu0 0.0
      %3676 = vmatprep.subr.mxu0 0.0
      %3677 = vmatpush1.msra.mxu0 0.0
      %3678 = vmatprep.subr.mxu0 0.0
      %3679 = vmatpush1.msra.mxu0 0.0
      %3680 = vmatprep.subr.mxu0 0.0
      %3681 = vmatpush1.msra.mxu0 0.0
      %3682 = vmatprep.subr.mxu0 0.0
      %3683 = vmatpush1.msra.mxu0 0.0
      %3684 = vmatprep.subr.mxu0 0.0
      %3685 = vmatpush1.msra.mxu0 0.0
      %3686 = vmatprep.subr.mxu0 0.0
      %3687 = vmatpush1.msra.mxu0 0.0
      %3688 = vmatprep.subr.mxu0 0.0
      %3689 = vmatpush1.msra.mxu0 0.0
      %3690 = vmatprep.subr.mxu0 0.0
      %3691 = vmatpush1.msra.mxu0 0.0
      %3692 = vmatprep.subr.mxu0 0.0
      %3693 = vmatpush1.msra.mxu0 0.0
      %3694 = vmatprep.subr.mxu0 0.0
      %3695 = vmatpush1.msra.mxu0 0.0
      %3696 = vmatprep.subr.mxu0 0.0
      %3697 = vmatpush1.msra.mxu0 0.0
      %3698 = vmatprep.mubr.f32.mxu0 0.0
      %3699 = vmatmul.mubr.f32.gmra.mrb[0].mxu0 %v3443
      %v3700 = vpop.f32.mrb[0].mxu0
      %v3701 = vadd.f32 %v3378, %v3700
      %v3702 = vpop.f32.mrb[0].mxu0
      %3703 = vmatprep.mubr.f32.mxu0 0.0
      %3704 = vmatmul.mubr.f32.gmra.mrb[0].mxu0 %v3446
      %v3705 = vpop.f32.mrb[0].mxu0
      %v3706 = vadd.f32 %v3379, %v3705
      %v3707 = vpop.f32.mrb[0].mxu0
      %3708 = vmatprep.mubr.f32.mxu0 0.0
      %3709 = vmatmul.mubr.f32.gmra.mrb[0].mxu0 %v3449
      %v3710 = vpop.f32.mrb[0].mxu0
      %v3711 = vadd.f32 %v3380, %v3710
      %v3712 = vpop.f32.mrb[0].mxu0
      %3713 = vmatprep.mubr.f32.mxu0 0.0
      %3714 = vmatmul.mubr.f32.gmra.mrb[0].mxu0 %v3452
      %v3715 = vpop.f32.mrb[0].mxu0
      %v3716 = vadd.f32 %v3381, %v3715
      %v3717 = vpop.f32.mrb[0].mxu0
      %3718 = vmatprep.mubr.f32.mxu0 0.0
      %3719 = vmatmul.mubr.f32.gmra.mrb[0].mxu0 %v3455
      %v3720 = vpop.f32.mrb[0].mxu0
      %v3721 = vadd.f32 %v3382, %v3720
      %v3722 = vpop.f32.mrb[0].mxu0
      %3723 = vmatprep.mubr.f32.mxu0 0.0
      %3724 = vmatmul.mubr.f32.gmra.mrb[0].mxu0 %v3458
      %v3725 = vpop.f32.mrb[0].mxu0
      %v3726 = vadd.f32 %v3383, %v3725
      %v3727 = vpop.f32.mrb[0].mxu0
      %3728 = vmatprep.mubr.f32.mxu0 0.0
      %3729 = vmatmul.mubr.f32.gmra.mrb[0].mxu0 %v3461
      %v3730 = vpop.f32.mrb[0].mxu0
      %v3731 = vadd.f32 %v3384, %v3730
      %v3732 = vpop.f32.mrb[0].mxu0
      %3733 = vmatprep.mubr.f32.mxu0 0.0
      %3734 = vmatmul.mubr.f32.gmra.mrb[0].mxu0 %v3464
      %v3735 = vpop.f32.mrb[0].mxu0
      %v3736 = vadd.f32 %v3385, %v3735
      %v3737 = vpop.f32.mrb[0].mxu0
      %3738 = vmatprep.mubr.f32.mxu0 0.0
      %3739 = vmatmul.mubr.f32.gmra.mrb[0].mxu0 %v3467
      %v3740 = vpop.f32.mrb[0].mxu0
      %v3741 = vadd.f32 %v3386, %v3740
      %v3742 = vpop.f32.mrb[0].mxu0
      %3743 = vmatprep.mubr.f32.mxu0 0.0
      %3744 = vmatmul.mubr.f32.gmra.mrb[0].mxu0 %v3470
      %v3745 = vpop.f32.mrb[0].mxu0
      %v3746 = vadd.f32 %v3387, %v3745
      %v3747 = vpop.f32.mrb[0].mxu0
      %3748 = vmatprep.mubr.f32.mxu0 0.0
      %3749 = vmatmul.mubr.f32.gmra.mrb[0].mxu0 %v3473
      %v3750 = vpop.f32.mrb[0].mxu0
      %v3751 = vadd.f32 %v3388, %v3750
      %v3752 = vpop.f32.mrb[0].mxu0
      %3753 = vmatprep.mubr.f32.mxu0 0.0
      %3754 = vmatmul.mubr.f32.gmra.mrb[0].mxu0 %v3476
      %v3755 = vpop.f32.mrb[0].mxu0
      %v3756 = vadd.f32 %v3389, %v3755
      %v3757 = vpop.f32.mrb[0].mxu0
      %3758 = vmatprep.mubr.f32.mxu0 0.0
      %3759 = vmatmul.mubr.f32.gmra.mrb[0].mxu0 %v3479
      %v3760 = vpop.f32.mrb[0].mxu0
      %v3761 = vadd.f32 %v3390, %v3760
      %v3762 = vpop.f32.mrb[0].mxu0
      %3763 = vmatprep.mubr.f32.mxu0 0.0
      %3764 = vmatmul.mubr.f32.gmra.mrb[0].mxu0 %v3482
      %v3765 = vpop.f32.mrb[0].mxu0
      %v3766 = vadd.f32 %v3391, %v3765
      %v3767 = vpop.f32.mrb[0].mxu0
      %3768 = vmatprep.mubr.f32.mxu0 0.0
      %3769 = vmatmul.mubr.f32.gmra.mrb[0].mxu0 %v3485
      %v3770 = vpop.f32.mrb[0].mxu0
      %v3771 = vadd.f32 %v3392, %v3770
      %v3772 = vpop.f32.mrb[0].mxu0
      %3773 = vmatprep.mubr.f32.mxu0 0.0
      %3774 = vmatmul.mubr.f32.gmra.mrb[0].mxu0 %v3488
      %v3775 = vpop.f32.mrb[0].mxu0
      %v3776 = vadd.f32 %v3393, %v3775
      %v3777 = vpop.f32.mrb[0].mxu0
      %3778 = vmatprep.mubr.f32.mxu0 0.0
      %3779 = vmatmul.mubr.f32.gmra.mrb[0].mxu0 %v3491
      %v3780 = vpop.f32.mrb[0].mxu0
      %v3781 = vadd.f32 %v3394, %v3780
      %v3782 = vpop.f32.mrb[0].mxu0
      %3783 = vmatprep.mubr.f32.mxu0 0.0
      %3784 = vmatmul.mubr.f32.gmra.mrb[0].mxu0 %v3494
      %v3785 = vpop.f32.mrb[0].mxu0
      %v3786 = vadd.f32 %v3395, %v3785
      %v3787 = vpop.f32.mrb[0].mxu0
      %3788 = vmatprep.mubr.f32.mxu0 0.0
      %3789 = vmatmul.mubr.f32.gmra.mrb[0].mxu0 %v3497
      %v3790 = vpop.f32.mrb[0].mxu0
      %v3791 = vadd.f32 %v3396, %v3790
      %v3792 = vpop.f32.mrb[0].mxu0
      %3793 = vmatprep.mubr.f32.mxu0 0.0
      %3794 = vmatmul.mubr.f32.gmra.mrb[0].mxu0 %v3500
      %v3795 = vpop.f32.mrb[0].mxu0
      %v3796 = vadd.f32 %v3397, %v3795
      %v3797 = vpop.f32.mrb[0].mxu0
      %3798 = vmatprep.mubr.f32.mxu0 0.0
      %3799 = vmatmul.mubr.f32.gmra.mrb[0].mxu0 %v3503
      %v3800 = vpop.f32.mrb[0].mxu0
      %v3801 = vadd.f32 %v3398, %v3800
      %v3802 = vpop.f32.mrb[0].mxu0
      %3803 = vmatprep.mubr.f32.mxu0 0.0
      %3804 = vmatmul.mubr.f32.gmra.mrb[0].mxu0 %v3506
      %v3805 = vpop.f32.mrb[0].mxu0
      %v3806 = vadd.f32 %v3399, %v3805
      %v3807 = vpop.f32.mrb[0].mxu0
      %3808 = vmatprep.mubr.f32.mxu0 0.0
      %3809 = vmatmul.mubr.f32.gmra.mrb[0].mxu0 %v3509
      %v3810 = vpop.f32.mrb[0].mxu0
      %v3811 = vadd.f32 %v3400, %v3810
      %v3812 = vpop.f32.mrb[0].mxu0
      %3813 = vmatprep.mubr.f32.mxu0 0.0
      %3814 = vmatmul.mubr.f32.gmra.mrb[0].mxu0 %v3512
      %v3815 = vpop.f32.mrb[0].mxu0
      %v3816 = vadd.f32 %v3401, %v3815
      %v3817 = vpop.f32.mrb[0].mxu0
      %3818 = vmatprep.mubr.f32.mxu0 0.0
      %3819 = vmatmul.mubr.f32.gmra.mrb[0].mxu0 %v3515
      %v3820 = vpop.f32.mrb[0].mxu0
      %v3821 = vadd.f32 %v3402, %v3820
      %v3822 = vpop.f32.mrb[0].mxu0
      %3823 = vmatprep.mubr.f32.mxu0 0.0
      %3824 = vmatmul.mubr.f32.gmra.mrb[0].mxu0 %v3518
      %v3825 = vpop.f32.mrb[0].mxu0
      %v3826 = vadd.f32 %v3403, %v3825
      %v3827 = vpop.f32.mrb[0].mxu0
      %3828 = vmatprep.mubr.f32.mxu0 0.0
      %3829 = vmatmul.mubr.f32.gmra.mrb[0].mxu0 %v3521
      %v3830 = vpop.f32.mrb[0].mxu0
      %v3831 = vadd.f32 %v3404, %v3830
      %v3832 = vpop.f32.mrb[0].mxu0
      %3833 = vmatprep.mubr.f32.mxu0 0.0
      %3834 = vmatmul.mubr.f32.gmra.mrb[0].mxu0 %v3524
      %v3835 = vpop.f32.mrb[0].mxu0
      %v3836 = vadd.f32 %v3405, %v3835
      %v3837 = vpop.f32.mrb[0].mxu0
      %3838 = vmatprep.mubr.f32.mxu0 0.0
      %3839 = vmatmul.mubr.f32.gmra.mrb[0].mxu0 %v3527
      %v3840 = vpop.f32.mrb[0].mxu0
      %v3841 = vadd.f32 %v3406, %v3840
      %v3842 = vpop.f32.mrb[0].mxu0
      %3843 = vmatprep.mubr.f32.mxu0 0.0
      %3844 = vmatmul.mubr.f32.gmra.mrb[0].mxu0 %v3530
      %v3845 = vpop.f32.mrb[0].mxu0
      %v3846 = vadd.f32 %v3407, %v3845
      %v3847 = vpop.f32.mrb[0].mxu0
      %3848 = vmatprep.mubr.f32.mxu0 0.0
      %3849 = vmatmul.mubr.f32.gmra.mrb[0].mxu0 %v3533
      %v3850 = vpop.f32.mrb[0].mxu0
      %v3851 = vadd.f32 %v3408, %v3850
      %v3852 = vpop.f32.mrb[0].mxu0
      %3853 = vmatprep.mubr.f32.mxu0 0.0
      %3854 = vmatmul.mubr.f32.gmra.mrb[0].mxu0 %v3536
      %v3855 = vpop.f32.mrb[0].mxu0
      %v3856 = vadd.f32 %v3409, %v3855
      %v3857 = vpop.f32.mrb[0].mxu0
      %3858 = vmatprep.mubr.f32.mxu0 0.0
      %3859 = vmatmul.mubr.f32.gmra.mrb[0].mxu0 %v3539
      %v3860 = vpop.f32.mrb[0].mxu0
      %v3861 = vadd.f32 %v3410, %v3860
      %v3862 = vpop.f32.mrb[0].mxu0
      %3863 = vmatprep.mubr.f32.mxu0 0.0
      %3864 = vmatmul.mubr.f32.gmra.mrb[0].mxu0 %v3542
      %v3865 = vpop.f32.mrb[0].mxu0
      %v3866 = vadd.f32 %v3411, %v3865
      %v3867 = vpop.f32.mrb[0].mxu0
      %3868 = vmatprep.mubr.f32.mxu0 0.0
      %3869 = vmatmul.mubr.f32.gmra.mrb[0].mxu0 %v3545
      %v3870 = vpop.f32.mrb[0].mxu0
      %v3871 = vadd.f32 %v3412, %v3870
      %v3872 = vpop.f32.mrb[0].mxu0
      %3873 = vmatprep.mubr.f32.mxu0 0.0
      %3874 = vmatmul.mubr.f32.gmra.mrb[0].mxu0 %v3548
      %v3875 = vpop.f32.mrb[0].mxu0
      %v3876 = vadd.f32 %v3413, %v3875
      %v3877 = vpop.f32.mrb[0].mxu0
      %3878 = vmatprep.mubr.f32.mxu0 0.0
      %3879 = vmatmul.mubr.f32.gmra.mrb[0].mxu0 %v3551
      %v3880 = vpop.f32.mrb[0].mxu0
      %v3881 = vadd.f32 %v3414, %v3880
      %v3882 = vpop.f32.mrb[0].mxu0
      %3883 = vmatprep.mubr.f32.mxu0 0.0
      %3884 = vmatmul.mubr.f32.gmra.mrb[0].mxu0 %v3554
      %v3885 = vpop.f32.mrb[0].mxu0
      %v3886 = vadd.f32 %v3415, %v3885
      %v3887 = vpop.f32.mrb[0].mxu0
      %3888 = vmatprep.mubr.f32.mxu0 0.0
      %3889 = vmatmul.mubr.f32.gmra.mrb[0].mxu0 %v3557
      %v3890 = vpop.f32.mrb[0].mxu0
      %v3891 = vadd.f32 %v3416, %v3890
      %v3892 = vpop.f32.mrb[0].mxu0
      %3893 = vmatprep.mubr.f32.mxu0 0.0
      %3894 = vmatmul.mubr.f32.gmra.mrb[0].mxu0 %v3560
      %v3895 = vpop.f32.mrb[0].mxu0
      %v3896 = vadd.f32 %v3417, %v3895
      %v3897 = vpop.f32.mrb[0].mxu0
      %3898 = vmatprep.mubr.f32.mxu0 0.0
      %3899 = vmatmul.mubr.f32.gmra.mrb[0].mxu0 %v3563
      %v3900 = vpop.f32.mrb[0].mxu0
      %v3901 = vadd.f32 %v3418, %v3900
      %v3902 = vpop.f32.mrb[0].mxu0
      %3903 = vmatprep.mubr.f32.mxu0 0.0
      %3904 = vmatmul.mubr.f32.gmra.mrb[0].mxu0 %v3566
      %v3905 = vpop.f32.mrb[0].mxu0
      %v3906 = vadd.f32 %v3419, %v3905
      %v3907 = vpop.f32.mrb[0].mxu0
      %3908 = vmatprep.mubr.f32.mxu0 0.0
      %3909 = vmatmul.mubr.f32.gmra.mrb[0].mxu0 %v3569
      %v3910 = vpop.f32.mrb[0].mxu0
      %v3911 = vadd.f32 %v3420, %v3910
      %v3912 = vpop.f32.mrb[0].mxu0
      %3913 = vmatprep.mubr.f32.mxu0 0.0
      %3914 = vmatmul.mubr.f32.gmra.mrb[0].mxu0 %v3572
      %v3915 = vpop.f32.mrb[0].mxu0
      %v3916 = vadd.f32 %v3421, %v3915
      %v3917 = vpop.f32.mrb[0].mxu0
      %3918 = vmatprep.mubr.f32.mxu0 0.0
      %3919 = vmatmul.mubr.f32.gmra.mrb[0].mxu0 %v3575
      %v3920 = vpop.f32.mrb[0].mxu0
      %v3921 = vadd.f32 %v3422, %v3920
      %v3922 = vpop.f32.mrb[0].mxu0
      %3923 = vmatprep.mubr.f32.mxu0 0.0
      %3924 = vmatmul.mubr.f32.gmra.mrb[0].mxu0 %v3578
      %v3925 = vpop.f32.mrb[0].mxu0
      %v3926 = vadd.f32 %v3423, %v3925
      %v3927 = vpop.f32.mrb[0].mxu0
      %3928 = vmatprep.mubr.f32.mxu0 0.0
      %3929 = vmatmul.mubr.f32.gmra.mrb[0].mxu0 %v3581
      %v3930 = vpop.f32.mrb[0].mxu0
      %v3931 = vadd.f32 %v3424, %v3930
      %v3932 = vpop.f32.mrb[0].mxu0
      %3933 = vmatprep.mubr.f32.mxu0 0.0
      %3934 = vmatmul.mubr.f32.gmra.mrb[0].mxu0 %v3584
      %v3935 = vpop.f32.mrb[0].mxu0
      %v3936 = vadd.f32 %v3425, %v3935
      %v3937 = vpop.f32.mrb[0].mxu0
      %3938 = vmatprep.mubr.f32.mxu0 0.0
      %3939 = vmatmul.mubr.f32.gmra.mrb[0].mxu0 %v3587
      %v3940 = vpop.f32.mrb[0].mxu0
      %v3941 = vadd.f32 %v3426, %v3940
      %v3942 = vpop.f32.mrb[0].mxu0
      %3943 = vmatprep.mubr.f32.mxu0 0.0
      %3944 = vmatmul.mubr.f32.gmra.mrb[0].mxu0 %v3590
      %v3945 = vpop.f32.mrb[0].mxu0
      %v3946 = vadd.f32 %v3427, %v3945
      %v3947 = vpop.f32.mrb[0].mxu0
      %3948 = vmatprep.mubr.f32.mxu0 0.0
      %3949 = vmatmul.mubr.f32.gmra.mrb[0].mxu0 %v3593
      %v3950 = vpop.f32.mrb[0].mxu0
      %v3951 = vadd.f32 %v3428, %v3950
      %v3952 = vpop.f32.mrb[0].mxu0
      %3953 = vmatprep.mubr.f32.mxu0 0.0
      %3954 = vmatmul.mubr.f32.gmra.mrb[0].mxu0 %v3596
      %v3955 = vpop.f32.mrb[0].mxu0
      %v3956 = vadd.f32 %v3429, %v3955
      %v3957 = vpop.f32.mrb[0].mxu0
      %3958 = vmatprep.mubr.f32.mxu0 0.0
      %3959 = vmatmul.mubr.f32.gmra.mrb[0].mxu0 %v3599
      %v3960 = vpop.f32.mrb[0].mxu0
      %v3961 = vadd.f32 %v3430, %v3960
      %v3962 = vpop.f32.mrb[0].mxu0
      %3963 = vmatprep.mubr.f32.mxu0 0.0
      %3964 = vmatmul.mubr.f32.gmra.mrb[0].mxu0 %v3602
      %v3965 = vpop.f32.mrb[0].mxu0
      %v3966 = vadd.f32 %v3431, %v3965
      %v3967 = vpop.f32.mrb[0].mxu0
      %3968 = vmatprep.mubr.f32.mxu0 0.0
      %3969 = vmatmul.mubr.f32.gmra.mrb[0].mxu0 %v3605
      %v3970 = vpop.f32.mrb[0].mxu0
      %v3971 = vadd.f32 %v3432, %v3970
      %v3972 = vpop.f32.mrb[0].mxu0
      %3973 = vmatprep.mubr.f32.mxu0 0.0
      %3974 = vmatmul.mubr.f32.gmra.mrb[0].mxu0 %v3608
      %v3975 = vpop.f32.mrb[0].mxu0
      %v3976 = vadd.f32 %v3433, %v3975
      %v3977 = vpop.f32.mrb[0].mxu0
      %3978 = vmatprep.mubr.f32.mxu0 0.0
      %3979 = vmatmul.mubr.f32.gmra.mrb[0].mxu0 %v3611
      %v3980 = vpop.f32.mrb[0].mxu0
      %v3981 = vadd.f32 %v3434, %v3980
      %v3982 = vpop.f32.mrb[0].mxu0
      %3983 = vmatprep.mubr.f32.mxu0 0.0
      %3984 = vmatmul.mubr.f32.gmra.mrb[0].mxu0 %v3614
      %v3985 = vpop.f32.mrb[0].mxu0
      %v3986 = vadd.f32 %v3435, %v3985
      %v3987 = vpop.f32.mrb[0].mxu0
      %3988 = vmatprep.mubr.f32.mxu0 0.0
      %3989 = vmatmul.mubr.f32.gmra.mrb[0].mxu0 %v3617
      %v3990 = vpop.f32.mrb[0].mxu0
      %v3991 = vadd.f32 %v3436, %v3990
      %v3992 = vpop.f32.mrb[0].mxu0
      %3993 = vmatprep.mubr.f32.mxu0 0.0
      %3994 = vmatmul.mubr.f32.gmra.mrb[0].mxu0 %v3620
      %v3995 = vpop.f32.mrb[0].mxu0
      %v3996 = vadd.f32 %v3437, %v3995
      %v3997 = vpop.f32.mrb[0].mxu0
      %3998 = vmatprep.mubr.f32.mxu0 0.0
      %3999 = vmatmul.mubr.f32.gmra.mrb[0].mxu0 %v3623
      %v4000 = vpop.f32.mrb[0].mxu0
      %v4001 = vadd.f32 %v3438, %v4000
      %v4002 = vpop.f32.mrb[0].mxu0
      %4003 = vmatprep.mubr.f32.mxu0 0.0
      %4004 = vmatmul.mubr.f32.gmra.mrb[0].mxu0 %v3626
      %v4005 = vpop.f32.mrb[0].mxu0
      %v4006 = vadd.f32 %v3439, %v4005
      %v4007 = vpop.f32.mrb[0].mxu0
      %4008 = vmatprep.mubr.f32.mxu0 0.0
      %4009 = vmatmul.mubr.f32.gmra.mrb[0].mxu0 %v3629
      %v4010 = vpop.f32.mrb[0].mxu0
      %v4011 = vadd.f32 %v3440, %v4010
      %v4012 = vpop.f32.mrb[0].mxu0
      %4013 = vmatprep.mubr.f32.mxu0 0.0
      %4014 = vmatmul.mubr.f32.gmra.mrb[0].mxu0 %v3632
      %v4015 = vpop.f32.mrb[0].mxu0
      %v4016 = vadd.f32 %v3441, %v4015
      %v4017 = vpop.f32.mrb[0].mxu0
      %4018 = vdwg.mxu0
      %v4019 = vmax.f32 %v3701, 0.0
      %v4020 = vmax.f32 %v3706, 0.0
      %v4021 = vmax.f32 %v3711, 0.0
      %v4022 = vmax.f32 %v3716, 0.0
      %v4023 = vmax.f32 %v3721, 0.0
      %v4024 = vmax.f32 %v3726, 0.0
      %v4025 = vmax.f32 %v3731, 0.0
      %v4026 = vmax.f32 %v3736, 0.0
      %v4027 = vmax.f32 %v3741, 0.0
      %v4028 = vmax.f32 %v3746, 0.0
      %v4029 = vmax.f32 %v3751, 0.0
      %v4030 = vmax.f32 %v3756, 0.0
      %v4031 = vmax.f32 %v3761, 0.0
      %v4032 = vmax.f32 %v3766, 0.0
      %v4033 = vmax.f32 %v3771, 0.0
      %v4034 = vmax.f32 %v3776, 0.0
      %v4035 = vmax.f32 %v3781, 0.0
      %v4036 = vmax.f32 %v3786, 0.0
      %v4037 = vmax.f32 %v3791, 0.0
      %v4038 = vmax.f32 %v3796, 0.0
      %v4039 = vmax.f32 %v3801, 0.0
      %v4040 = vmax.f32 %v3806, 0.0
      %v4041 = vmax.f32 %v3811, 0.0
      %v4042 = vmax.f32 %v3816, 0.0
      %v4043 = vmax.f32 %v3821, 0.0
      %v4044 = vmax.f32 %v3826, 0.0
      %v4045 = vmax.f32 %v3831, 0.0
      %v4046 = vmax.f32 %v3836, 0.0
      %v4047 = vmax.f32 %v3841, 0.0
      %v4048 = vmax.f32 %v3846, 0.0
      %v4049 = vmax.f32 %v3851, 0.0
      %v4050 = vmax.f32 %v3856, 0.0
      %v4051 = vmax.f32 %v3861, 0.0
      %v4052 = vmax.f32 %v3866, 0.0
      %v4053 = vmax.f32 %v3871, 0.0
      %v4054 = vmax.f32 %v3876, 0.0
      %v4055 = vmax.f32 %v3881, 0.0
      %v4056 = vmax.f32 %v3886, 0.0
      %v4057 = vmax.f32 %v3891, 0.0
      %v4058 = vmax.f32 %v3896, 0.0
      %v4059 = vmax.f32 %v3901, 0.0
      %v4060 = vmax.f32 %v3906, 0.0
      %v4061 = vmax.f32 %v3911, 0.0
      %v4062 = vmax.f32 %v3916, 0.0
      %v4063 = vmax.f32 %v3921, 0.0
      %v4064 = vmax.f32 %v3926, 0.0
      %v4065 = vmax.f32 %v3931, 0.0
      %v4066 = vmax.f32 %v3936, 0.0
      %v4067 = vmax.f32 %v3941, 0.0
      %v4068 = vmax.f32 %v3946, 0.0
      %v4069 = vmax.f32 %v3951, 0.0
      %v4070 = vmax.f32 %v3956, 0.0
      %v4071 = vmax.f32 %v3961, 0.0
      %v4072 = vmax.f32 %v3966, 0.0
      %v4073 = vmax.f32 %v3971, 0.0
      %v4074 = vmax.f32 %v3976, 0.0
      %v4075 = vmax.f32 %v3981, 0.0
      %v4076 = vmax.f32 %v3986, 0.0
      %v4077 = vmax.f32 %v3991, 0.0
      %v4078 = vmax.f32 %v3996, 0.0
      %v4079 = vmax.f32 %v4001, 0.0
      %v4080 = vmax.f32 %v4006, 0.0
      %v4081 = vmax.f32 %v4011, 0.0
      %v4082 = vmax.f32 %v4016, 0.0
      %v4083 = vld [vmem:[%s8] sm:$0x1]
      %v4085 = vlaneseq
      %v4086 = vshrl.u32 %v4085, 7
      %v4087 = vsub.s32 0, %v4086
      %v4088 = vrot.slane %v4083, %v4087
      %v4090 = vmul.f32 %v2781, %v4088
      %v4091 = vmul.f32 %v2782, %v4088
      %v4092 = vmul.f32 %v2783, %v4088
      %v4093 = vmul.f32 %v2784, %v4088
      %v4094 = vmul.f32 %v2785, %v4088
      %v4095 = vmul.f32 %v2786, %v4088
      %v4096 = vmul.f32 %v2787, %v4088
      %v4097 = vmul.f32 %v2788, %v4088
      %v4098 = vmul.f32 %v2789, %v4088
      %v4099 = vmul.f32 %v2790, %v4088
      %v4100 = vmul.f32 %v2791, %v4088
      %v4101 = vmul.f32 %v2792, %v4088
      %v4102 = vmul.f32 %v2793, %v4088
      %v4103 = vmul.f32 %v2794, %v4088
      %v4104 = vmul.f32 %v2795, %v4088
      %v4105 = vmul.f32 %v2796, %v4088
      %v4106 = vmul.f32 %v2797, %v4088
      %v4107 = vmul.f32 %v2798, %v4088
      %v4108 = vmul.f32 %v2799, %v4088
      %v4109 = vmul.f32 %v2800, %v4088
      %v4110 = vmul.f32 %v2801, %v4088
      %v4111 = vmul.f32 %v2802, %v4088
      %v4112 = vmul.f32 %v2803, %v4088
      %v4113 = vmul.f32 %v2804, %v4088
      %v4114 = vmul.f32 %v2805, %v4088
      %v4115 = vmul.f32 %v2806, %v4088
      %v4116 = vmul.f32 %v2807, %v4088
      %v4117 = vmul.f32 %v2808, %v4088
      %v4118 = vmul.f32 %v2809, %v4088
      %v4119 = vmul.f32 %v2810, %v4088
      %v4120 = vmul.f32 %v2811, %v4088
      %v4121 = vmul.f32 %v2812, %v4088
      %v4122 = vmul.f32 %v2813, %v4088
      %v4123 = vmul.f32 %v2814, %v4088
      %v4124 = vmul.f32 %v2815, %v4088
      %v4125 = vmul.f32 %v2816, %v4088
      %v4126 = vmul.f32 %v2817, %v4088
      %v4127 = vmul.f32 %v2818, %v4088
      %v4128 = vmul.f32 %v2819, %v4088
      %v4129 = vmul.f32 %v2820, %v4088
      %v4130 = vmul.f32 %v2821, %v4088
      %v4131 = vmul.f32 %v2822, %v4088
      %v4132 = vmul.f32 %v2823, %v4088
      %v4133 = vmul.f32 %v2824, %v4088
      %v4134 = vmul.f32 %v2825, %v4088
      %v4135 = vmul.f32 %v2826, %v4088
      %v4136 = vmul.f32 %v2827, %v4088
      %v4137 = vmul.f32 %v2828, %v4088
      %v4138 = vmul.f32 %v2829, %v4088
      %v4139 = vmul.f32 %v2830, %v4088
      %v4140 = vmul.f32 %v2831, %v4088
      %v4141 = vmul.f32 %v2832, %v4088
      %v4142 = vmul.f32 %v2833, %v4088
      %v4143 = vmul.f32 %v2834, %v4088
      %v4144 = vmul.f32 %v2835, %v4088
      %v4145 = vmul.f32 %v2836, %v4088
      %v4146 = vmul.f32 %v2837, %v4088
      %v4147 = vmul.f32 %v2838, %v4088
      %v4148 = vmul.f32 %v2839, %v4088
      %v4149 = vmul.f32 %v2840, %v4088
      %v4150 = vmul.f32 %v2841, %v4088
      %v4151 = vmul.f32 %v2842, %v4088
      %v4152 = vmul.f32 %v2843, %v4088
      %v4153 = vmul.f32 %v2844, %v4088
      %v4154 = vld [vmem:[%s9] sm:$0x1]
      %v4156 = vlaneseq
      %v4157 = vshrl.u32 %v4156, 7
      %v4158 = vsub.s32 0, %v4157
      %v4159 = vrot.slane %v4154, %v4158
      %v4161 = vmul.f32 %v4019, %v4159
      %v4162 = vmul.f32 %v4020, %v4159
      %v4163 = vmul.f32 %v4021, %v4159
      %v4164 = vmul.f32 %v4022, %v4159
      %v4165 = vmul.f32 %v4023, %v4159
      %v4166 = vmul.f32 %v4024, %v4159
      %v4167 = vmul.f32 %v4025, %v4159
      %v4168 = vmul.f32 %v4026, %v4159
      %v4169 = vmul.f32 %v4027, %v4159
      %v4170 = vmul.f32 %v4028, %v4159
      %v4171 = vmul.f32 %v4029, %v4159
      %v4172 = vmul.f32 %v4030, %v4159
      %v4173 = vmul.f32 %v4031, %v4159
      %v4174 = vmul.f32 %v4032, %v4159
      %v4175 = vmul.f32 %v4033, %v4159
      %v4176 = vmul.f32 %v4034, %v4159
      %v4177 = vmul.f32 %v4035, %v4159
      %v4178 = vmul.f32 %v4036, %v4159
      %v4179 = vmul.f32 %v4037, %v4159
      %v4180 = vmul.f32 %v4038, %v4159
      %v4181 = vmul.f32 %v4039, %v4159
      %v4182 = vmul.f32 %v4040, %v4159
      %v4183 = vmul.f32 %v4041, %v4159
      %v4184 = vmul.f32 %v4042, %v4159
      %v4185 = vmul.f32 %v4043, %v4159
      %v4186 = vmul.f32 %v4044, %v4159
      %v4187 = vmul.f32 %v4045, %v4159
      %v4188 = vmul.f32 %v4046, %v4159
      %v4189 = vmul.f32 %v4047, %v4159
      %v4190 = vmul.f32 %v4048, %v4159
      %v4191 = vmul.f32 %v4049, %v4159
      %v4192 = vmul.f32 %v4050, %v4159
      %v4193 = vmul.f32 %v4051, %v4159
      %v4194 = vmul.f32 %v4052, %v4159
      %v4195 = vmul.f32 %v4053, %v4159
      %v4196 = vmul.f32 %v4054, %v4159
      %v4197 = vmul.f32 %v4055, %v4159
      %v4198 = vmul.f32 %v4056, %v4159
      %v4199 = vmul.f32 %v4057, %v4159
      %v4200 = vmul.f32 %v4058, %v4159
      %v4201 = vmul.f32 %v4059, %v4159
      %v4202 = vmul.f32 %v4060, %v4159
      %v4203 = vmul.f32 %v4061, %v4159
      %v4204 = vmul.f32 %v4062, %v4159
      %v4205 = vmul.f32 %v4063, %v4159
      %v4206 = vmul.f32 %v4064, %v4159
      %v4207 = vmul.f32 %v4065, %v4159
      %v4208 = vmul.f32 %v4066, %v4159
      %v4209 = vmul.f32 %v4067, %v4159
      %v4210 = vmul.f32 %v4068, %v4159
      %v4211 = vmul.f32 %v4069, %v4159
      %v4212 = vmul.f32 %v4070, %v4159
      %v4213 = vmul.f32 %v4071, %v4159
      %v4214 = vmul.f32 %v4072, %v4159
      %v4215 = vmul.f32 %v4073, %v4159
      %v4216 = vmul.f32 %v4074, %v4159
      %v4217 = vmul.f32 %v4075, %v4159
      %v4218 = vmul.f32 %v4076, %v4159
      %v4219 = vmul.f32 %v4077, %v4159
      %v4220 = vmul.f32 %v4078, %v4159
      %v4221 = vmul.f32 %v4079, %v4159
      %v4222 = vmul.f32 %v4080, %v4159
      %v4223 = vmul.f32 %v4081, %v4159
      %v4224 = vmul.f32 %v4082, %v4159
      %v4225 = vadd.f32 %v4090, %v4161
      %v4226 = vadd.f32 %v4091, %v4162
      %v4227 = vadd.f32 %v4092, %v4163
      %v4228 = vadd.f32 %v4093, %v4164
      %v4229 = vadd.f32 %v4094, %v4165
      %v4230 = vadd.f32 %v4095, %v4166
      %v4231 = vadd.f32 %v4096, %v4167
      %v4232 = vadd.f32 %v4097, %v4168
      %v4233 = vadd.f32 %v4098, %v4169
      %v4234 = vadd.f32 %v4099, %v4170
      %v4235 = vadd.f32 %v4100, %v4171
      %v4236 = vadd.f32 %v4101, %v4172
      %v4237 = vadd.f32 %v4102, %v4173
      %v4238 = vadd.f32 %v4103, %v4174
      %v4239 = vadd.f32 %v4104, %v4175
      %v4240 = vadd.f32 %v4105, %v4176
      %v4241 = vadd.f32 %v4106, %v4177
      %v4242 = vadd.f32 %v4107, %v4178
      %v4243 = vadd.f32 %v4108, %v4179
      %v4244 = vadd.f32 %v4109, %v4180
      %v4245 = vadd.f32 %v4110, %v4181
      %v4246 = vadd.f32 %v4111, %v4182
      %v4247 = vadd.f32 %v4112, %v4183
      %v4248 = vadd.f32 %v4113, %v4184
      %v4249 = vadd.f32 %v4114, %v4185
      %v4250 = vadd.f32 %v4115, %v4186
      %v4251 = vadd.f32 %v4116, %v4187
      %v4252 = vadd.f32 %v4117, %v4188
      %v4253 = vadd.f32 %v4118, %v4189
      %v4254 = vadd.f32 %v4119, %v4190
      %v4255 = vadd.f32 %v4120, %v4191
      %v4256 = vadd.f32 %v4121, %v4192
      %v4257 = vadd.f32 %v4122, %v4193
      %v4258 = vadd.f32 %v4123, %v4194
      %v4259 = vadd.f32 %v4124, %v4195
      %v4260 = vadd.f32 %v4125, %v4196
      %v4261 = vadd.f32 %v4126, %v4197
      %v4262 = vadd.f32 %v4127, %v4198
      %v4263 = vadd.f32 %v4128, %v4199
      %v4264 = vadd.f32 %v4129, %v4200
      %v4265 = vadd.f32 %v4130, %v4201
      %v4266 = vadd.f32 %v4131, %v4202
      %v4267 = vadd.f32 %v4132, %v4203
      %v4268 = vadd.f32 %v4133, %v4204
      %v4269 = vadd.f32 %v4134, %v4205
      %v4270 = vadd.f32 %v4135, %v4206
      %v4271 = vadd.f32 %v4136, %v4207
      %v4272 = vadd.f32 %v4137, %v4208
      %v4273 = vadd.f32 %v4138, %v4209
      %v4274 = vadd.f32 %v4139, %v4210
      %v4275 = vadd.f32 %v4140, %v4211
      %v4276 = vadd.f32 %v4141, %v4212
      %v4277 = vadd.f32 %v4142, %v4213
      %v4278 = vadd.f32 %v4143, %v4214
      %v4279 = vadd.f32 %v4144, %v4215
      %v4280 = vadd.f32 %v4145, %v4216
      %v4281 = vadd.f32 %v4146, %v4217
      %v4282 = vadd.f32 %v4147, %v4218
      %v4283 = vadd.f32 %v4148, %v4219
      %v4284 = vadd.f32 %v4149, %v4220
      %v4285 = vadd.f32 %v4150, %v4221
      %v4286 = vadd.f32 %v4151, %v4222
      %v4287 = vadd.f32 %v4152, %v4223
      %v4288 = vadd.f32 %v4153, %v4224
      %v4289 = vsel %vm1861, %v4225, 0.0
      %4290 = vadd.xlane.f32.xlu0 %v4289
      %v4291 = vpop.xlane.xlu0 %4290
      %v4292 = vsel %vm1861, %v4226, 0.0
      %4293 = vadd.xlane.f32.xlu0 %v4292
      %v4294 = vpop.xlane.xlu0 %4293
      %v4295 = vsel %vm1861, %v4227, 0.0
      %4296 = vadd.xlane.f32.xlu0 %v4295
      %v4297 = vpop.xlane.xlu0 %4296
      %v4298 = vsel %vm1861, %v4228, 0.0
      %4299 = vadd.xlane.f32.xlu0 %v4298
      %v4300 = vpop.xlane.xlu0 %4299
      %v4301 = vsel %vm1861, %v4229, 0.0
      %4302 = vadd.xlane.f32.xlu0 %v4301
      %v4303 = vpop.xlane.xlu0 %4302
      %v4304 = vsel %vm1861, %v4230, 0.0
      %4305 = vadd.xlane.f32.xlu0 %v4304
      %v4306 = vpop.xlane.xlu0 %4305
      %v4307 = vsel %vm1861, %v4231, 0.0
      %4308 = vadd.xlane.f32.xlu0 %v4307
      %v4309 = vpop.xlane.xlu0 %4308
      %v4310 = vsel %vm1861, %v4232, 0.0
      %4311 = vadd.xlane.f32.xlu0 %v4310
      %v4312 = vpop.xlane.xlu0 %4311
      %v4313 = vsel %vm1861, %v4233, 0.0
      %4314 = vadd.xlane.f32.xlu0 %v4313
      %v4315 = vpop.xlane.xlu0 %4314
      %v4316 = vsel %vm1861, %v4234, 0.0
      %4317 = vadd.xlane.f32.xlu0 %v4316
      %v4318 = vpop.xlane.xlu0 %4317
      %v4319 = vsel %vm1861, %v4235, 0.0
      %4320 = vadd.xlane.f32.xlu0 %v4319
      %v4321 = vpop.xlane.xlu0 %4320
      %v4322 = vsel %vm1861, %v4236, 0.0
      %4323 = vadd.xlane.f32.xlu0 %v4322
      %v4324 = vpop.xlane.xlu0 %4323
      %v4325 = vsel %vm1861, %v4237, 0.0
      %4326 = vadd.xlane.f32.xlu0 %v4325
      %v4327 = vpop.xlane.xlu0 %4326
      %v4328 = vsel %vm1861, %v4238, 0.0
      %4329 = vadd.xlane.f32.xlu0 %v4328
      %v4330 = vpop.xlane.xlu0 %4329
      %v4331 = vsel %vm1861, %v4239, 0.0
      %4332 = vadd.xlane.f32.xlu0 %v4331
      %v4333 = vpop.xlane.xlu0 %4332
      %v4334 = vsel %vm1861, %v4240, 0.0
      %4335 = vadd.xlane.f32.xlu0 %v4334
      %v4336 = vpop.xlane.xlu0 %4335
      %v4337 = vsel %vm1861, %v4241, 0.0
      %4338 = vadd.xlane.f32.xlu0 %v4337
      %v4339 = vpop.xlane.xlu0 %4338
      %v4340 = vsel %vm1861, %v4242, 0.0
      %4341 = vadd.xlane.f32.xlu0 %v4340
      %v4342 = vpop.xlane.xlu0 %4341
      %v4343 = vsel %vm1861, %v4243, 0.0
      %4344 = vadd.xlane.f32.xlu0 %v4343
      %v4345 = vpop.xlane.xlu0 %4344
      %v4346 = vsel %vm1861, %v4244, 0.0
      %4347 = vadd.xlane.f32.xlu0 %v4346
      %v4348 = vpop.xlane.xlu0 %4347
      %v4349 = vsel %vm1861, %v4245, 0.0
      %4350 = vadd.xlane.f32.xlu0 %v4349
      %v4351 = vpop.xlane.xlu0 %4350
      %v4352 = vsel %vm1861, %v4246, 0.0
      %4353 = vadd.xlane.f32.xlu0 %v4352
      %v4354 = vpop.xlane.xlu0 %4353
      %v4355 = vsel %vm1861, %v4247, 0.0
      %4356 = vadd.xlane.f32.xlu0 %v4355
      %v4357 = vpop.xlane.xlu0 %4356
      %v4358 = vsel %vm1861, %v4248, 0.0
      %4359 = vadd.xlane.f32.xlu0 %v4358
      %v4360 = vpop.xlane.xlu0 %4359
      %v4361 = vsel %vm1861, %v4249, 0.0
      %4362 = vadd.xlane.f32.xlu0 %v4361
      %v4363 = vpop.xlane.xlu0 %4362
      %v4364 = vsel %vm1861, %v4250, 0.0
      %4365 = vadd.xlane.f32.xlu0 %v4364
      %v4366 = vpop.xlane.xlu0 %4365
      %v4367 = vsel %vm1861, %v4251, 0.0
      %4368 = vadd.xlane.f32.xlu0 %v4367
      %v4369 = vpop.xlane.xlu0 %4368
      %v4370 = vsel %vm1861, %v4252, 0.0
      %4371 = vadd.xlane.f32.xlu0 %v4370
      %v4372 = vpop.xlane.xlu0 %4371
      %v4373 = vsel %vm1861, %v4253, 0.0
      %4374 = vadd.xlane.f32.xlu0 %v4373
      %v4375 = vpop.xlane.xlu0 %4374
      %v4376 = vsel %vm1861, %v4254, 0.0
      %4377 = vadd.xlane.f32.xlu0 %v4376
      %v4378 = vpop.xlane.xlu0 %4377
      %v4379 = vsel %vm1861, %v4255, 0.0
      %4380 = vadd.xlane.f32.xlu0 %v4379
      %v4381 = vpop.xlane.xlu0 %4380
      %v4382 = vsel %vm1861, %v4256, 0.0
      %4383 = vadd.xlane.f32.xlu0 %v4382
      %v4384 = vpop.xlane.xlu0 %4383
      %v4385 = vsel %vm1861, %v4257, 0.0
      %4386 = vadd.xlane.f32.xlu0 %v4385
      %v4387 = vpop.xlane.xlu0 %4386
      %v4388 = vsel %vm1861, %v4258, 0.0
      %4389 = vadd.xlane.f32.xlu0 %v4388
      %v4390 = vpop.xlane.xlu0 %4389
      %v4391 = vsel %vm1861, %v4259, 0.0
      %4392 = vadd.xlane.f32.xlu0 %v4391
      %v4393 = vpop.xlane.xlu0 %4392
      %v4394 = vsel %vm1861, %v4260, 0.0
      %4395 = vadd.xlane.f32.xlu0 %v4394
      %v4396 = vpop.xlane.xlu0 %4395
      %v4397 = vsel %vm1861, %v4261, 0.0
      %4398 = vadd.xlane.f32.xlu0 %v4397
      %v4399 = vpop.xlane.xlu0 %4398
      %v4400 = vsel %vm1861, %v4262, 0.0
      %4401 = vadd.xlane.f32.xlu0 %v4400
      %v4402 = vpop.xlane.xlu0 %4401
      %v4403 = vsel %vm1861, %v4263, 0.0
      %4404 = vadd.xlane.f32.xlu0 %v4403
      %v4405 = vpop.xlane.xlu0 %4404
      %v4406 = vsel %vm1861, %v4264, 0.0
      %4407 = vadd.xlane.f32.xlu0 %v4406
      %v4408 = vpop.xlane.xlu0 %4407
      %v4409 = vsel %vm1861, %v4265, 0.0
      %4410 = vadd.xlane.f32.xlu0 %v4409
      %v4411 = vpop.xlane.xlu0 %4410
      %v4412 = vsel %vm1861, %v4266, 0.0
      %4413 = vadd.xlane.f32.xlu0 %v4412
      %v4414 = vpop.xlane.xlu0 %4413
      %v4415 = vsel %vm1861, %v4267, 0.0
      %4416 = vadd.xlane.f32.xlu0 %v4415
      %v4417 = vpop.xlane.xlu0 %4416
      %v4418 = vsel %vm1861, %v4268, 0.0
      %4419 = vadd.xlane.f32.xlu0 %v4418
      %v4420 = vpop.xlane.xlu0 %4419
      %v4421 = vsel %vm1861, %v4269, 0.0
      %4422 = vadd.xlane.f32.xlu0 %v4421
      %v4423 = vpop.xlane.xlu0 %4422
      %v4424 = vsel %vm1861, %v4270, 0.0
      %4425 = vadd.xlane.f32.xlu0 %v4424
      %v4426 = vpop.xlane.xlu0 %4425
      %v4427 = vsel %vm1861, %v4271, 0.0
      %4428 = vadd.xlane.f32.xlu0 %v4427
      %v4429 = vpop.xlane.xlu0 %4428
      %v4430 = vsel %vm1861, %v4272, 0.0
      %4431 = vadd.xlane.f32.xlu0 %v4430
      %v4432 = vpop.xlane.xlu0 %4431
      %v4433 = vsel %vm1861, %v4273, 0.0
      %4434 = vadd.xlane.f32.xlu0 %v4433
      %v4435 = vpop.xlane.xlu0 %4434
      %v4436 = vsel %vm1861, %v4274, 0.0
      %4437 = vadd.xlane.f32.xlu0 %v4436
      %v4438 = vpop.xlane.xlu0 %4437
      %v4439 = vsel %vm1861, %v4275, 0.0
      %4440 = vadd.xlane.f32.xlu0 %v4439
      %v4441 = vpop.xlane.xlu0 %4440
      %v4442 = vsel %vm1861, %v4276, 0.0
      %4443 = vadd.xlane.f32.xlu0 %v4442
      %v4444 = vpop.xlane.xlu0 %4443
      %v4445 = vsel %vm1861, %v4277, 0.0
      %4446 = vadd.xlane.f32.xlu0 %v4445
      %v4447 = vpop.xlane.xlu0 %4446
      %v4448 = vsel %vm1861, %v4278, 0.0
      %4449 = vadd.xlane.f32.xlu0 %v4448
      %v4450 = vpop.xlane.xlu0 %4449
      %v4451 = vsel %vm1861, %v4279, 0.0
      %4452 = vadd.xlane.f32.xlu0 %v4451
      %v4453 = vpop.xlane.xlu0 %4452
      %v4454 = vsel %vm1861, %v4280, 0.0
      %4455 = vadd.xlane.f32.xlu0 %v4454
      %v4456 = vpop.xlane.xlu0 %4455
      %v4457 = vsel %vm1861, %v4281, 0.0
      %4458 = vadd.xlane.f32.xlu0 %v4457
      %v4459 = vpop.xlane.xlu0 %4458
      %v4460 = vsel %vm1861, %v4282, 0.0
      %4461 = vadd.xlane.f32.xlu0 %v4460
      %v4462 = vpop.xlane.xlu0 %4461
      %v4463 = vsel %vm1861, %v4283, 0.0
      %4464 = vadd.xlane.f32.xlu0 %v4463
      %v4465 = vpop.xlane.xlu0 %4464
      %v4466 = vsel %vm1861, %v4284, 0.0
      %4467 = vadd.xlane.f32.xlu0 %v4466
      %v4468 = vpop.xlane.xlu0 %4467
      %v4469 = vsel %vm1861, %v4285, 0.0
      %4470 = vadd.xlane.f32.xlu0 %v4469
      %v4471 = vpop.xlane.xlu0 %4470
      %v4472 = vsel %vm1861, %v4286, 0.0
      %4473 = vadd.xlane.f32.xlu0 %v4472
      %v4474 = vpop.xlane.xlu0 %4473
      %v4475 = vsel %vm1861, %v4287, 0.0
      %4476 = vadd.xlane.f32.xlu0 %v4475
      %v4477 = vpop.xlane.xlu0 %4476
      %v4478 = vsel %vm1861, %v4288, 0.0
      %4479 = vadd.xlane.f32.xlu0 %v4478
      %v4480 = vpop.xlane.xlu0 %4479
      %v4481 = vld [vmem:[%s5] sm:$0x7]
      %v4482 = vlaneseq
      %v4483 = vshrl.u32 %v4482, 7
      %v4484 = vsub.s32 0, %v4483
      %v4485 = vrot.slane %v4481, %v4484
      %v4486 = vmul.f32 %v363, %v4485
      %v4487 = vmul.f32 %v364, %v4485
      %v4488 = vmul.f32 %v365, %v4485
      %v4489 = vmul.f32 %v366, %v4485
      %v4490 = vmul.f32 %v367, %v4485
      %v4491 = vmul.f32 %v368, %v4485
      %v4492 = vmul.f32 %v369, %v4485
      %v4493 = vmul.f32 %v370, %v4485
      %v4494 = vmul.f32 %v371, %v4485
      %v4495 = vmul.f32 %v372, %v4485
      %v4496 = vmul.f32 %v373, %v4485
      %v4497 = vmul.f32 %v374, %v4485
      %v4498 = vmul.f32 %v375, %v4485
      %v4499 = vmul.f32 %v376, %v4485
      %v4500 = vmul.f32 %v377, %v4485
      %v4501 = vmul.f32 %v378, %v4485
      %v4502 = vmul.f32 %v379, %v4485
      %v4503 = vmul.f32 %v380, %v4485
      %v4504 = vmul.f32 %v381, %v4485
      %v4505 = vmul.f32 %v382, %v4485
      %v4506 = vmul.f32 %v383, %v4485
      %v4507 = vmul.f32 %v384, %v4485
      %v4508 = vmul.f32 %v385, %v4485
      %v4509 = vmul.f32 %v386, %v4485
      %v4510 = vmul.f32 %v387, %v4485
      %v4511 = vmul.f32 %v388, %v4485
      %v4512 = vmul.f32 %v389, %v4485
      %v4513 = vmul.f32 %v390, %v4485
      %v4514 = vmul.f32 %v391, %v4485
      %v4515 = vmul.f32 %v392, %v4485
      %v4516 = vmul.f32 %v393, %v4485
      %v4517 = vmul.f32 %v394, %v4485
      %v4518 = vmul.f32 %v395, %v4485
      %v4519 = vmul.f32 %v396, %v4485
      %v4520 = vmul.f32 %v397, %v4485
      %v4521 = vmul.f32 %v398, %v4485
      %v4522 = vmul.f32 %v399, %v4485
      %v4523 = vmul.f32 %v400, %v4485
      %v4524 = vmul.f32 %v401, %v4485
      %v4525 = vmul.f32 %v402, %v4485
      %v4526 = vmul.f32 %v403, %v4485
      %v4527 = vmul.f32 %v404, %v4485
      %v4528 = vmul.f32 %v405, %v4485
      %v4529 = vmul.f32 %v406, %v4485
      %v4530 = vmul.f32 %v407, %v4485
      %v4531 = vmul.f32 %v408, %v4485
      %v4532 = vmul.f32 %v409, %v4485
      %v4533 = vmul.f32 %v410, %v4485
      %v4534 = vmul.f32 %v411, %v4485
      %v4535 = vmul.f32 %v412, %v4485
      %v4536 = vmul.f32 %v413, %v4485
      %v4537 = vmul.f32 %v414, %v4485
      %v4538 = vmul.f32 %v415, %v4485
      %v4539 = vmul.f32 %v416, %v4485
      %v4540 = vmul.f32 %v417, %v4485
      %v4541 = vmul.f32 %v418, %v4485
      %v4542 = vmul.f32 %v419, %v4485
      %v4543 = vmul.f32 %v420, %v4485
      %v4544 = vmul.f32 %v421, %v4485
      %v4545 = vmul.f32 %v422, %v4485
      %v4546 = vmul.f32 %v423, %v4485
      %v4547 = vmul.f32 %v424, %v4485
      %v4548 = vmul.f32 %v425, %v4485
      %v4549 = vmul.f32 %v426, %v4485
      %v4550 = vlaneseq
      %v4551 = vshrl.u32 %v4550, 7
      %v4552 = vsub.s32 2, %v4551
      %v4553 = vrot.slane %v4481, %v4552
      %v4554 = vadd.f32 %v4553, %v4486
      %v4555 = vadd.f32 %v4553, %v4487
      %v4556 = vadd.f32 %v4553, %v4488
      %v4557 = vadd.f32 %v4553, %v4489
      %v4558 = vadd.f32 %v4553, %v4490
      %v4559 = vadd.f32 %v4553, %v4491
      %v4560 = vadd.f32 %v4553, %v4492
      %v4561 = vadd.f32 %v4553, %v4493
      %v4562 = vadd.f32 %v4553, %v4494
      %v4563 = vadd.f32 %v4553, %v4495
      %v4564 = vadd.f32 %v4553, %v4496
      %v4565 = vadd.f32 %v4553, %v4497
      %v4566 = vadd.f32 %v4553, %v4498
      %v4567 = vadd.f32 %v4553, %v4499
      %v4568 = vadd.f32 %v4553, %v4500
      %v4569 = vadd.f32 %v4553, %v4501
      %v4570 = vadd.f32 %v4553, %v4502
      %v4571 = vadd.f32 %v4553, %v4503
      %v4572 = vadd.f32 %v4553, %v4504
      %v4573 = vadd.f32 %v4553, %v4505
      %v4574 = vadd.f32 %v4553, %v4506
      %v4575 = vadd.f32 %v4553, %v4507
      %v4576 = vadd.f32 %v4553, %v4508
      %v4577 = vadd.f32 %v4553, %v4509
      %v4578 = vadd.f32 %v4553, %v4510
      %v4579 = vadd.f32 %v4553, %v4511
      %v4580 = vadd.f32 %v4553, %v4512
      %v4581 = vadd.f32 %v4553, %v4513
      %v4582 = vadd.f32 %v4553, %v4514
      %v4583 = vadd.f32 %v4553, %v4515
      %v4584 = vadd.f32 %v4553, %v4516
      %v4585 = vadd.f32 %v4553, %v4517
      %v4586 = vadd.f32 %v4553, %v4518
      %v4587 = vadd.f32 %v4553, %v4519
      %v4588 = vadd.f32 %v4553, %v4520
      %v4589 = vadd.f32 %v4553, %v4521
      %v4590 = vadd.f32 %v4553, %v4522
      %v4591 = vadd.f32 %v4553, %v4523
      %v4592 = vadd.f32 %v4553, %v4524
      %v4593 = vadd.f32 %v4553, %v4525
      %v4594 = vadd.f32 %v4553, %v4526
      %v4595 = vadd.f32 %v4553, %v4527
      %v4596 = vadd.f32 %v4553, %v4528
      %v4597 = vadd.f32 %v4553, %v4529
      %v4598 = vadd.f32 %v4553, %v4530
      %v4599 = vadd.f32 %v4553, %v4531
      %v4600 = vadd.f32 %v4553, %v4532
      %v4601 = vadd.f32 %v4553, %v4533
      %v4602 = vadd.f32 %v4553, %v4534
      %v4603 = vadd.f32 %v4553, %v4535
      %v4604 = vadd.f32 %v4553, %v4536
      %v4605 = vadd.f32 %v4553, %v4537
      %v4606 = vadd.f32 %v4553, %v4538
      %v4607 = vadd.f32 %v4553, %v4539
      %v4608 = vadd.f32 %v4553, %v4540
      %v4609 = vadd.f32 %v4553, %v4541
      %v4610 = vadd.f32 %v4553, %v4542
      %v4611 = vadd.f32 %v4553, %v4543
      %v4612 = vadd.f32 %v4553, %v4544
      %v4613 = vadd.f32 %v4553, %v4545
      %v4614 = vadd.f32 %v4553, %v4546
      %v4615 = vadd.f32 %v4553, %v4547
      %v4616 = vadd.f32 %v4553, %v4548
      %v4617 = vadd.f32 %v4553, %v4549
      %v4618 = vlaneseq
      %v4619 = vshrl.u32 %v4618, 7
      %v4620 = vsub.s32 1, %v4619
      %v4621 = vrot.slane %v4481, %v4620
      %4623 = vrot.lane.b32.xlu0 %v4621, 1
      %v4624 = vpop.permute.xlu0 %4623
      %v4626 = vmul.f32 %v363, %v4624
      %v4627 = vmul.f32 %v364, %v4624
      %v4628 = vmul.f32 %v365, %v4624
      %v4629 = vmul.f32 %v366, %v4624
      %v4630 = vmul.f32 %v367, %v4624
      %v4631 = vmul.f32 %v368, %v4624
      %v4632 = vmul.f32 %v369, %v4624
      %v4633 = vmul.f32 %v370, %v4624
      %v4634 = vmul.f32 %v371, %v4624
      %v4635 = vmul.f32 %v372, %v4624
      %v4636 = vmul.f32 %v373, %v4624
      %v4637 = vmul.f32 %v374, %v4624
      %v4638 = vmul.f32 %v375, %v4624
      %v4639 = vmul.f32 %v376, %v4624
      %v4640 = vmul.f32 %v377, %v4624
      %v4641 = vmul.f32 %v378, %v4624
      %v4642 = vmul.f32 %v379, %v4624
      %v4643 = vmul.f32 %v380, %v4624
      %v4644 = vmul.f32 %v381, %v4624
      %v4645 = vmul.f32 %v382, %v4624
      %v4646 = vmul.f32 %v383, %v4624
      %v4647 = vmul.f32 %v384, %v4624
      %v4648 = vmul.f32 %v385, %v4624
      %v4649 = vmul.f32 %v386, %v4624
      %v4650 = vmul.f32 %v387, %v4624
      %v4651 = vmul.f32 %v388, %v4624
      %v4652 = vmul.f32 %v389, %v4624
      %v4653 = vmul.f32 %v390, %v4624
      %v4654 = vmul.f32 %v391, %v4624
      %v4655 = vmul.f32 %v392, %v4624
      %v4656 = vmul.f32 %v393, %v4624
      %v4657 = vmul.f32 %v394, %v4624
      %v4658 = vmul.f32 %v395, %v4624
      %v4659 = vmul.f32 %v396, %v4624
      %v4660 = vmul.f32 %v397, %v4624
      %v4661 = vmul.f32 %v398, %v4624
      %v4662 = vmul.f32 %v399, %v4624
      %v4663 = vmul.f32 %v400, %v4624
      %v4664 = vmul.f32 %v401, %v4624
      %v4665 = vmul.f32 %v402, %v4624
      %v4666 = vmul.f32 %v403, %v4624
      %v4667 = vmul.f32 %v404, %v4624
      %v4668 = vmul.f32 %v405, %v4624
      %v4669 = vmul.f32 %v406, %v4624
      %v4670 = vmul.f32 %v407, %v4624
      %v4671 = vmul.f32 %v408, %v4624
      %v4672 = vmul.f32 %v409, %v4624
      %v4673 = vmul.f32 %v410, %v4624
      %v4674 = vmul.f32 %v411, %v4624
      %v4675 = vmul.f32 %v412, %v4624
      %v4676 = vmul.f32 %v413, %v4624
      %v4677 = vmul.f32 %v414, %v4624
      %v4678 = vmul.f32 %v415, %v4624
      %v4679 = vmul.f32 %v416, %v4624
      %v4680 = vmul.f32 %v417, %v4624
      %v4681 = vmul.f32 %v418, %v4624
      %v4682 = vmul.f32 %v419, %v4624
      %v4683 = vmul.f32 %v420, %v4624
      %v4684 = vmul.f32 %v421, %v4624
      %v4685 = vmul.f32 %v422, %v4624
      %v4686 = vmul.f32 %v423, %v4624
      %v4687 = vmul.f32 %v424, %v4624
      %v4688 = vmul.f32 %v425, %v4624
      %v4689 = vmul.f32 %v426, %v4624
      %4754 = vrot.lane.b32.xlu0 %v4626, 127
      %v4755 = vpop.permute.xlu0 %4754
      %4756 = vrot.lane.b32.xlu0 %v4627, 127
      %v4757 = vpop.permute.xlu0 %4756
      %4758 = vrot.lane.b32.xlu0 %v4628, 127
      %v4759 = vpop.permute.xlu0 %4758
      %4760 = vrot.lane.b32.xlu0 %v4629, 127
      %v4761 = vpop.permute.xlu0 %4760
      %4762 = vrot.lane.b32.xlu0 %v4630, 127
      %v4763 = vpop.permute.xlu0 %4762
      %4764 = vrot.lane.b32.xlu0 %v4631, 127
      %v4765 = vpop.permute.xlu0 %4764
      %4766 = vrot.lane.b32.xlu0 %v4632, 127
      %v4767 = vpop.permute.xlu0 %4766
      %4768 = vrot.lane.b32.xlu0 %v4633, 127
      %v4769 = vpop.permute.xlu0 %4768
      %4770 = vrot.lane.b32.xlu0 %v4634, 127
      %v4771 = vpop.permute.xlu0 %4770
      %4772 = vrot.lane.b32.xlu0 %v4635, 127
      %v4773 = vpop.permute.xlu0 %4772
      %4774 = vrot.lane.b32.xlu0 %v4636, 127
      %v4775 = vpop.permute.xlu0 %4774
      %4776 = vrot.lane.b32.xlu0 %v4637, 127
      %v4777 = vpop.permute.xlu0 %4776
      %4778 = vrot.lane.b32.xlu0 %v4638, 127
      %v4779 = vpop.permute.xlu0 %4778
      %4780 = vrot.lane.b32.xlu0 %v4639, 127
      %v4781 = vpop.permute.xlu0 %4780
      %4782 = vrot.lane.b32.xlu0 %v4640, 127
      %v4783 = vpop.permute.xlu0 %4782
      %4784 = vrot.lane.b32.xlu0 %v4641, 127
      %v4785 = vpop.permute.xlu0 %4784
      %4786 = vrot.lane.b32.xlu0 %v4642, 127
      %v4787 = vpop.permute.xlu0 %4786
      %4788 = vrot.lane.b32.xlu0 %v4643, 127
      %v4789 = vpop.permute.xlu0 %4788
      %4790 = vrot.lane.b32.xlu0 %v4644, 127
      %v4791 = vpop.permute.xlu0 %4790
      %4792 = vrot.lane.b32.xlu0 %v4645, 127
      %v4793 = vpop.permute.xlu0 %4792
      %4794 = vrot.lane.b32.xlu0 %v4646, 127
      %v4795 = vpop.permute.xlu0 %4794
      %4796 = vrot.lane.b32.xlu0 %v4647, 127
      %v4797 = vpop.permute.xlu0 %4796
      %4798 = vrot.lane.b32.xlu0 %v4648, 127
      %v4799 = vpop.permute.xlu0 %4798
      %4800 = vrot.lane.b32.xlu0 %v4649, 127
      %v4801 = vpop.permute.xlu0 %4800
      %4802 = vrot.lane.b32.xlu0 %v4650, 127
      %v4803 = vpop.permute.xlu0 %4802
      %4804 = vrot.lane.b32.xlu0 %v4651, 127
      %v4805 = vpop.permute.xlu0 %4804
      %4806 = vrot.lane.b32.xlu0 %v4652, 127
      %v4807 = vpop.permute.xlu0 %4806
      %4808 = vrot.lane.b32.xlu0 %v4653, 127
      %v4809 = vpop.permute.xlu0 %4808
      %4810 = vrot.lane.b32.xlu0 %v4654, 127
      %v4811 = vpop.permute.xlu0 %4810
      %4812 = vrot.lane.b32.xlu0 %v4655, 127
      %v4813 = vpop.permute.xlu0 %4812
      %4814 = vrot.lane.b32.xlu0 %v4656, 127
      %v4815 = vpop.permute.xlu0 %4814
      %4816 = vrot.lane.b32.xlu0 %v4657, 127
      %v4817 = vpop.permute.xlu0 %4816
      %4818 = vrot.lane.b32.xlu0 %v4658, 127
      %v4819 = vpop.permute.xlu0 %4818
      %4820 = vrot.lane.b32.xlu0 %v4659, 127
      %v4821 = vpop.permute.xlu0 %4820
      %4822 = vrot.lane.b32.xlu0 %v4660, 127
      %v4823 = vpop.permute.xlu0 %4822
      %4824 = vrot.lane.b32.xlu0 %v4661, 127
      %v4825 = vpop.permute.xlu0 %4824
      %4826 = vrot.lane.b32.xlu0 %v4662, 127
      %v4827 = vpop.permute.xlu0 %4826
      %4828 = vrot.lane.b32.xlu0 %v4663, 127
      %v4829 = vpop.permute.xlu0 %4828
      %4830 = vrot.lane.b32.xlu0 %v4664, 127
      %v4831 = vpop.permute.xlu0 %4830
      %4832 = vrot.lane.b32.xlu0 %v4665, 127
      %v4833 = vpop.permute.xlu0 %4832
      %4834 = vrot.lane.b32.xlu0 %v4666, 127
      %v4835 = vpop.permute.xlu0 %4834
      %4836 = vrot.lane.b32.xlu0 %v4667, 127
      %v4837 = vpop.permute.xlu0 %4836
      %4838 = vrot.lane.b32.xlu0 %v4668, 127
      %v4839 = vpop.permute.xlu0 %4838
      %4840 = vrot.lane.b32.xlu0 %v4669, 127
      %v4841 = vpop.permute.xlu0 %4840
      %4842 = vrot.lane.b32.xlu0 %v4670, 127
      %v4843 = vpop.permute.xlu0 %4842
      %4844 = vrot.lane.b32.xlu0 %v4671, 127
      %v4845 = vpop.permute.xlu0 %4844
      %4846 = vrot.lane.b32.xlu0 %v4672, 127
      %v4847 = vpop.permute.xlu0 %4846
      %4848 = vrot.lane.b32.xlu0 %v4673, 127
      %v4849 = vpop.permute.xlu0 %4848
      %4850 = vrot.lane.b32.xlu0 %v4674, 127
      %v4851 = vpop.permute.xlu0 %4850
      %4852 = vrot.lane.b32.xlu0 %v4675, 127
      %v4853 = vpop.permute.xlu0 %4852
      %4854 = vrot.lane.b32.xlu0 %v4676, 127
      %v4855 = vpop.permute.xlu0 %4854
      %4856 = vrot.lane.b32.xlu0 %v4677, 127
      %v4857 = vpop.permute.xlu0 %4856
      %4858 = vrot.lane.b32.xlu0 %v4678, 127
      %v4859 = vpop.permute.xlu0 %4858
      %4860 = vrot.lane.b32.xlu0 %v4679, 127
      %v4861 = vpop.permute.xlu0 %4860
      %4862 = vrot.lane.b32.xlu0 %v4680, 127
      %v4863 = vpop.permute.xlu0 %4862
      %4864 = vrot.lane.b32.xlu0 %v4681, 127
      %v4865 = vpop.permute.xlu0 %4864
      %4866 = vrot.lane.b32.xlu0 %v4682, 127
      %v4867 = vpop.permute.xlu0 %4866
      %4868 = vrot.lane.b32.xlu0 %v4683, 127
      %v4869 = vpop.permute.xlu0 %4868
      %4870 = vrot.lane.b32.xlu0 %v4684, 127
      %v4871 = vpop.permute.xlu0 %4870
      %4872 = vrot.lane.b32.xlu0 %v4685, 127
      %v4873 = vpop.permute.xlu0 %4872
      %4874 = vrot.lane.b32.xlu0 %v4686, 127
      %v4875 = vpop.permute.xlu0 %4874
      %4876 = vrot.lane.b32.xlu0 %v4687, 127
      %v4877 = vpop.permute.xlu0 %4876
      %4878 = vrot.lane.b32.xlu0 %v4688, 127
      %v4879 = vpop.permute.xlu0 %4878
      %4880 = vrot.lane.b32.xlu0 %v4689, 127
      %v4881 = vpop.permute.xlu0 %4880
      %v4946 = vadd.f32 %v4554, %v4755
      %v4947 = vadd.f32 %v4555, %v4757
      %v4948 = vadd.f32 %v4556, %v4759
      %v4949 = vadd.f32 %v4557, %v4761
      %v4950 = vadd.f32 %v4558, %v4763
      %v4951 = vadd.f32 %v4559, %v4765
      %v4952 = vadd.f32 %v4560, %v4767
      %v4953 = vadd.f32 %v4561, %v4769
      %v4954 = vadd.f32 %v4562, %v4771
      %v4955 = vadd.f32 %v4563, %v4773
      %v4956 = vadd.f32 %v4564, %v4775
      %v4957 = vadd.f32 %v4565, %v4777
      %v4958 = vadd.f32 %v4566, %v4779
      %v4959 = vadd.f32 %v4567, %v4781
      %v4960 = vadd.f32 %v4568, %v4783
      %v4961 = vadd.f32 %v4569, %v4785
      %v4962 = vadd.f32 %v4570, %v4787
      %v4963 = vadd.f32 %v4571, %v4789
      %v4964 = vadd.f32 %v4572, %v4791
      %v4965 = vadd.f32 %v4573, %v4793
      %v4966 = vadd.f32 %v4574, %v4795
      %v4967 = vadd.f32 %v4575, %v4797
      %v4968 = vadd.f32 %v4576, %v4799
      %v4969 = vadd.f32 %v4577, %v4801
      %v4970 = vadd.f32 %v4578, %v4803
      %v4971 = vadd.f32 %v4579, %v4805
      %v4972 = vadd.f32 %v4580, %v4807
      %v4973 = vadd.f32 %v4581, %v4809
      %v4974 = vadd.f32 %v4582, %v4811
      %v4975 = vadd.f32 %v4583, %v4813
      %v4976 = vadd.f32 %v4584, %v4815
      %v4977 = vadd.f32 %v4585, %v4817
      %v4978 = vadd.f32 %v4586, %v4819
      %v4979 = vadd.f32 %v4587, %v4821
      %v4980 = vadd.f32 %v4588, %v4823
      %v4981 = vadd.f32 %v4589, %v4825
      %v4982 = vadd.f32 %v4590, %v4827
      %v4983 = vadd.f32 %v4591, %v4829
      %v4984 = vadd.f32 %v4592, %v4831
      %v4985 = vadd.f32 %v4593, %v4833
      %v4986 = vadd.f32 %v4594, %v4835
      %v4987 = vadd.f32 %v4595, %v4837
      %v4988 = vadd.f32 %v4596, %v4839
      %v4989 = vadd.f32 %v4597, %v4841
      %v4990 = vadd.f32 %v4598, %v4843
      %v4991 = vadd.f32 %v4599, %v4845
      %v4992 = vadd.f32 %v4600, %v4847
      %v4993 = vadd.f32 %v4601, %v4849
      %v4994 = vadd.f32 %v4602, %v4851
      %v4995 = vadd.f32 %v4603, %v4853
      %v4996 = vadd.f32 %v4604, %v4855
      %v4997 = vadd.f32 %v4605, %v4857
      %v4998 = vadd.f32 %v4606, %v4859
      %v4999 = vadd.f32 %v4607, %v4861
      %v5000 = vadd.f32 %v4608, %v4863
      %v5001 = vadd.f32 %v4609, %v4865
      %v5002 = vadd.f32 %v4610, %v4867
      %v5003 = vadd.f32 %v4611, %v4869
      %v5004 = vadd.f32 %v4612, %v4871
      %v5005 = vadd.f32 %v4613, %v4873
      %v5006 = vadd.f32 %v4614, %v4875
      %v5007 = vadd.f32 %v4615, %v4877
      %v5008 = vadd.f32 %v4616, %v4879
      %v5009 = vadd.f32 %v4617, %v4881
      %v5010 = vadd.f32 %v4291, %v4946
      %v5011 = vadd.f32 %v4294, %v4947
      %v5012 = vadd.f32 %v4297, %v4948
      %v5013 = vadd.f32 %v4300, %v4949
      %v5014 = vadd.f32 %v4303, %v4950
      %v5015 = vadd.f32 %v4306, %v4951
      %v5016 = vadd.f32 %v4309, %v4952
      %v5017 = vadd.f32 %v4312, %v4953
      %v5018 = vadd.f32 %v4315, %v4954
      %v5019 = vadd.f32 %v4318, %v4955
      %v5020 = vadd.f32 %v4321, %v4956
      %v5021 = vadd.f32 %v4324, %v4957
      %v5022 = vadd.f32 %v4327, %v4958
      %v5023 = vadd.f32 %v4330, %v4959
      %v5024 = vadd.f32 %v4333, %v4960
      %v5025 = vadd.f32 %v4336, %v4961
      %v5026 = vadd.f32 %v4339, %v4962
      %v5027 = vadd.f32 %v4342, %v4963
      %v5028 = vadd.f32 %v4345, %v4964
      %v5029 = vadd.f32 %v4348, %v4965
      %v5030 = vadd.f32 %v4351, %v4966
      %v5031 = vadd.f32 %v4354, %v4967
      %v5032 = vadd.f32 %v4357, %v4968
      %v5033 = vadd.f32 %v4360, %v4969
      %v5034 = vadd.f32 %v4363, %v4970
      %v5035 = vadd.f32 %v4366, %v4971
      %v5036 = vadd.f32 %v4369, %v4972
      %v5037 = vadd.f32 %v4372, %v4973
      %v5038 = vadd.f32 %v4375, %v4974
      %v5039 = vadd.f32 %v4378, %v4975
      %v5040 = vadd.f32 %v4381, %v4976
      %v5041 = vadd.f32 %v4384, %v4977
      %v5042 = vadd.f32 %v4387, %v4978
      %v5043 = vadd.f32 %v4390, %v4979
      %v5044 = vadd.f32 %v4393, %v4980
      %v5045 = vadd.f32 %v4396, %v4981
      %v5046 = vadd.f32 %v4399, %v4982
      %v5047 = vadd.f32 %v4402, %v4983
      %v5048 = vadd.f32 %v4405, %v4984
      %v5049 = vadd.f32 %v4408, %v4985
      %v5050 = vadd.f32 %v4411, %v4986
      %v5051 = vadd.f32 %v4414, %v4987
      %v5052 = vadd.f32 %v4417, %v4988
      %v5053 = vadd.f32 %v4420, %v4989
      %v5054 = vadd.f32 %v4423, %v4990
      %v5055 = vadd.f32 %v4426, %v4991
      %v5056 = vadd.f32 %v4429, %v4992
      %v5057 = vadd.f32 %v4432, %v4993
      %v5058 = vadd.f32 %v4435, %v4994
      %v5059 = vadd.f32 %v4438, %v4995
      %v5060 = vadd.f32 %v4441, %v4996
      %v5061 = vadd.f32 %v4444, %v4997
      %v5062 = vadd.f32 %v4447, %v4998
      %v5063 = vadd.f32 %v4450, %v4999
      %v5064 = vadd.f32 %v4453, %v5000
      %v5065 = vadd.f32 %v4456, %v5001
      %v5066 = vadd.f32 %v4459, %v5002
      %v5067 = vadd.f32 %v4462, %v5003
      %v5068 = vadd.f32 %v4465, %v5004
      %v5069 = vadd.f32 %v4468, %v5005
      %v5070 = vadd.f32 %v4471, %v5006
      %v5071 = vadd.f32 %v4474, %v5007
      %v5072 = vadd.f32 %v4477, %v5008
      %v5073 = vadd.f32 %v4480, %v5009
      %v5074 = vxor.u32 %v5010, 2147483648
      %v5075 = vxor.u32 %v5011, 2147483648
      %v5076 = vxor.u32 %v5012, 2147483648
      %v5077 = vxor.u32 %v5013, 2147483648
      %v5078 = vxor.u32 %v5014, 2147483648
      %v5079 = vxor.u32 %v5015, 2147483648
      %v5080 = vxor.u32 %v5016, 2147483648
      %v5081 = vxor.u32 %v5017, 2147483648
      %v5082 = vxor.u32 %v5018, 2147483648
      %v5083 = vxor.u32 %v5019, 2147483648
      %v5084 = vxor.u32 %v5020, 2147483648
      %v5085 = vxor.u32 %v5021, 2147483648
      %v5086 = vxor.u32 %v5022, 2147483648
      %v5087 = vxor.u32 %v5023, 2147483648
      %v5088 = vxor.u32 %v5024, 2147483648
      %v5089 = vxor.u32 %v5025, 2147483648
      %v5090 = vxor.u32 %v5026, 2147483648
      %v5091 = vxor.u32 %v5027, 2147483648
      %v5092 = vxor.u32 %v5028, 2147483648
      %v5093 = vxor.u32 %v5029, 2147483648
      %v5094 = vxor.u32 %v5030, 2147483648
      %v5095 = vxor.u32 %v5031, 2147483648
      %v5096 = vxor.u32 %v5032, 2147483648
      %v5097 = vxor.u32 %v5033, 2147483648
      %v5098 = vxor.u32 %v5034, 2147483648
      %v5099 = vxor.u32 %v5035, 2147483648
      %v5100 = vxor.u32 %v5036, 2147483648
      %v5101 = vxor.u32 %v5037, 2147483648
      %v5102 = vxor.u32 %v5038, 2147483648
      %v5103 = vxor.u32 %v5039, 2147483648
      %v5104 = vxor.u32 %v5040, 2147483648
      %v5105 = vxor.u32 %v5041, 2147483648
      %v5106 = vxor.u32 %v5042, 2147483648
      %v5107 = vxor.u32 %v5043, 2147483648
      %v5108 = vxor.u32 %v5044, 2147483648
      %v5109 = vxor.u32 %v5045, 2147483648
      %v5110 = vxor.u32 %v5046, 2147483648
      %v5111 = vxor.u32 %v5047, 2147483648
      %v5112 = vxor.u32 %v5048, 2147483648
      %v5113 = vxor.u32 %v5049, 2147483648
      %v5114 = vxor.u32 %v5050, 2147483648
      %v5115 = vxor.u32 %v5051, 2147483648
      %v5116 = vxor.u32 %v5052, 2147483648
      %v5117 = vxor.u32 %v5053, 2147483648
      %v5118 = vxor.u32 %v5054, 2147483648
      %v5119 = vxor.u32 %v5055, 2147483648
      %v5120 = vxor.u32 %v5056, 2147483648
      %v5121 = vxor.u32 %v5057, 2147483648
      %v5122 = vxor.u32 %v5058, 2147483648
      %v5123 = vxor.u32 %v5059, 2147483648
      %v5124 = vxor.u32 %v5060, 2147483648
      %v5125 = vxor.u32 %v5061, 2147483648
      %v5126 = vxor.u32 %v5062, 2147483648
      %v5127 = vxor.u32 %v5063, 2147483648
      %v5128 = vxor.u32 %v5064, 2147483648
      %v5129 = vxor.u32 %v5065, 2147483648
      %v5130 = vxor.u32 %v5066, 2147483648
      %v5131 = vxor.u32 %v5067, 2147483648
      %v5132 = vxor.u32 %v5068, 2147483648
      %v5133 = vxor.u32 %v5069, 2147483648
      %v5134 = vxor.u32 %v5070, 2147483648
      %v5135 = vxor.u32 %v5071, 2147483648
      %v5136 = vxor.u32 %v5072, 2147483648
      %v5137 = vxor.u32 %v5073, 2147483648
      %v5138 = vmul.f32 %v5074, 1.442695
      %v5139 = vpow.pop %v5138
      %v5140 = vmul.f32 %v5075, 1.442695
      %v5141 = vpow.pop %v5140
      %v5142 = vmul.f32 %v5076, 1.442695
      %v5143 = vpow.pop %v5142
      %v5144 = vmul.f32 %v5077, 1.442695
      %v5145 = vpow.pop %v5144
      %v5146 = vmul.f32 %v5078, 1.442695
      %v5147 = vpow.pop %v5146
      %v5148 = vmul.f32 %v5079, 1.442695
      %v5149 = vpow.pop %v5148
      %v5150 = vmul.f32 %v5080, 1.442695
      %v5151 = vpow.pop %v5150
      %v5152 = vmul.f32 %v5081, 1.442695
      %v5153 = vpow.pop %v5152
      %v5154 = vmul.f32 %v5082, 1.442695
      %v5155 = vpow.pop %v5154
      %v5156 = vmul.f32 %v5083, 1.442695
      %v5157 = vpow.pop %v5156
      %v5158 = vmul.f32 %v5084, 1.442695
      %v5159 = vpow.pop %v5158
      %v5160 = vmul.f32 %v5085, 1.442695
      %v5161 = vpow.pop %v5160
      %v5162 = vmul.f32 %v5086, 1.442695
      %v5163 = vpow.pop %v5162
      %v5164 = vmul.f32 %v5087, 1.442695
      %v5165 = vpow.pop %v5164
      %v5166 = vmul.f32 %v5088, 1.442695
      %v5167 = vpow.pop %v5166
      %v5168 = vmul.f32 %v5089, 1.442695
      %v5169 = vpow.pop %v5168
      %v5170 = vmul.f32 %v5090, 1.442695
      %v5171 = vpow.pop %v5170
      %v5172 = vmul.f32 %v5091, 1.442695
      %v5173 = vpow.pop %v5172
      %v5174 = vmul.f32 %v5092, 1.442695
      %v5175 = vpow.pop %v5174
      %v5176 = vmul.f32 %v5093, 1.442695
      %v5177 = vpow.pop %v5176
      %v5178 = vmul.f32 %v5094, 1.442695
      %v5179 = vpow.pop %v5178
      %v5180 = vmul.f32 %v5095, 1.442695
      %v5181 = vpow.pop %v5180
      %v5182 = vmul.f32 %v5096, 1.442695
      %v5183 = vpow.pop %v5182
      %v5184 = vmul.f32 %v5097, 1.442695
      %v5185 = vpow.pop %v5184
      %v5186 = vmul.f32 %v5098, 1.442695
      %v5187 = vpow.pop %v5186
      %v5188 = vmul.f32 %v5099, 1.442695
      %v5189 = vpow.pop %v5188
      %v5190 = vmul.f32 %v5100, 1.442695
      %v5191 = vpow.pop %v5190
      %v5192 = vmul.f32 %v5101, 1.442695
      %v5193 = vpow.pop %v5192
      %v5194 = vmul.f32 %v5102, 1.442695
      %v5195 = vpow.pop %v5194
      %v5196 = vmul.f32 %v5103, 1.442695
      %v5197 = vpow.pop %v5196
      %v5198 = vmul.f32 %v5104, 1.442695
      %v5199 = vpow.pop %v5198
      %v5200 = vmul.f32 %v5105, 1.442695
      %v5201 = vpow.pop %v5200
      %v5202 = vmul.f32 %v5106, 1.442695
      %v5203 = vpow.pop %v5202
      %v5204 = vmul.f32 %v5107, 1.442695
      %v5205 = vpow.pop %v5204
      %v5206 = vmul.f32 %v5108, 1.442695
      %v5207 = vpow.pop %v5206
      %v5208 = vmul.f32 %v5109, 1.442695
      %v5209 = vpow.pop %v5208
      %v5210 = vmul.f32 %v5110, 1.442695
      %v5211 = vpow.pop %v5210
      %v5212 = vmul.f32 %v5111, 1.442695
      %v5213 = vpow.pop %v5212
      %v5214 = vmul.f32 %v5112, 1.442695
      %v5215 = vpow.pop %v5214
      %v5216 = vmul.f32 %v5113, 1.442695
      %v5217 = vpow.pop %v5216
      %v5218 = vmul.f32 %v5114, 1.442695
      %v5219 = vpow.pop %v5218
      %v5220 = vmul.f32 %v5115, 1.442695
      %v5221 = vpow.pop %v5220
      %v5222 = vmul.f32 %v5116, 1.442695
      %v5223 = vpow.pop %v5222
      %v5224 = vmul.f32 %v5117, 1.442695
      %v5225 = vpow.pop %v5224
      %v5226 = vmul.f32 %v5118, 1.442695
      %v5227 = vpow.pop %v5226
      %v5228 = vmul.f32 %v5119, 1.442695
      %v5229 = vpow.pop %v5228
      %v5230 = vmul.f32 %v5120, 1.442695
      %v5231 = vpow.pop %v5230
      %v5232 = vmul.f32 %v5121, 1.442695
      %v5233 = vpow.pop %v5232
      %v5234 = vmul.f32 %v5122, 1.442695
      %v5235 = vpow.pop %v5234
      %v5236 = vmul.f32 %v5123, 1.442695
      %v5237 = vpow.pop %v5236
      %v5238 = vmul.f32 %v5124, 1.442695
      %v5239 = vpow.pop %v5238
      %v5240 = vmul.f32 %v5125, 1.442695
      %v5241 = vpow.pop %v5240
      %v5242 = vmul.f32 %v5126, 1.442695
      %v5243 = vpow.pop %v5242
      %v5244 = vmul.f32 %v5127, 1.442695
      %v5245 = vpow.pop %v5244
      %v5246 = vmul.f32 %v5128, 1.442695
      %v5247 = vpow.pop %v5246
      %v5248 = vmul.f32 %v5129, 1.442695
      %v5249 = vpow.pop %v5248
      %v5250 = vmul.f32 %v5130, 1.442695
      %v5251 = vpow.pop %v5250
      %v5252 = vmul.f32 %v5131, 1.442695
      %v5253 = vpow.pop %v5252
      %v5254 = vmul.f32 %v5132, 1.442695
      %v5255 = vpow.pop %v5254
      %v5256 = vmul.f32 %v5133, 1.442695
      %v5257 = vpow.pop %v5256
      %v5258 = vmul.f32 %v5134, 1.442695
      %v5259 = vpow.pop %v5258
      %v5260 = vmul.f32 %v5135, 1.442695
      %v5261 = vpow.pop %v5260
      %v5262 = vmul.f32 %v5136, 1.442695
      %v5263 = vpow.pop %v5262
      %v5264 = vmul.f32 %v5137, 1.442695
      %v5265 = vpow.pop %v5264
      %v5266 = vadd.f32 %v5139, 1.0
      %v5267 = vadd.f32 %v5141, 1.0
      %v5268 = vadd.f32 %v5143, 1.0
      %v5269 = vadd.f32 %v5145, 1.0
      %v5270 = vadd.f32 %v5147, 1.0
      %v5271 = vadd.f32 %v5149, 1.0
      %v5272 = vadd.f32 %v5151, 1.0
      %v5273 = vadd.f32 %v5153, 1.0
      %v5274 = vadd.f32 %v5155, 1.0
      %v5275 = vadd.f32 %v5157, 1.0
      %v5276 = vadd.f32 %v5159, 1.0
      %v5277 = vadd.f32 %v5161, 1.0
      %v5278 = vadd.f32 %v5163, 1.0
      %v5279 = vadd.f32 %v5165, 1.0
      %v5280 = vadd.f32 %v5167, 1.0
      %v5281 = vadd.f32 %v5169, 1.0
      %v5282 = vadd.f32 %v5171, 1.0
      %v5283 = vadd.f32 %v5173, 1.0
      %v5284 = vadd.f32 %v5175, 1.0
      %v5285 = vadd.f32 %v5177, 1.0
      %v5286 = vadd.f32 %v5179, 1.0
      %v5287 = vadd.f32 %v5181, 1.0
      %v5288 = vadd.f32 %v5183, 1.0
      %v5289 = vadd.f32 %v5185, 1.0
      %v5290 = vadd.f32 %v5187, 1.0
      %v5291 = vadd.f32 %v5189, 1.0
      %v5292 = vadd.f32 %v5191, 1.0
      %v5293 = vadd.f32 %v5193, 1.0
      %v5294 = vadd.f32 %v5195, 1.0
      %v5295 = vadd.f32 %v5197, 1.0
      %v5296 = vadd.f32 %v5199, 1.0
      %v5297 = vadd.f32 %v5201, 1.0
      %v5298 = vadd.f32 %v5203, 1.0
      %v5299 = vadd.f32 %v5205, 1.0
      %v5300 = vadd.f32 %v5207, 1.0
      %v5301 = vadd.f32 %v5209, 1.0
      %v5302 = vadd.f32 %v5211, 1.0
      %v5303 = vadd.f32 %v5213, 1.0
      %v5304 = vadd.f32 %v5215, 1.0
      %v5305 = vadd.f32 %v5217, 1.0
      %v5306 = vadd.f32 %v5219, 1.0
      %v5307 = vadd.f32 %v5221, 1.0
      %v5308 = vadd.f32 %v5223, 1.0
      %v5309 = vadd.f32 %v5225, 1.0
      %v5310 = vadd.f32 %v5227, 1.0
      %v5311 = vadd.f32 %v5229, 1.0
      %v5312 = vadd.f32 %v5231, 1.0
      %v5313 = vadd.f32 %v5233, 1.0
      %v5314 = vadd.f32 %v5235, 1.0
      %v5315 = vadd.f32 %v5237, 1.0
      %v5316 = vadd.f32 %v5239, 1.0
      %v5317 = vadd.f32 %v5241, 1.0
      %v5318 = vadd.f32 %v5243, 1.0
      %v5319 = vadd.f32 %v5245, 1.0
      %v5320 = vadd.f32 %v5247, 1.0
      %v5321 = vadd.f32 %v5249, 1.0
      %v5322 = vadd.f32 %v5251, 1.0
      %v5323 = vadd.f32 %v5253, 1.0
      %v5324 = vadd.f32 %v5255, 1.0
      %v5325 = vadd.f32 %v5257, 1.0
      %v5326 = vadd.f32 %v5259, 1.0
      %v5327 = vadd.f32 %v5261, 1.0
      %v5328 = vadd.f32 %v5263, 1.0
      %v5329 = vadd.f32 %v5265, 1.0
      %v5330 = vrcp.pop %v5266
      %v5331 = vmul.f32 1.0, %v5330
      %v5332 = vrcp.pop %v5267
      %v5333 = vmul.f32 1.0, %v5332
      %v5334 = vrcp.pop %v5268
      %v5335 = vmul.f32 1.0, %v5334
      %v5336 = vrcp.pop %v5269
      %v5337 = vmul.f32 1.0, %v5336
      %v5338 = vrcp.pop %v5270
      %v5339 = vmul.f32 1.0, %v5338
      %v5340 = vrcp.pop %v5271
      %v5341 = vmul.f32 1.0, %v5340
      %v5342 = vrcp.pop %v5272
      %v5343 = vmul.f32 1.0, %v5342
      %v5344 = vrcp.pop %v5273
      %v5345 = vmul.f32 1.0, %v5344
      %v5346 = vrcp.pop %v5274
      %v5347 = vmul.f32 1.0, %v5346
      %v5348 = vrcp.pop %v5275
      %v5349 = vmul.f32 1.0, %v5348
      %v5350 = vrcp.pop %v5276
      %v5351 = vmul.f32 1.0, %v5350
      %v5352 = vrcp.pop %v5277
      %v5353 = vmul.f32 1.0, %v5352
      %v5354 = vrcp.pop %v5278
      %v5355 = vmul.f32 1.0, %v5354
      %v5356 = vrcp.pop %v5279
      %v5357 = vmul.f32 1.0, %v5356
      %v5358 = vrcp.pop %v5280
      %v5359 = vmul.f32 1.0, %v5358
      %v5360 = vrcp.pop %v5281
      %v5361 = vmul.f32 1.0, %v5360
      %v5362 = vrcp.pop %v5282
      %v5363 = vmul.f32 1.0, %v5362
      %v5364 = vrcp.pop %v5283
      %v5365 = vmul.f32 1.0, %v5364
      %v5366 = vrcp.pop %v5284
      %v5367 = vmul.f32 1.0, %v5366
      %v5368 = vrcp.pop %v5285
      %v5369 = vmul.f32 1.0, %v5368
      %v5370 = vrcp.pop %v5286
      %v5371 = vmul.f32 1.0, %v5370
      %v5372 = vrcp.pop %v5287
      %v5373 = vmul.f32 1.0, %v5372
      %v5374 = vrcp.pop %v5288
      %v5375 = vmul.f32 1.0, %v5374
      %v5376 = vrcp.pop %v5289
      %v5377 = vmul.f32 1.0, %v5376
      %v5378 = vrcp.pop %v5290
      %v5379 = vmul.f32 1.0, %v5378
      %v5380 = vrcp.pop %v5291
      %v5381 = vmul.f32 1.0, %v5380
      %v5382 = vrcp.pop %v5292
      %v5383 = vmul.f32 1.0, %v5382
      %v5384 = vrcp.pop %v5293
      %v5385 = vmul.f32 1.0, %v5384
      %v5386 = vrcp.pop %v5294
      %v5387 = vmul.f32 1.0, %v5386
      %v5388 = vrcp.pop %v5295
      %v5389 = vmul.f32 1.0, %v5388
      %v5390 = vrcp.pop %v5296
      %v5391 = vmul.f32 1.0, %v5390
      %v5392 = vrcp.pop %v5297
      %v5393 = vmul.f32 1.0, %v5392
      %v5394 = vrcp.pop %v5298
      %v5395 = vmul.f32 1.0, %v5394
      %v5396 = vrcp.pop %v5299
      %v5397 = vmul.f32 1.0, %v5396
      %v5398 = vrcp.pop %v5300
      %v5399 = vmul.f32 1.0, %v5398
      %v5400 = vrcp.pop %v5301
      %v5401 = vmul.f32 1.0, %v5400
      %v5402 = vrcp.pop %v5302
      %v5403 = vmul.f32 1.0, %v5402
      %v5404 = vrcp.pop %v5303
      %v5405 = vmul.f32 1.0, %v5404
      %v5406 = vrcp.pop %v5304
      %v5407 = vmul.f32 1.0, %v5406
      %v5408 = vrcp.pop %v5305
      %v5409 = vmul.f32 1.0, %v5408
      %v5410 = vrcp.pop %v5306
      %v5411 = vmul.f32 1.0, %v5410
      %v5412 = vrcp.pop %v5307
      %v5413 = vmul.f32 1.0, %v5412
      %v5414 = vrcp.pop %v5308
      %v5415 = vmul.f32 1.0, %v5414
      %v5416 = vrcp.pop %v5309
      %v5417 = vmul.f32 1.0, %v5416
      %v5418 = vrcp.pop %v5310
      %v5419 = vmul.f32 1.0, %v5418
      %v5420 = vrcp.pop %v5311
      %v5421 = vmul.f32 1.0, %v5420
      %v5422 = vrcp.pop %v5312
      %v5423 = vmul.f32 1.0, %v5422
      %v5424 = vrcp.pop %v5313
      %v5425 = vmul.f32 1.0, %v5424
      %v5426 = vrcp.pop %v5314
      %v5427 = vmul.f32 1.0, %v5426
      %v5428 = vrcp.pop %v5315
      %v5429 = vmul.f32 1.0, %v5428
      %v5430 = vrcp.pop %v5316
      %v5431 = vmul.f32 1.0, %v5430
      %v5432 = vrcp.pop %v5317
      %v5433 = vmul.f32 1.0, %v5432
      %v5434 = vrcp.pop %v5318
      %v5435 = vmul.f32 1.0, %v5434
      %v5436 = vrcp.pop %v5319
      %v5437 = vmul.f32 1.0, %v5436
      %v5438 = vrcp.pop %v5320
      %v5439 = vmul.f32 1.0, %v5438
      %v5440 = vrcp.pop %v5321
      %v5441 = vmul.f32 1.0, %v5440
      %v5442 = vrcp.pop %v5322
      %v5443 = vmul.f32 1.0, %v5442
      %v5444 = vrcp.pop %v5323
      %v5445 = vmul.f32 1.0, %v5444
      %v5446 = vrcp.pop %v5324
      %v5447 = vmul.f32 1.0, %v5446
      %v5448 = vrcp.pop %v5325
      %v5449 = vmul.f32 1.0, %v5448
      %v5450 = vrcp.pop %v5326
      %v5451 = vmul.f32 1.0, %v5450
      %v5452 = vrcp.pop %v5327
      %v5453 = vmul.f32 1.0, %v5452
      %v5454 = vrcp.pop %v5328
      %v5455 = vmul.f32 1.0, %v5454
      %v5456 = vrcp.pop %v5329
      %v5457 = vmul.f32 1.0, %v5456
      %vm5458 = vcmask 7168
      %5459 = vst.msk [vmem:[%s361] sm:$0xff] %vm5458, %v5331
      %5460 = vst.msk [vmem:[%s361 + $0x8] sm:$0xff] %vm5458, %v5333
      %5461 = vst.msk [vmem:[%s361 + $0x10] sm:$0xff] %vm5458, %v5335
      %5462 = vst.msk [vmem:[%s361 + $0x18] sm:$0xff] %vm5458, %v5337
      %5463 = vst.msk [vmem:[%s361 + $0x20] sm:$0xff] %vm5458, %v5339
      %5464 = vst.msk [vmem:[%s361 + $0x28] sm:$0xff] %vm5458, %v5341
      %5465 = vst.msk [vmem:[%s361 + $0x30] sm:$0xff] %vm5458, %v5343
      %5466 = vst.msk [vmem:[%s361 + $0x38] sm:$0xff] %vm5458, %v5345
      %5467 = vst.msk [vmem:[%s361 + $0x40] sm:$0xff] %vm5458, %v5347
      %5468 = vst.msk [vmem:[%s361 + $0x48] sm:$0xff] %vm5458, %v5349
      %5469 = vst.msk [vmem:[%s361 + $0x50] sm:$0xff] %vm5458, %v5351
      %5470 = vst.msk [vmem:[%s361 + $0x58] sm:$0xff] %vm5458, %v5353
      %5471 = vst.msk [vmem:[%s361 + $0x60] sm:$0xff] %vm5458, %v5355
      %5472 = vst.msk [vmem:[%s361 + $0x68] sm:$0xff] %vm5458, %v5357
      %5473 = vst.msk [vmem:[%s361 + $0x70] sm:$0xff] %vm5458, %v5359
      %5474 = vst.msk [vmem:[%s361 + $0x78] sm:$0xff] %vm5458, %v5361
      %5475 = vst.msk [vmem:[%s361 + $0x80] sm:$0xff] %vm5458, %v5363
      %5476 = vst.msk [vmem:[%s361 + $0x88] sm:$0xff] %vm5458, %v5365
      %5477 = vst.msk [vmem:[%s361 + $0x90] sm:$0xff] %vm5458, %v5367
      %5478 = vst.msk [vmem:[%s361 + $0x98] sm:$0xff] %vm5458, %v5369
      %5479 = vst.msk [vmem:[%s361 + $0xa0] sm:$0xff] %vm5458, %v5371
      %5480 = vst.msk [vmem:[%s361 + $0xa8] sm:$0xff] %vm5458, %v5373
      %5481 = vst.msk [vmem:[%s361 + $0xb0] sm:$0xff] %vm5458, %v5375
      %5482 = vst.msk [vmem:[%s361 + $0xb8] sm:$0xff] %vm5458, %v5377
      %5483 = vst.msk [vmem:[%s361 + $0xc0] sm:$0xff] %vm5458, %v5379
      %5484 = vst.msk [vmem:[%s361 + $0xc8] sm:$0xff] %vm5458, %v5381
      %5485 = vst.msk [vmem:[%s361 + $0xd0] sm:$0xff] %vm5458, %v5383
      %5486 = vst.msk [vmem:[%s361 + $0xd8] sm:$0xff] %vm5458, %v5385
      %5487 = vst.msk [vmem:[%s361 + $0xe0] sm:$0xff] %vm5458, %v5387
      %5488 = vst.msk [vmem:[%s361 + $0xe8] sm:$0xff] %vm5458, %v5389
      %5489 = vst.msk [vmem:[%s361 + $0xf0] sm:$0xff] %vm5458, %v5391
      %5490 = vst.msk [vmem:[%s361 + $0xf8] sm:$0xff] %vm5458, %v5393
      %5491 = vst.msk [vmem:[%s361 + $0x100] sm:$0xff] %vm5458, %v5395
      %5492 = vst.msk [vmem:[%s361 + $0x108] sm:$0xff] %vm5458, %v5397
      %5493 = vst.msk [vmem:[%s361 + $0x110] sm:$0xff] %vm5458, %v5399
      %5494 = vst.msk [vmem:[%s361 + $0x118] sm:$0xff] %vm5458, %v5401
      %5495 = vst.msk [vmem:[%s361 + $0x120] sm:$0xff] %vm5458, %v5403
      %5496 = vst.msk [vmem:[%s361 + $0x128] sm:$0xff] %vm5458, %v5405
      %5497 = vst.msk [vmem:[%s361 + $0x130] sm:$0xff] %vm5458, %v5407
      %5498 = vst.msk [vmem:[%s361 + $0x138] sm:$0xff] %vm5458, %v5409
      %5499 = vst.msk [vmem:[%s361 + $0x140] sm:$0xff] %vm5458, %v5411
      %5500 = vst.msk [vmem:[%s361 + $0x148] sm:$0xff] %vm5458, %v5413
      %5501 = vst.msk [vmem:[%s361 + $0x150] sm:$0xff] %vm5458, %v5415
      %5502 = vst.msk [vmem:[%s361 + $0x158] sm:$0xff] %vm5458, %v5417
      %5503 = vst.msk [vmem:[%s361 + $0x160] sm:$0xff] %vm5458, %v5419
      %5504 = vst.msk [vmem:[%s361 + $0x168] sm:$0xff] %vm5458, %v5421
      %5505 = vst.msk [vmem:[%s361 + $0x170] sm:$0xff] %vm5458, %v5423
      %5506 = vst.msk [vmem:[%s361 + $0x178] sm:$0xff] %vm5458, %v5425
      %5507 = vst.msk [vmem:[%s361 + $0x180] sm:$0xff] %vm5458, %v5427
      %5508 = vst.msk [vmem:[%s361 + $0x188] sm:$0xff] %vm5458, %v5429
      %5509 = vst.msk [vmem:[%s361 + $0x190] sm:$0xff] %vm5458, %v5431
      %5510 = vst.msk [vmem:[%s361 + $0x198] sm:$0xff] %vm5458, %v5433
      %5511 = vst.msk [vmem:[%s361 + $0x1a0] sm:$0xff] %vm5458, %v5435
      %5512 = vst.msk [vmem:[%s361 + $0x1a8] sm:$0xff] %vm5458, %v5437
      %5513 = vst.msk [vmem:[%s361 + $0x1b0] sm:$0xff] %vm5458, %v5439
      %5514 = vst.msk [vmem:[%s361 + $0x1b8] sm:$0xff] %vm5458, %v5441
      %5515 = vst.msk [vmem:[%s361 + $0x1c0] sm:$0xff] %vm5458, %v5443
      %5516 = vst.msk [vmem:[%s361 + $0x1c8] sm:$0xff] %vm5458, %v5445
      %5517 = vst.msk [vmem:[%s361 + $0x1d0] sm:$0xff] %vm5458, %v5447
      %5518 = vst.msk [vmem:[%s361 + $0x1d8] sm:$0xff] %vm5458, %v5449
      %5519 = vst.msk [vmem:[%s361 + $0x1e0] sm:$0xff] %vm5458, %v5451
      %5520 = vst.msk [vmem:[%s361 + $0x1e8] sm:$0xff] %vm5458, %v5453
      %5521 = vst.msk [vmem:[%s361 + $0x1f0] sm:$0xff] %vm5458, %v5455
      %5522 = vst.msk [vmem:[%s361 + $0x1f8] sm:$0xff] %vm5458, %v5457
      %s5523 = smul.u32 64, %s21
      %p5524 = scmp.lt.s32.totalorder %s5523, 127
      %s5525 = scalar_select %p5524, %s5523, 127
      %s5526 = smul.addr %s5525, 8
      %s5527 = scalar_lea.vmem %s10, %s5526
      // Predicated region
      $region61: #{skipconn_forward.1} parent=59 // pred_check
        %p5528 = pneg %p254
      $region62: #{skipconn_forward.1} parent=59 // pred_check_branch
        %5530 = sbr.rel (%p5528) target = $region64
      $region63: #{skipconn_forward.1} parent=59 // pred_region
        %s5531 = smul.u32 64, %s21
      $region64: #{skipconn_forward.1} parent=59 // pred_fallthru
        _
    $region60: #{skipconn_forward.1} parent=5 // pred_fallthru
      _
    %p5532 = scmp.le.s32.totalorder 2, %s16
    // Predicated region
    $region65: #{skipconn_forward.1} parent=5 // pred_check
      %p5533 = pneg %p5532
    $region66: #{skipconn_forward.1} parent=5 // pred_check_branch
      %5535 = sbr.rel (%p5533) target = $region68
    $region67: #{skipconn_forward.1} parent=5 // pred_region
      %s5536 = ssub.s32 %s16, 2
      // Predicated region
      $region69: #{skipconn_forward.1} parent=67 // pred_check
        %p5537 = pneg %p260
      $region70: #{skipconn_forward.1} parent=67 // pred_check_branch
        %5539 = sbr.rel (%p5537) target = $region72
      $region71: #{skipconn_forward.1} parent=67 // pred_region
        %s5540 = smul.u32 64, %s22
        %p5541 = scmp.lt.s32.totalorder %s5540, 127
        %s5542 = scalar_select %p5541, %s5540, 127
        %s5543 = smul.addr %s5542, 8
        %s5544 = scalar_lea.vmem %s10, %s5543
      $region72: #{skipconn_forward.1} parent=67 // pred_fallthru
        _
    $region68: #{skipconn_forward.1} parent=5 // pred_fallthru
      _
  $region6: #{skipconn_forward.1} parent=0 // loop_footer
    %s20 = sadd.s32 1, %s16
  $region7: #{skipconn_forward.1} parent=0 // loop_footer_branch
    %15 = sbr.rel target = $region3
  $region8: #{skipconn_forward.1} parent=0 // loop_exit
    _

</llo_original>
